<compile_context>
chip_gen: v7x
topology: tpu7x:2x2x1
jax: 0.10.0
libtpu: 0.0.40
codegen_flags: <defaults>
</compile_context>

<pallas_src>
import numpy as np
import jax
import jax.numpy as jnp
from jax.experimental import pallas as pl
from jax.experimental.pallas import tpu as pltpu

H_IN, W_IN = 500, 500
H_OUT, W_OUT = 256, 256
SCALE = 1.953125            # = 500 / 256 = 125/64, hard-coded in the FX graph
BAND = 256                  # contraction window per output half (halved from 512)
BAND_STARTS = (0, 248)      # input row/col window starts for output halves [0:128) / [128:256)


def _bilinear_resize_kernel(x_ref, whb_ref, wwtb_ref, o_ref):
    # x_ref:    (B, 2, 2, 256, 256) uint8  -- (plane, row_band, col_band, rows, cols)
    # whb_ref:  (2, 128, 256)       bf16   -- per-row-band H-interp weights (exact in bf16)
    # wwtb_ref: (2, 256, 128)       bf16   -- per-col-band W-interp weights, transposed
    # o_ref:    (B, 256, 256)       uint8
    wh_top = whb_ref[0]                      # hoisted: loaded once per grid step
    wh_bot = whb_ref[1]
    wwt = (wwtb_ref[0], wwtb_ref[1])
    for b in range(x_ref.shape[0]):          # small static unroll (B planes)
        halves = []
        for cb in range(2):                  # output column halves [0:128), [128:256)
            # uint8 -> f32 -> bf16: exact for 0..255 (see header for why not a single cast)
            x_top = x_ref[b, 0, cb].astype(jnp.float32).astype(jnp.bfloat16)   # (256, 256)
            x_bot = x_ref[b, 1, cb].astype(jnp.float32).astype(jnp.bfloat16)   # (256, 256)
            # H-blend (graph add_2/add_3): banded 2-tap matmuls, f32 accumulation, exact.
            rows = jnp.concatenate(
                [jnp.dot(wh_top, x_top, preferred_element_type=jnp.float32),
                 jnp.dot(wh_bot, x_bot, preferred_element_type=jnp.float32)],
                axis=0)                                                         # (256, 256) f32
            # Exact bf16 hi+lo split of the <=15-significant-bit intermediate.
            rows_hi = rows.astype(jnp.bfloat16)
            rows_lo = (rows - rows_hi.astype(jnp.float32)).astype(jnp.bfloat16)
            # W-blend (graph add_4); hi+lo matmul pair is bit-exact vs a single f32 matmul.
            halves.append(
                jnp.dot(rows_hi, wwt[cb], preferred_element_type=jnp.float32)
                + jnp.dot(rows_lo, wwt[cb], preferred_element_type=jnp.float32))  # (256, 128)
        out = jnp.concatenate(halves, axis=1)                                   # (256, 256) f32
        # final convert_element_type -> uint8 (values in [0, 255])
        o_ref[b] = out.astype(jnp.uint8)


def _interp_weights(out_size, in_size, scale):
    """(out_size, in_size) bilinear weight matrix replicating the FX graph:
       coord = max((i + 0.5) * scale - 0.5, 0); lo = trunc(coord); hi = min(ceil(coord), in-1);
       weight (1 - frac) at lo, frac at hi, frac = coord - lo."""
    i = np.arange(out_size, dtype=np.float32)
    coord = np.maximum((i + np.float32(0.5)) * np.float32(scale) - np.float32(0.5),
                       np.float32(0.0))
    lo = coord.astype(np.int64)                                  # trunc == floor (coord >= 0)
    hi = np.minimum(np.ceil(coord), in_size - 1).astype(np.int64)
    frac = (coord - lo.astype(np.float32)).astype(np.float32)
    rows = np.arange(out_size)
    w = np.zeros((out_size, in_size), np.float32)
    np.add.at(w, (rows, lo), np.float32(1.0) - frac)
    np.add.at(w, (rows, hi), frac)                               # lo == hi case sums to 1.0
    return w


def _band_blocks():
    """Pre-sliced per-band weight blocks (bf16), with static exactness/band-structure checks."""
    wh = _interp_weights(H_OUT, H_IN, SCALE)         # (256, 500)
    ww = _interp_weights(W_OUT, W_IN, SCALE)         # (256, 500)
    for w in (wh, ww):
        # These properties are specific to SCALE = 125/64 and uint8 inputs; assert so a future
        # reuse at a different size doesn't silently lose bit-exactness or band disjointness.
        assert np.all(w * 128.0 == np.round(w * 128.0)), "weights not exact multiples of 1/128"
        assert np.all(w[:128, BAND_STARTS[0] + BAND:] == 0.0), "top band leaks past its window"
        assert np.all(w[128:, :BAND_STARTS[1]] == 0.0), "bottom band leaks before its window"

    def split(w):
        wp = np.pad(w, ((0, 0), (0, BAND_STARTS[1] + BAND - w.shape[1])))      # (256, 504)
        return np.stack([wp[:128, BAND_STARTS[0]:BAND_STARTS[0] + BAND],
                         wp[128:, BAND_STARTS[1]:BAND_STARTS[1] + BAND]])      # (2, 128, 256)

    whb = jnp.asarray(split(wh), dtype=jnp.bfloat16)                           # (2, 128, 256)
    wwtb = jnp.asarray(np.transpose(split(ww), (0, 2, 1)), dtype=jnp.bfloat16)  # (2, 256, 128)
    return whb, wwtb


def _band_windows(x_flat, nc_pad):
    """(nc, 500, 500) uint8 -> (nc_pad, 2, 2, 256, 256) uint8 band windows (zero-padded)."""
    nc = x_flat.shape[0]
    wins = []
    for rs in BAND_STARTS:
        for cs in BAND_STARTS:
            blk = x_flat[:, rs:rs + BAND, cs:cs + BAND]          # clamps at 500 like numpy
            wins.append(jnp.pad(blk, ((0, nc_pad - nc),
                                      (0, BAND - blk.shape[1]),
                                      (0, BAND - blk.shape[2]))))
    return jnp.stack(wins, axis=1).reshape(nc_pad, 2, 2, BAND, BAND)


def upsample_bilinear_uint8(x, block_planes=2):
    """x: (N, C, 500, 500) uint8 -> (N, C, 256, 256) uint8 (aten bilinear, align_corners=False).

    block_planes=2: at N*C=8 each of v7x's two TensorCores gets 2 pipelined grid steps, and the
    2-plane unroll keeps the hi/lo VPU work hidden under the MXU on v5e/v6e (sweep 2 vs 4 there).
    """
    n, c, h, w = x.shape
    assert (h, w) == (H_IN, W_IN), "graph hard-codes a 500x500 -> 256x256 resize"
    nc = n * c
    B = max(1, min(block_planes, nc))
    nc_pad = pl.cdiv(nc, B) * B

    whb, wwtb = _band_blocks()
    x_win = _band_windows(x.reshape(nc, H_IN, W_IN), nc_pad)

    grid = (nc_pad // B,)
    macs_per_plane = 4 * (128 * BAND * 256) + 4 * (256 * BAND * 128)   # H-blend + hi/lo W-blend
    cost = pl.CostEstimate(
        flops=2 * macs_per_plane * nc_pad,
        transcendentals=0,
        bytes_accessed=nc_pad * (4 * BAND * BAND + H_OUT * W_OUT)
        + 2 * int(whb.size) + 2 * int(wwtb.size),
    )

    out = pl.pallas_call(
        _bilinear_resize_kernel,
        out_shape=jax.ShapeDtypeStruct((nc_pad, H_OUT, W_OUT), jnp.uint8),
        grid=grid,
        in_specs=[
            pl.BlockSpec((B, 2, 2, BAND, BAND), lambda i: (i, 0, 0, 0, 0)),
            # constant index_maps -> weight blocks stay resident across the grid
            pl.BlockSpec((2, 128, BAND), lambda i: (0, 0, 0)),
            pl.BlockSpec((2, BAND, 128), lambda i: (0, 0, 0)),
        ],
        out_specs=pl.BlockSpec((B, H_OUT, W_OUT), lambda i: (i, 0, 0)),
        compiler_params=pltpu.CompilerParams(
            dimension_semantics=("parallel",),
            vmem_limit_bytes=32 * 1024 * 1024,
        ),
        cost_estimate=cost,
    )(x_win, whb, wwtb)
    return out[:nc].reshape(n, c, H_OUT, W_OUT)


def _reference(x):
    """Pure-JAX f32 replica of the FX graph (gather + blend + truncating uint8 cast)."""
    def coords(out_size, in_size):
        i = jnp.arange(out_size, dtype=jnp.float32)
        coord = jnp.maximum((i + 0.5) * SCALE - 0.5, 0.0)
        lo = coord.astype(jnp.int32)
        hi = jnp.minimum(jnp.ceil(coord), in_size - 1).astype(jnp.int32)
        frac = coord - lo.astype(jnp.float32)
        return lo, hi, frac

    hlo, hhi, hf = coords(H_OUT, H_IN)
    wlo, whi, wf = coords(W_OUT, W_IN)
    xf = x.astype(jnp.float32)
    hf_b = hf[None, None, :, None]
    top = xf[:, :, hlo, :] * (1.0 - hf_b) + xf[:, :, hhi, :] * hf_b     # H-blend
    out = top[:, :, :, wlo] * (1.0 - wf) + top[:, :, :, whi] * wf       # W-blend
    return out.astype(jnp.uint8)


if __name__ == "__main__":
    key = jax.random.PRNGKey(0)
    n, c = 2, 4   # spatial size 500 is fixed by the graph's constants; N*C=8 -> grid of 4 at B=2
    x = jax.random.randint(key, (n, c, H_IN, W_IN), 0, 256, dtype=jnp.int32).astype(jnp.uint8)
    y = upsample_bilinear_uint8(x)
    y = jax.block_until_ready(y)
    assert y.shape == (n, c, H_OUT, W_OUT) and y.dtype == jnp.uint8
    y_ref = _reference(x)
    diff = int(jnp.max(jnp.abs(y.astype(jnp.int32) - y_ref.astype(jnp.int32))))
    assert diff == 0, f"max abs diff vs reference = {diff}"
    print("KERNEL_OK")
</pallas_src>

<mosaic_0001>
module attributes {stable_mosaic.version = 11 : i64} {
  func.func @_bilinear_resize_kernel(%arg0: i32, %arg1: memref<2x2x2x256x256xi8, #tpu.memory_space<vmem>>, %arg2: memref<2x128x256xbf16, #tpu.memory_space<vmem>>, %arg3: memref<2x256x128xbf16, #tpu.memory_space<vmem>>, %arg4: memref<2x256x256xi8, #tpu.memory_space<vmem>>) attributes {dimension_semantics = [#tpu.dimension_semantics<parallel>], iteration_bounds = array<i64: 4>, scalar_prefetch = 0 : i64, scratch_operands = 0 : i64, tpu.core_type = #tpu.core_type<tc>, window_params = [{transform_indices = @transform_0, window_bounds = array<i64: 2, 2, 2, 256, 256>}, {pipeline_mode = #tpu.pipeline_mode<synchronous>, transform_indices = @transform_1, window_bounds = array<i64: 2, 128, 256>}, {pipeline_mode = #tpu.pipeline_mode<synchronous>, transform_indices = @transform_2, window_bounds = array<i64: 2, 256, 128>}, {transform_indices = @transform_3, window_bounds = array<i64: 2, 256, 256>}]} {
    %c0 = arith.constant 0 : index
    %c0_0 = arith.constant 0 : index
    %c0_1 = arith.constant 0 : index
    %0 = vector.load %arg2[%c0, %c0_0, %c0_1] : memref<2x128x256xbf16, #tpu.memory_space<vmem>>, vector<1x128x256xbf16>
    %1 = vector.shape_cast %0 : vector<1x128x256xbf16> to vector<128x256xbf16>
    %c1 = arith.constant 1 : index
    %c0_2 = arith.constant 0 : index
    %c0_3 = arith.constant 0 : index
    %2 = vector.load %arg2[%c1, %c0_2, %c0_3] : memref<2x128x256xbf16, #tpu.memory_space<vmem>>, vector<1x128x256xbf16>
    %3 = vector.shape_cast %2 : vector<1x128x256xbf16> to vector<128x256xbf16>
    %c0_4 = arith.constant 0 : index
    %c0_5 = arith.constant 0 : index
    %c0_6 = arith.constant 0 : index
    %4 = vector.load %arg3[%c0_4, %c0_5, %c0_6] : memref<2x256x128xbf16, #tpu.memory_space<vmem>>, vector<1x256x128xbf16>
    %5 = vector.shape_cast %4 : vector<1x256x128xbf16> to vector<256x128xbf16>
    %c1_7 = arith.constant 1 : index
    %c0_8 = arith.constant 0 : index
    %c0_9 = arith.constant 0 : index
    %6 = vector.load %arg3[%c1_7, %c0_8, %c0_9] : memref<2x256x128xbf16, #tpu.memory_space<vmem>>, vector<1x256x128xbf16>
    %7 = vector.shape_cast %6 : vector<1x256x128xbf16> to vector<256x128xbf16>
    %c0_10 = arith.constant 0 : index
    %c0_11 = arith.constant 0 : index
    %c0_12 = arith.constant 0 : index
    %c0_13 = arith.constant 0 : index
    %c0_14 = arith.constant 0 : index
    %8 = vector.load %arg1[%c0_10, %c0_11, %c0_12, %c0_13, %c0_14] : memref<2x2x2x256x256xi8, #tpu.memory_space<vmem>>, vector<1x1x1x256x256xi8>
    %9 = vector.shape_cast %8 : vector<1x1x1x256x256xi8> to vector<256x256xi8>
    %10 = arith.uitofp %9 : vector<256x256xi8> to vector<256x256xf32>
    %11 = arith.truncf %10 : vector<256x256xf32> to vector<256x256xbf16>
    %c0_15 = arith.constant 0 : index
    %c1_16 = arith.constant 1 : index
    %c0_17 = arith.constant 0 : index
    %c0_18 = arith.constant 0 : index
    %c0_19 = arith.constant 0 : index
    %12 = vector.load %arg1[%c0_15, %c1_16, %c0_17, %c0_18, %c0_19] : memref<2x2x2x256x256xi8, #tpu.memory_space<vmem>>, vector<1x1x1x256x256xi8>
    %13 = vector.shape_cast %12 : vector<1x1x1x256x256xi8> to vector<256x256xi8>
    %14 = arith.uitofp %13 : vector<256x256xi8> to vector<256x256xf32>
    %15 = arith.truncf %14 : vector<256x256xf32> to vector<256x256xbf16>
    %cst = arith.constant dense<0.000000e+00> : vector<128x256xf32>
    %16 = tpu.matmul %1, %11, %cst {dimension_numbers = #tpu.dot_dimension_numbers<[1], [0], [0], [1], [0, 0, 1, 1], [], []>} : vector<128x256xbf16>, vector<256x256xbf16>, vector<128x256xf32> -> vector<128x256xf32>
    %cst_20 = arith.constant dense<0.000000e+00> : vector<128x256xf32>
    %17 = tpu.matmul %3, %15, %cst_20 {dimension_numbers = #tpu.dot_dimension_numbers<[1], [0], [0], [1], [0, 0, 1, 1], [], []>} : vector<128x256xbf16>, vector<256x256xbf16>, vector<128x256xf32> -> vector<128x256xf32>
    %18 = tpu.concatenate %16, %17 in 0 : vector<128x256xf32>, vector<128x256xf32> -> vector<256x256xf32>
    %19 = arith.truncf %18 : vector<256x256xf32> to vector<256x256xbf16>
    %20 = arith.extf %19 : vector<256x256xbf16> to vector<256x256xf32>
    %21 = arith.subf %18, %20 : vector<256x256xf32>
    %22 = arith.truncf %21 : vector<256x256xf32> to vector<256x256xbf16>
    %cst_21 = arith.constant dense<0.000000e+00> : vector<256x128xf32>
    %23 = tpu.matmul %19, %5, %cst_21 {dimension_numbers = #tpu.dot_dimension_numbers<[1], [0], [0], [1], [0, 0, 1, 1], [], []>} : vector<256x256xbf16>, vector<256x128xbf16>, vector<256x128xf32> -> vector<256x128xf32>
    %cst_22 = arith.constant dense<0.000000e+00> : vector<256x128xf32>
    %24 = tpu.matmul %22, %5, %cst_22 {dimension_numbers = #tpu.dot_dimension_numbers<[1], [0], [0], [1], [0, 0, 1, 1], [], []>} : vector<256x256xbf16>, vector<256x128xbf16>, vector<256x128xf32> -> vector<256x128xf32>
    %25 = arith.addf %23, %24 : vector<256x128xf32>
    %c0_23 = arith.constant 0 : index
    %c0_24 = arith.constant 0 : index
    %c1_25 = arith.constant 1 : index
    %c0_26 = arith.constant 0 : index
    %c0_27 = arith.constant 0 : index
    %26 = vector.load %arg1[%c0_23, %c0_24, %c1_25, %c0_26, %c0_27] : memref<2x2x2x256x256xi8, #tpu.memory_space<vmem>>, vector<1x1x1x256x256xi8>
    %27 = vector.shape_cast %26 : vector<1x1x1x256x256xi8> to vector<256x256xi8>
    %28 = arith.uitofp %27 : vector<256x256xi8> to vector<256x256xf32>
    %29 = arith.truncf %28 : vector<256x256xf32> to vector<256x256xbf16>
    %c0_28 = arith.constant 0 : index
    %c1_29 = arith.constant 1 : index
    %c1_30 = arith.constant 1 : index
    %c0_31 = arith.constant 0 : index
    %c0_32 = arith.constant 0 : index
    %30 = vector.load %arg1[%c0_28, %c1_29, %c1_30, %c0_31, %c0_32] : memref<2x2x2x256x256xi8, #tpu.memory_space<vmem>>, vector<1x1x1x256x256xi8>
    %31 = vector.shape_cast %30 : vector<1x1x1x256x256xi8> to vector<256x256xi8>
    %32 = arith.uitofp %31 : vector<256x256xi8> to vector<256x256xf32>
    %33 = arith.truncf %32 : vector<256x256xf32> to vector<256x256xbf16>
    %cst_33 = arith.constant dense<0.000000e+00> : vector<128x256xf32>
    %34 = tpu.matmul %1, %29, %cst_33 {dimension_numbers = #tpu.dot_dimension_numbers<[1], [0], [0], [1], [0, 0, 1, 1], [], []>} : vector<128x256xbf16>, vector<256x256xbf16>, vector<128x256xf32> -> vector<128x256xf32>
    %cst_34 = arith.constant dense<0.000000e+00> : vector<128x256xf32>
    %35 = tpu.matmul %3, %33, %cst_34 {dimension_numbers = #tpu.dot_dimension_numbers<[1], [0], [0], [1], [0, 0, 1, 1], [], []>} : vector<128x256xbf16>, vector<256x256xbf16>, vector<128x256xf32> -> vector<128x256xf32>
    %36 = tpu.concatenate %34, %35 in 0 : vector<128x256xf32>, vector<128x256xf32> -> vector<256x256xf32>
    %37 = arith.truncf %36 : vector<256x256xf32> to vector<256x256xbf16>
    %38 = arith.extf %37 : vector<256x256xbf16> to vector<256x256xf32>
    %39 = arith.subf %36, %38 : vector<256x256xf32>
    %40 = arith.truncf %39 : vector<256x256xf32> to vector<256x256xbf16>
    %cst_35 = arith.constant dense<0.000000e+00> : vector<256x128xf32>
    %41 = tpu.matmul %37, %7, %cst_35 {dimension_numbers = #tpu.dot_dimension_numbers<[1], [0], [0], [1], [0, 0, 1, 1], [], []>} : vector<256x256xbf16>, vector<256x128xbf16>, vector<256x128xf32> -> vector<256x128xf32>
    %cst_36 = arith.constant dense<0.000000e+00> : vector<256x128xf32>
    %42 = tpu.matmul %40, %7, %cst_36 {dimension_numbers = #tpu.dot_dimension_numbers<[1], [0], [0], [1], [0, 0, 1, 1], [], []>} : vector<256x256xbf16>, vector<256x128xbf16>, vector<256x128xf32> -> vector<256x128xf32>
    %43 = arith.addf %41, %42 : vector<256x128xf32>
    %44 = tpu.concatenate %25, %43 in 1 : vector<256x128xf32>, vector<256x128xf32> -> vector<256x256xf32>
    %45 = arith.fptoui %44 : vector<256x256xf32> to vector<256x256xi8>
    %c0_37 = arith.constant 0 : index
    %c0_38 = arith.constant 0 : index
    %c0_39 = arith.constant 0 : index
    %46 = vector.load %arg4[%c0_37, %c0_38, %c0_39] : memref<2x256x256xi8, #tpu.memory_space<vmem>>, vector<1x256x256xi8>
    %47 = vector.shape_cast %46 : vector<1x256x256xi8> to vector<256x256xi8>
    %48 = vector.shape_cast %45 : vector<256x256xi8> to vector<1x256x256xi8>
    tpu.vector_store %arg4[%c0_37, %c0_38, %c0_39], %48 {strides = array<i32>} : memref<2x256x256xi8, #tpu.memory_space<vmem>>, vector<1x256x256xi8>,
    %c1_40 = arith.constant 1 : index
    %c0_41 = arith.constant 0 : index
    %c0_42 = arith.constant 0 : index
    %c0_43 = arith.constant 0 : index
    %c0_44 = arith.constant 0 : index
    %49 = vector.load %arg1[%c1_40, %c0_41, %c0_42, %c0_43, %c0_44] : memref<2x2x2x256x256xi8, #tpu.memory_space<vmem>>, vector<1x1x1x256x256xi8>
    %50 = vector.shape_cast %49 : vector<1x1x1x256x256xi8> to vector<256x256xi8>
    %51 = arith.uitofp %50 : vector<256x256xi8> to vector<256x256xf32>
    %52 = arith.truncf %51 : vector<256x256xf32> to vector<256x256xbf16>
    %c1_45 = arith.constant 1 : index
    %c1_46 = arith.constant 1 : index
    %c0_47 = arith.constant 0 : index
    %c0_48 = arith.constant 0 : index
    %c0_49 = arith.constant 0 : index
    %53 = vector.load %arg1[%c1_45, %c1_46, %c0_47, %c0_48, %c0_49] : memref<2x2x2x256x256xi8, #tpu.memory_space<vmem>>, vector<1x1x1x256x256xi8>
    %54 = vector.shape_cast %53 : vector<1x1x1x256x256xi8> to vector<256x256xi8>
    %55 = arith.uitofp %54 : vector<256x256xi8> to vector<256x256xf32>
    %56 = arith.truncf %55 : vector<256x256xf32> to vector<256x256xbf16>
    %cst_50 = arith.constant dense<0.000000e+00> : vector<128x256xf32>
    %57 = tpu.matmul %1, %52, %cst_50 {dimension_numbers = #tpu.dot_dimension_numbers<[1], [0], [0], [1], [0, 0, 1, 1], [], []>} : vector<128x256xbf16>, vector<256x256xbf16>, vector<128x256xf32> -> vector<128x256xf32>
    %cst_51 = arith.constant dense<0.000000e+00> : vector<128x256xf32>
    %58 = tpu.matmul %3, %56, %cst_51 {dimension_numbers = #tpu.dot_dimension_numbers<[1], [0], [0], [1], [0, 0, 1, 1], [], []>} : vector<128x256xbf16>, vector<256x256xbf16>, vector<128x256xf32> -> vector<128x256xf32>
    %59 = tpu.concatenate %57, %58 in 0 : vector<128x256xf32>, vector<128x256xf32> -> vector<256x256xf32>
    %60 = arith.truncf %59 : vector<256x256xf32> to vector<256x256xbf16>
    %61 = arith.extf %60 : vector<256x256xbf16> to vector<256x256xf32>
    %62 = arith.subf %59, %61 : vector<256x256xf32>
    %63 = arith.truncf %62 : vector<256x256xf32> to vector<256x256xbf16>
    %cst_52 = arith.constant dense<0.000000e+00> : vector<256x128xf32>
    %64 = tpu.matmul %60, %5, %cst_52 {dimension_numbers = #tpu.dot_dimension_numbers<[1], [0], [0], [1], [0, 0, 1, 1], [], []>} : vector<256x256xbf16>, vector<256x128xbf16>, vector<256x128xf32> -> vector<256x128xf32>
    %cst_53 = arith.constant dense<0.000000e+00> : vector<256x128xf32>
    %65 = tpu.matmul %63, %5, %cst_53 {dimension_numbers = #tpu.dot_dimension_numbers<[1], [0], [0], [1], [0, 0, 1, 1], [], []>} : vector<256x256xbf16>, vector<256x128xbf16>, vector<256x128xf32> -> vector<256x128xf32>
    %66 = arith.addf %64, %65 : vector<256x128xf32>
    %c1_54 = arith.constant 1 : index
    %c0_55 = arith.constant 0 : index
    %c1_56 = arith.constant 1 : index
    %c0_57 = arith.constant 0 : index
    %c0_58 = arith.constant 0 : index
    %67 = vector.load %arg1[%c1_54, %c0_55, %c1_56, %c0_57, %c0_58] : memref<2x2x2x256x256xi8, #tpu.memory_space<vmem>>, vector<1x1x1x256x256xi8>
    %68 = vector.shape_cast %67 : vector<1x1x1x256x256xi8> to vector<256x256xi8>
    %69 = arith.uitofp %68 : vector<256x256xi8> to vector<256x256xf32>
    %70 = arith.truncf %69 : vector<256x256xf32> to vector<256x256xbf16>
    %c1_59 = arith.constant 1 : index
    %c1_60 = arith.constant 1 : index
    %c1_61 = arith.constant 1 : index
    %c0_62 = arith.constant 0 : index
    %c0_63 = arith.constant 0 : index
    %71 = vector.load %arg1[%c1_59, %c1_60, %c1_61, %c0_62, %c0_63] : memref<2x2x2x256x256xi8, #tpu.memory_space<vmem>>, vector<1x1x1x256x256xi8>
    %72 = vector.shape_cast %71 : vector<1x1x1x256x256xi8> to vector<256x256xi8>
    %73 = arith.uitofp %72 : vector<256x256xi8> to vector<256x256xf32>
    %74 = arith.truncf %73 : vector<256x256xf32> to vector<256x256xbf16>
    %cst_64 = arith.constant dense<0.000000e+00> : vector<128x256xf32>
    %75 = tpu.matmul %1, %70, %cst_64 {dimension_numbers = #tpu.dot_dimension_numbers<[1], [0], [0], [1], [0, 0, 1, 1], [], []>} : vector<128x256xbf16>, vector<256x256xbf16>, vector<128x256xf32> -> vector<128x256xf32>
    %cst_65 = arith.constant dense<0.000000e+00> : vector<128x256xf32>
    %76 = tpu.matmul %3, %74, %cst_65 {dimension_numbers = #tpu.dot_dimension_numbers<[1], [0], [0], [1], [0, 0, 1, 1], [], []>} : vector<128x256xbf16>, vector<256x256xbf16>, vector<128x256xf32> -> vector<128x256xf32>
    %77 = tpu.concatenate %75, %76 in 0 : vector<128x256xf32>, vector<128x256xf32> -> vector<256x256xf32>
    %78 = arith.truncf %77 : vector<256x256xf32> to vector<256x256xbf16>
    %79 = arith.extf %78 : vector<256x256xbf16> to vector<256x256xf32>
    %80 = arith.subf %77, %79 : vector<256x256xf32>
    %81 = arith.truncf %80 : vector<256x256xf32> to vector<256x256xbf16>
    %cst_66 = arith.constant dense<0.000000e+00> : vector<256x128xf32>
    %82 = tpu.matmul %78, %7, %cst_66 {dimension_numbers = #tpu.dot_dimension_numbers<[1], [0], [0], [1], [0, 0, 1, 1], [], []>} : vector<256x256xbf16>, vector<256x128xbf16>, vector<256x128xf32> -> vector<256x128xf32>
    %cst_67 = arith.constant dense<0.000000e+00> : vector<256x128xf32>
    %83 = tpu.matmul %81, %7, %cst_67 {dimension_numbers = #tpu.dot_dimension_numbers<[1], [0], [0], [1], [0, 0, 1, 1], [], []>} : vector<256x256xbf16>, vector<256x128xbf16>, vector<256x128xf32> -> vector<256x128xf32>
    %84 = arith.addf %82, %83 : vector<256x128xf32>
    %85 = tpu.concatenate %66, %84 in 1 : vector<256x128xf32>, vector<256x128xf32> -> vector<256x256xf32>
    %86 = arith.fptoui %85 : vector<256x256xf32> to vector<256x256xi8>
    %c1_68 = arith.constant 1 : index
    %c0_69 = arith.constant 0 : index
    %c0_70 = arith.constant 0 : index
    %87 = vector.load %arg4[%c1_68, %c0_69, %c0_70] : memref<2x256x256xi8, #tpu.memory_space<vmem>>, vector<1x256x256xi8>
    %88 = vector.shape_cast %87 : vector<1x256x256xi8> to vector<256x256xi8>
    %89 = vector.shape_cast %86 : vector<256x256xi8> to vector<1x256x256xi8>
    tpu.vector_store %arg4[%c1_68, %c0_69, %c0_70], %89 {strides = array<i32>} : memref<2x256x256xi8, #tpu.memory_space<vmem>>, vector<1x256x256xi8>,
    return
  }
  func.func @transform_0(%arg0: i32) -> (i32, i32, i32, i32, i32) {
    %c0_i32 = arith.constant 0 : i32
    %c0_i32_0 = arith.constant 0 : i32
    %c0_i32_1 = arith.constant 0 : i32
    %c0_i32_2 = arith.constant 0 : i32
    %c0_i32_3 = arith.constant 0 : i32
    return %arg0, %c0_i32, %c0_i32_0, %c0_i32_1, %c0_i32_2 : i32, i32, i32, i32, i32
  }
  func.func @transform_1(%arg0: i32) -> (i32, i32, i32) {
    %c0_i32 = arith.constant 0 : i32
    %c0_i32_0 = arith.constant 0 : i32
    %c0_i32_1 = arith.constant 0 : i32
    %c0_i32_2 = arith.constant 0 : i32
    return %c0_i32, %c0_i32_0, %c0_i32_1 : i32, i32, i32
  }
  func.func @transform_2(%arg0: i32) -> (i32, i32, i32) {
    %c0_i32 = arith.constant 0 : i32
    %c0_i32_0 = arith.constant 0 : i32
    %c0_i32_1 = arith.constant 0 : i32
    %c0_i32_2 = arith.constant 0 : i32
    return %c0_i32, %c0_i32_0, %c0_i32_1 : i32, i32, i32
  }
  func.func @transform_3(%arg0: i32) -> (i32, i32, i32) {
    %c0_i32 = arith.constant 0 : i32
    %c0_i32_0 = arith.constant 0 : i32
    %c0_i32_1 = arith.constant 0 : i32
    return %arg0, %c0_i32, %c0_i32_0 : i32, i32, i32
  }
}

</mosaic_0001>

<llo_original>
// kernel: tpu_custom_call.1
$region0: #{tpu_custom_call.1}
  #allocation0 [shape = 'u32[]', space=smem, size = 0x4, offset = 0x4, fixed_abs, tag = 'smem constant byte address 0x4 - core index']
  #allocation1 [shape = 'u32[144,128]{1,0:T(1,128)}', space=vmem, size = 0x12000, scoped, tag = 'internal scratch']
  %s0 = inlined_call_operand.hbm [shape: u8[8,2,2,256,256], index: 0, kind: input, shape index: {}]
  %s1 = inlined_call_operand.hbm [shape: bf16[2,128,256], index: 1, kind: input, shape index: {}]
  %s2 = inlined_call_operand.hbm [shape: bf16[2,256,128], index: 2, kind: input, shape index: {}]
  %s3 = inlined_call_operand.hbm [shape: u8[8,256,256], index: 3, kind: output, shape index: {}]
  %s4 = sld [smem:[#allocation0]]
  $region57: #{tpu_custom_call.1} parent=0
    _
  %s6 = ssub.s32 1, %s4
  %s7 = scalar_select 0, %s6, %s4
  $region1: #{tpu_custom_call.1} parent=0
    #allocation2 [shape = 'u8[1048576]{0}', space=vmem, size = 0x100000, scoped, tag = 'input window, operand 0']
    #allocation3 [shape = 's32[2]{0}', space=sflag, size = 0x8, scoped, tag = 'scoped memory for tpu_custom_call.1']
    #allocation4 [shape = 's32[2]{0}', space=sflag, size = 0x8, scoped, tag = 'scoped memory for tpu_custom_call.1']
    #allocation5 [shape = 'u8[131072]{0}', space=vmem, size = 0x20000, scoped, tag = 'input window, operand 1, single buffered']
    #allocation6 [shape = 's32[1]{0}', space=sflag, size = 0x4, scoped, tag = 'scoped memory for tpu_custom_call.1']
    #allocation7 [shape = 'u8[131072]{0}', space=vmem, size = 0x20000, scoped, tag = 'input window, operand 2, single buffered']
    #allocation8 [shape = 'u8[262144]{0}', space=vmem, size = 0x40000, scoped, tag = 'output window, operand 0']
    %8 = vsyncpa [#allocation3], 0
    %s9 = scalar_lea.sflag [#allocation3], 1
    %10 = vsyncpa %s9, 0
    %11 = vsyncpa [#allocation6], 0
    %12 = vsyncpa [#allocation4], 0
    %s13 = scalar_lea.sflag [#allocation4], 1
    %14 = vsyncpa %s13, 0
    loop: start=0, step=1, limit=6
    $region2: #{tpu_custom_call.1} parent=1 // loop_pre_header
      _
    $region3: #{tpu_custom_call.1} parent=1 // loop_header
      %s16 = sphi 0, %s20
      %p17 = scmp.ge.s32.totalorder %s16, 6
      %s26 = sphi 0, %s28
      %s29 = sphi 0, %s26
      %s30 = sphi 0, %s29
      %s46 = sphi 0, %s30
      %s50 = sphi 0, %s50
      %s52 = sphi 0, %s50
      %s53 = sphi 0, %s52
      %s67 = sphi 0, %s53
      %s71 = sphi 0, %s71
      %s73 = sphi 0, %s71
      %s74 = sphi 0, %s73
      %s88 = sphi 0, %s74
      %s94 = sphi 0, %s96
      %s97 = sphi 0, %s94
      %s98 = sphi 0, %s97
      %s114 = sphi 0, %s98
    $region4: #{tpu_custom_call.1} parent=1 // loop_header_branch
      %19 = sbr.rel (%p17) target = $region8
    $region5: #{tpu_custom_call.1} parent=1 // loop_body
      %s21 = ssub.s32 %s16, 1
      %s22 = ssub.s32 %s16, 2
      %s23 = sadd.s32 %s16, 1
      %s24 = ssub.s32 %s16, %s23
      %p25 = scmp.eq.s32.totalorder %s24, 0
      %s27 = sadd.s32 %s26, 1
      %s28 = scalar_select %p25, %s26, %s27
      %p31 = pneg %p25
      %p32 = scmp.eq.s32.totalorder %s16, 3
      %p33 = por %p31, %p32
      %p34 = scmp.ne.s32.totalorder %s26, %s29
      %p35 = scmp.eq.s32.totalorder %s16, 0
      %p36 = por %p34, %p35
      %p37 = scmp.ne.s32.totalorder %s26, %s29
      %p38 = scmp.eq.s32.totalorder %s21, 3
      %p39 = por %p37, %p38
      %p40 = scmp.ne.s32.totalorder %s29, %s30
      %p41 = scmp.eq.s32.totalorder %s21, 0
      %p42 = por %p40, %p41
      %p43 = scmp.ne.s32.totalorder %s29, %s30
      %p44 = scmp.eq.s32.totalorder %s22, 3
      %p45 = por %p43, %p44
      %p47 = scmp.ne.s32.totalorder %s30, %s46
      %p48 = scmp.eq.s32.totalorder %s22, 0
      %p49 = por %p47, %p48
      %s51 = sadd.s32 %s50, 1
      %p54 = scmp.eq.s32.totalorder %s16, 3
      %p55 = scmp.ne.s32.totalorder %s50, %s52
      %p56 = scmp.eq.s32.totalorder %s16, 0
      %p57 = por %p55, %p56
      %p58 = scmp.ne.s32.totalorder %s50, %s52
      %p59 = scmp.eq.s32.totalorder %s21, 3
      %p60 = por %p58, %p59
      %p61 = scmp.ne.s32.totalorder %s52, %s53
      %p62 = scmp.eq.s32.totalorder %s21, 0
      %p63 = por %p61, %p62
      %p64 = scmp.ne.s32.totalorder %s52, %s53
      %p65 = scmp.eq.s32.totalorder %s22, 3
      %p66 = por %p64, %p65
      %p68 = scmp.ne.s32.totalorder %s53, %s67
      %p69 = scmp.eq.s32.totalorder %s22, 0
      %p70 = por %p68, %p69
      %s72 = sadd.s32 %s71, 1
      %p75 = scmp.eq.s32.totalorder %s16, 3
      %p76 = scmp.ne.s32.totalorder %s71, %s73
      %p77 = scmp.eq.s32.totalorder %s16, 0
      %p78 = por %p76, %p77
      %p79 = scmp.ne.s32.totalorder %s71, %s73
      %p80 = scmp.eq.s32.totalorder %s21, 3
      %p81 = por %p79, %p80
      %p82 = scmp.ne.s32.totalorder %s73, %s74
      %p83 = scmp.eq.s32.totalorder %s21, 0
      %p84 = por %p82, %p83
      %p85 = scmp.ne.s32.totalorder %s73, %s74
      %p86 = scmp.eq.s32.totalorder %s22, 3
      %p87 = por %p85, %p86
      %p89 = scmp.ne.s32.totalorder %s74, %s88
      %p90 = scmp.eq.s32.totalorder %s22, 0
      %p91 = por %p89, %p90
      %s92 = ssub.s32 %s16, %s23
      %p93 = scmp.eq.s32.totalorder %s92, 0
      %s95 = sadd.s32 %s94, 1
      %s96 = scalar_select %p93, %s94, %s95
      %p99 = pneg %p93
      %p100 = scmp.eq.s32.totalorder %s16, 3
      %p101 = por %p99, %p100
      %p102 = scmp.ne.s32.totalorder %s94, %s97
      %p103 = scmp.eq.s32.totalorder %s16, 0
      %p104 = por %p102, %p103
      %p105 = scmp.ne.s32.totalorder %s94, %s97
      %p106 = scmp.eq.s32.totalorder %s21, 3
      %p107 = por %p105, %p106
      %p108 = scmp.ne.s32.totalorder %s97, %s98
      %p109 = scmp.eq.s32.totalorder %s21, 0
      %p110 = por %p108, %p109
      %p111 = scmp.ne.s32.totalorder %s97, %s98
      %p112 = scmp.eq.s32.totalorder %s22, 3
      %p113 = por %p111, %p112
      %p115 = scmp.ne.s32.totalorder %s98, %s114
      %p116 = scmp.eq.s32.totalorder %s22, 0
      %p117 = por %p115, %p116
      %p118 = scmp.le.s32.totalorder 1, %s16
      %p119 = scmp.lt.s32.totalorder %s16, 5
      %p120 = pnand %p118, %p119
      %p121 = pneg %p120
      // Predicated region
      $region9: #{tpu_custom_call.1} parent=5 // pred_check
        _
      $region10: #{tpu_custom_call.1} parent=5 // pred_check_branch
        %123 = sbr.rel (%p120) target = $region12
      $region11: #{tpu_custom_call.1} parent=5 // pred_region
        %s124 = ssub.s32 %s16, 1
        // Predicated region
        $region13: #{tpu_custom_call.1} parent=11 // pred_check
          %p125 = pneg %p63
        $region14: #{tpu_custom_call.1} parent=11 // pred_check_branch
          %127 = sbr.rel (%p125) target = $region16
        $region15: #{tpu_custom_call.1} parent=11 // pred_region
          %s129 = ssub.s32 4096, 4096
          %130 = vsyncadd [#allocation6], %s129
          %s131 = sshll.u32 [#allocation5], 4
          %s132 = int_to_ptr.vmem [resolvable:$true] %s131
          %137 = dma.hbm_to_vmem [thread:$0]  %s1, 4096, %s132, [#allocation6], 128, 128, 8
        $region16: #{tpu_custom_call.1} parent=11 // pred_fallthru
          _
        // Predicated region
        $region17: #{tpu_custom_call.1} parent=11 // pred_check
          %p138 = pneg %p84
        $region18: #{tpu_custom_call.1} parent=11 // pred_check_branch
          %140 = sbr.rel (%p138) target = $region20
        $region19: #{tpu_custom_call.1} parent=11 // pred_region
          %s142 = ssub.s32 4096, 4096
          %143 = vsyncadd [#allocation6], %s142
          %s144 = sshll.u32 [#allocation7], 4
          %s145 = int_to_ptr.vmem [resolvable:$true] %s144
          %150 = dma.hbm_to_vmem [thread:$0]  %s2, 4096, %s145, [#allocation6], 64, 64, 4
        $region20: #{tpu_custom_call.1} parent=11 // pred_fallthru
          _
      $region12: #{tpu_custom_call.1} parent=5 // pred_fallthru
        _
      %p151 = scmp.lt.s32.totalorder %s16, 4
      // Predicated region
      $region21: #{tpu_custom_call.1} parent=5 // pred_check
        %p152 = pneg %p151
      $region22: #{tpu_custom_call.1} parent=5 // pred_check_branch
        %154 = sbr.rel (%p152) target = $region24
      $region23: #{tpu_custom_call.1} parent=5 // pred_region
        // Predicated region
        $region25: #{tpu_custom_call.1} parent=23 // pred_check
          %p155 = pneg %p36
        $region26: #{tpu_custom_call.1} parent=23 // pred_check_branch
          %157 = sbr.rel (%p155) target = $region28
        $region27: #{tpu_custom_call.1} parent=23 // pred_region
          %s158 = sand.u32 %s26, 1
          %s159 = scalar_lea.sflag [#allocation3], %s158
          %s160 = sand.u32 %s26, 1
          %s161 = smul.addr %s160, 1024
          %s162 = scalar_lea.vmem [#allocation2], %s161
          %s163 = smul.u32 2, %s16
          %s165 = ssub.s32 16384, 16384
          %166 = vsyncadd %s159, %s165
          %s167 = smul.addr %s163, 64
          %s168 = smul.addr %s167, 128
          %s169 = scalar_lea.hbm %s0, %s168
          %s170 = sshll.u32 %s162, 4
          %s171 = int_to_ptr.vmem [resolvable:$true] %s170
          %176 = dma.hbm_to_vmem [thread:$0]  %s169, 16384, %s171, %s159, 256, 256, 16
        $region28: #{tpu_custom_call.1} parent=23 // pred_fallthru
          _
      $region24: #{tpu_custom_call.1} parent=5 // pred_fallthru
        _
      %p177 = scmp.le.s32.totalorder 1, %s16
      %p178 = scmp.lt.s32.totalorder %s16, 5
      %p179 = pnand %p177, %p178
      %p180 = pneg %p179
      // Predicated region
      $region29: #{tpu_custom_call.1} parent=5 // pred_check
        _
      $region30: #{tpu_custom_call.1} parent=5 // pred_check_branch
        %182 = sbr.rel (%p179) target = $region32
      $region31: #{tpu_custom_call.1} parent=5 // pred_region
        %s183 = ssub.s32 %s16, 1
        %s184 = sand.u32 %s29, 1
        %s185 = scalar_lea.sflag [#allocation3], %s184
        %s186 = sand.u32 %s29, 1
        %s187 = smul.addr %s186, 1024
        %s188 = scalar_lea.vmem [#allocation2], %s187
        // Predicated region
        $region33: #{tpu_custom_call.1} parent=31 // pred_check
          %p189 = pneg %p42
        $region34: #{tpu_custom_call.1} parent=31 // pred_check_branch
          %191 = sbr.rel (%p189) target = $region36
        $region35: #{tpu_custom_call.1} parent=31 // pred_region
          %192 = dma.done %s185, 16384
        $region36: #{tpu_custom_call.1} parent=31 // pred_fallthru
          _
        // Predicated region
        $region37: #{tpu_custom_call.1} parent=31 // pred_check
          %p193 = pneg %p63
        $region38: #{tpu_custom_call.1} parent=31 // pred_check_branch
          %195 = sbr.rel (%p193) target = $region40
        $region39: #{tpu_custom_call.1} parent=31 // pred_region
          %196 = dma.done [#allocation6], 4096
        $region40: #{tpu_custom_call.1} parent=31 // pred_fallthru
          _
        // Predicated region
        $region41: #{tpu_custom_call.1} parent=31 // pred_check
          %p197 = pneg %p84
        $region42: #{tpu_custom_call.1} parent=31 // pred_check_branch
          %199 = sbr.rel (%p197) target = $region44
        $region43: #{tpu_custom_call.1} parent=31 // pred_region
          %200 = dma.done [#allocation6], 4096
        $region44: #{tpu_custom_call.1} parent=31 // pred_fallthru
          _
        %s201 = sand.u32 %s29, 1
        %s202 = scalar_lea.sflag [#allocation3], %s201
        %s203 = sand.u32 %s29, 1
        %s204 = smul.addr %s203, 1024
        %s205 = scalar_lea.vmem [#allocation2], %s204
        %p206 = pneg %p42
        %p207 = pneg %p39
        %p208 = pneg %p63
        %p209 = pneg %p60
        %p210 = pneg %p84
        %p211 = pneg %p81
        %p212 = pneg %p110
        %p213 = pneg %p107
        %s214 = sand.u32 %s97, 1
        %s215 = scalar_lea.sflag [#allocation4], %s214
        %s216 = sand.u32 %s97, 1
        %s217 = smul.addr %s216, 256
        %s218 = scalar_lea.vmem [#allocation8], %s217
        %s219 = smul.u32 2, %s21
        %s220 = smul.u32 2, %s21
        %v222 = vld [vmem:[#allocation5] sm:$0xff]
        %v223 = vld [vmem:[#allocation5 + $0x8] sm:$0xff]
        %v224 = vld [vmem:[#allocation5 + $0x10] sm:$0xff]
        %v225 = vld [vmem:[#allocation5 + $0x18] sm:$0xff]
        %v226 = vld [vmem:[#allocation5 + $0x20] sm:$0xff]
        %v227 = vld [vmem:[#allocation5 + $0x28] sm:$0xff]
        %v228 = vld [vmem:[#allocation5 + $0x30] sm:$0xff]
        %v229 = vld [vmem:[#allocation5 + $0x38] sm:$0xff]
        %v230 = vld [vmem:[#allocation5 + $0x40] sm:$0xff]
        %v231 = vld [vmem:[#allocation5 + $0x48] sm:$0xff]
        %v232 = vld [vmem:[#allocation5 + $0x50] sm:$0xff]
        %v233 = vld [vmem:[#allocation5 + $0x58] sm:$0xff]
        %v234 = vld [vmem:[#allocation5 + $0x60] sm:$0xff]
        %v235 = vld [vmem:[#allocation5 + $0x68] sm:$0xff]
        %v236 = vld [vmem:[#allocation5 + $0x70] sm:$0xff]
        %v237 = vld [vmem:[#allocation5 + $0x78] sm:$0xff]
        %s238 = scalar_lea.vmem [#allocation5], 128
        %v239 = vld [vmem:[%s238] sm:$0xff]
        %v240 = vld [vmem:[%s238 + $0x8] sm:$0xff]
        %v241 = vld [vmem:[%s238 + $0x10] sm:$0xff]
        %v242 = vld [vmem:[%s238 + $0x18] sm:$0xff]
        %v243 = vld [vmem:[%s238 + $0x20] sm:$0xff]
        %v244 = vld [vmem:[%s238 + $0x28] sm:$0xff]
        %v245 = vld [vmem:[%s238 + $0x30] sm:$0xff]
        %v246 = vld [vmem:[%s238 + $0x38] sm:$0xff]
        %v247 = vld [vmem:[%s238 + $0x40] sm:$0xff]
        %v248 = vld [vmem:[%s238 + $0x48] sm:$0xff]
        %v249 = vld [vmem:[%s238 + $0x50] sm:$0xff]
        %v250 = vld [vmem:[%s238 + $0x58] sm:$0xff]
        %v251 = vld [vmem:[%s238 + $0x60] sm:$0xff]
        %v252 = vld [vmem:[%s238 + $0x68] sm:$0xff]
        %v253 = vld [vmem:[%s238 + $0x70] sm:$0xff]
        %v254 = vld [vmem:[%s238 + $0x78] sm:$0xff]
        %v255 = vld [vmem:[#allocation7] sm:$0xf]
        %v256 = vld [vmem:[#allocation7 + $0x4] sm:$0xf]
        %v257 = vld [vmem:[#allocation7 + $0x8] sm:$0xf]
        %v258 = vld [vmem:[#allocation7 + $0xc] sm:$0xf]
        %v259 = vld [vmem:[#allocation7 + $0x10] sm:$0xf]
        %v260 = vld [vmem:[#allocation7 + $0x14] sm:$0xf]
        %v261 = vld [vmem:[#allocation7 + $0x18] sm:$0xf]
        %v262 = vld [vmem:[#allocation7 + $0x1c] sm:$0xf]
        %v263 = vld [vmem:[#allocation7 + $0x20] sm:$0xf]
        %v264 = vld [vmem:[#allocation7 + $0x24] sm:$0xf]
        %v265 = vld [vmem:[#allocation7 + $0x28] sm:$0xf]
        %v266 = vld [vmem:[#allocation7 + $0x2c] sm:$0xf]
        %v267 = vld [vmem:[#allocation7 + $0x30] sm:$0xf]
        %v268 = vld [vmem:[#allocation7 + $0x34] sm:$0xf]
        %v269 = vld [vmem:[#allocation7 + $0x38] sm:$0xf]
        %v270 = vld [vmem:[#allocation7 + $0x3c] sm:$0xf]
        %v271 = vld [vmem:[#allocation7 + $0x40] sm:$0xf]
        %v272 = vld [vmem:[#allocation7 + $0x44] sm:$0xf]
        %v273 = vld [vmem:[#allocation7 + $0x48] sm:$0xf]
        %v274 = vld [vmem:[#allocation7 + $0x4c] sm:$0xf]
        %v275 = vld [vmem:[#allocation7 + $0x50] sm:$0xf]
        %v276 = vld [vmem:[#allocation7 + $0x54] sm:$0xf]
        %v277 = vld [vmem:[#allocation7 + $0x58] sm:$0xf]
        %v278 = vld [vmem:[#allocation7 + $0x5c] sm:$0xf]
        %v279 = vld [vmem:[#allocation7 + $0x60] sm:$0xf]
        %v280 = vld [vmem:[#allocation7 + $0x64] sm:$0xf]
        %v281 = vld [vmem:[#allocation7 + $0x68] sm:$0xf]
        %v282 = vld [vmem:[#allocation7 + $0x6c] sm:$0xf]
        %v283 = vld [vmem:[#allocation7 + $0x70] sm:$0xf]
        %v284 = vld [vmem:[#allocation7 + $0x74] sm:$0xf]
        %v285 = vld [vmem:[#allocation7 + $0x78] sm:$0xf]
        %v286 = vld [vmem:[#allocation7 + $0x7c] sm:$0xf]
        %s287 = scalar_lea.vmem [#allocation7], 128
        %v288 = vld [vmem:[%s287] sm:$0xf]
        %v289 = vld [vmem:[%s287 + $0x4] sm:$0xf]
        %v290 = vld [vmem:[%s287 + $0x8] sm:$0xf]
        %v291 = vld [vmem:[%s287 + $0xc] sm:$0xf]
        %v292 = vld [vmem:[%s287 + $0x10] sm:$0xf]
        %v293 = vld [vmem:[%s287 + $0x14] sm:$0xf]
        %v294 = vld [vmem:[%s287 + $0x18] sm:$0xf]
        %v295 = vld [vmem:[%s287 + $0x1c] sm:$0xf]
        %v296 = vld [vmem:[%s287 + $0x20] sm:$0xf]
        %v297 = vld [vmem:[%s287 + $0x24] sm:$0xf]
        %v298 = vld [vmem:[%s287 + $0x28] sm:$0xf]
        %v299 = vld [vmem:[%s287 + $0x2c] sm:$0xf]
        %v300 = vld [vmem:[%s287 + $0x30] sm:$0xf]
        %v301 = vld [vmem:[%s287 + $0x34] sm:$0xf]
        %v302 = vld [vmem:[%s287 + $0x38] sm:$0xf]
        %v303 = vld [vmem:[%s287 + $0x3c] sm:$0xf]
        %v304 = vld [vmem:[%s287 + $0x40] sm:$0xf]
        %v305 = vld [vmem:[%s287 + $0x44] sm:$0xf]
        %v306 = vld [vmem:[%s287 + $0x48] sm:$0xf]
        %v307 = vld [vmem:[%s287 + $0x4c] sm:$0xf]
        %v308 = vld [vmem:[%s287 + $0x50] sm:$0xf]
        %v309 = vld [vmem:[%s287 + $0x54] sm:$0xf]
        %v310 = vld [vmem:[%s287 + $0x58] sm:$0xf]
        %v311 = vld [vmem:[%s287 + $0x5c] sm:$0xf]
        %v312 = vld [vmem:[%s287 + $0x60] sm:$0xf]
        %v313 = vld [vmem:[%s287 + $0x64] sm:$0xf]
        %v314 = vld [vmem:[%s287 + $0x68] sm:$0xf]
        %v315 = vld [vmem:[%s287 + $0x6c] sm:$0xf]
        %v316 = vld [vmem:[%s287 + $0x70] sm:$0xf]
        %v317 = vld [vmem:[%s287 + $0x74] sm:$0xf]
        %v318 = vld [vmem:[%s287 + $0x78] sm:$0xf]
        %v319 = vld [vmem:[%s287 + $0x7c] sm:$0xf]
        %v320 = vld [vmem:[%s188] sm:$0xff]
        %v321 = vld [vmem:[%s188 + $0x8] sm:$0xff]
        %v322 = vld [vmem:[%s188 + $0x10] sm:$0xff]
        %v323 = vld [vmem:[%s188 + $0x18] sm:$0xff]
        %v324 = vld [vmem:[%s188 + $0x20] sm:$0xff]
        %v325 = vld [vmem:[%s188 + $0x28] sm:$0xff]
        %v326 = vld [vmem:[%s188 + $0x30] sm:$0xff]
        %v327 = vld [vmem:[%s188 + $0x38] sm:$0xff]
        %v328 = vld [vmem:[%s188 + $0x40] sm:$0xff]
        %v329 = vld [vmem:[%s188 + $0x48] sm:$0xff]
        %v330 = vld [vmem:[%s188 + $0x50] sm:$0xff]
        %v331 = vld [vmem:[%s188 + $0x58] sm:$0xff]
        %v332 = vld [vmem:[%s188 + $0x60] sm:$0xff]
        %v333 = vld [vmem:[%s188 + $0x68] sm:$0xff]
        %v334 = vld [vmem:[%s188 + $0x70] sm:$0xff]
        %v335 = vld [vmem:[%s188 + $0x78] sm:$0xff]
        %v336 = vunpack.c.l.u8.bf16 %v320
        %v337 = vunpack.c.l.u8.bf16 %v321
        %v338 = vunpack.c.h.u8.bf16 %v320
        %v339 = vunpack.c.h.u8.bf16 %v321
        %v340 = vunpack.c.l.u8.bf16 %v322
        %v341 = vunpack.c.l.u8.bf16 %v323
        %v342 = vunpack.c.h.u8.bf16 %v322
        %v343 = vunpack.c.h.u8.bf16 %v323
        %v344 = vunpack.c.l.u8.bf16 %v324
        %v345 = vunpack.c.l.u8.bf16 %v325
        %v346 = vunpack.c.h.u8.bf16 %v324
        %v347 = vunpack.c.h.u8.bf16 %v325
        %v348 = vunpack.c.l.u8.bf16 %v326
        %v349 = vunpack.c.l.u8.bf16 %v327
        %v350 = vunpack.c.h.u8.bf16 %v326
        %v351 = vunpack.c.h.u8.bf16 %v327
        %v352 = vunpack.c.l.u8.bf16 %v328
        %v353 = vunpack.c.l.u8.bf16 %v329
        %v354 = vunpack.c.h.u8.bf16 %v328
        %v355 = vunpack.c.h.u8.bf16 %v329
        %v356 = vunpack.c.l.u8.bf16 %v330
        %v357 = vunpack.c.l.u8.bf16 %v331
        %v358 = vunpack.c.h.u8.bf16 %v330
        %v359 = vunpack.c.h.u8.bf16 %v331
        %v360 = vunpack.c.l.u8.bf16 %v332
        %v361 = vunpack.c.l.u8.bf16 %v333
        %v362 = vunpack.c.h.u8.bf16 %v332
        %v363 = vunpack.c.h.u8.bf16 %v333
        %v364 = vunpack.c.l.u8.bf16 %v334
        %v365 = vunpack.c.l.u8.bf16 %v335
        %v366 = vunpack.c.h.u8.bf16 %v334
        %v367 = vunpack.c.h.u8.bf16 %v335
        %s368 = scalar_lea.vmem %s188, 256 [#allocation2]
        %v369 = vld [vmem:[%s368] sm:$0xff]
        %v370 = vld [vmem:[%s368 + $0x8] sm:$0xff]
        %v371 = vld [vmem:[%s368 + $0x10] sm:$0xff]
        %v372 = vld [vmem:[%s368 + $0x18] sm:$0xff]
        %v373 = vld [vmem:[%s368 + $0x20] sm:$0xff]
        %v374 = vld [vmem:[%s368 + $0x28] sm:$0xff]
        %v375 = vld [vmem:[%s368 + $0x30] sm:$0xff]
        %v376 = vld [vmem:[%s368 + $0x38] sm:$0xff]
        %v377 = vld [vmem:[%s368 + $0x40] sm:$0xff]
        %v378 = vld [vmem:[%s368 + $0x48] sm:$0xff]
        %v379 = vld [vmem:[%s368 + $0x50] sm:$0xff]
        %v380 = vld [vmem:[%s368 + $0x58] sm:$0xff]
        %v381 = vld [vmem:[%s368 + $0x60] sm:$0xff]
        %v382 = vld [vmem:[%s368 + $0x68] sm:$0xff]
        %v383 = vld [vmem:[%s368 + $0x70] sm:$0xff]
        %v384 = vld [vmem:[%s368 + $0x78] sm:$0xff]
        %v385 = vunpack.c.l.u8.bf16 %v369
        %v386 = vunpack.c.l.u8.bf16 %v370
        %v387 = vunpack.c.h.u8.bf16 %v369
        %v388 = vunpack.c.h.u8.bf16 %v370
        %v389 = vunpack.c.l.u8.bf16 %v371
        %v390 = vunpack.c.l.u8.bf16 %v372
        %v391 = vunpack.c.h.u8.bf16 %v371
        %v392 = vunpack.c.h.u8.bf16 %v372
        %v393 = vunpack.c.l.u8.bf16 %v373
        %v394 = vunpack.c.l.u8.bf16 %v374
        %v395 = vunpack.c.h.u8.bf16 %v373
        %v396 = vunpack.c.h.u8.bf16 %v374
        %v397 = vunpack.c.l.u8.bf16 %v375
        %v398 = vunpack.c.l.u8.bf16 %v376
        %v399 = vunpack.c.h.u8.bf16 %v375
        %v400 = vunpack.c.h.u8.bf16 %v376
        %v401 = vunpack.c.l.u8.bf16 %v377
        %v402 = vunpack.c.l.u8.bf16 %v378
        %v403 = vunpack.c.h.u8.bf16 %v377
        %v404 = vunpack.c.h.u8.bf16 %v378
        %v405 = vunpack.c.l.u8.bf16 %v379
        %v406 = vunpack.c.l.u8.bf16 %v380
        %v407 = vunpack.c.h.u8.bf16 %v379
        %v408 = vunpack.c.h.u8.bf16 %v380
        %v409 = vunpack.c.l.u8.bf16 %v381
        %v410 = vunpack.c.l.u8.bf16 %v382
        %v411 = vunpack.c.h.u8.bf16 %v381
        %v412 = vunpack.c.h.u8.bf16 %v382
        %v413 = vunpack.c.l.u8.bf16 %v383
        %v414 = vunpack.c.l.u8.bf16 %v384
        %v415 = vunpack.c.h.u8.bf16 %v383
        %v416 = vunpack.c.h.u8.bf16 %v384
        %v433 = vunpack.c.l.b16 %v222
        %v434 = vunpack.c.h.b16 %v222
        %v435 = vunpack.c.l.b16 %v223
        %v436 = vunpack.c.h.b16 %v223
        %v437 = vunpack.c.l.b16 %v224
        %v438 = vunpack.c.h.b16 %v224
        %v439 = vunpack.c.l.b16 %v225
        %v440 = vunpack.c.h.b16 %v225
        %v441 = vunpack.c.l.b16 %v226
        %v442 = vunpack.c.h.b16 %v226
        %v443 = vunpack.c.l.b16 %v227
        %v444 = vunpack.c.h.b16 %v227
        %v445 = vunpack.c.l.b16 %v228
        %v446 = vunpack.c.h.b16 %v228
        %v447 = vunpack.c.l.b16 %v229
        %v448 = vunpack.c.h.b16 %v229
        %v449 = vunpack.c.l.b16 %v230
        %v450 = vunpack.c.h.b16 %v230
        %v451 = vunpack.c.l.b16 %v231
        %v452 = vunpack.c.h.b16 %v231
        %v453 = vunpack.c.l.b16 %v232
        %v454 = vunpack.c.h.b16 %v232
        %v455 = vunpack.c.l.b16 %v233
        %v456 = vunpack.c.h.b16 %v233
        %v457 = vunpack.c.l.b16 %v234
        %v458 = vunpack.c.h.b16 %v234
        %v459 = vunpack.c.l.b16 %v235
        %v460 = vunpack.c.h.b16 %v235
        %v461 = vunpack.c.l.b16 %v236
        %v462 = vunpack.c.h.b16 %v236
        %v463 = vunpack.c.l.b16 %v237
        %v464 = vunpack.c.h.b16 %v237
        %v465 = vpack.c.b16 %v435, %v433
        %v466 = vpack.c.b16 %v436, %v434
        %v467 = vpack.c.b16 %v439, %v437
        %v468 = vpack.c.b16 %v440, %v438
        %v469 = vpack.c.b16 %v443, %v441
        %v470 = vpack.c.b16 %v444, %v442
        %v471 = vpack.c.b16 %v447, %v445
        %v472 = vpack.c.b16 %v448, %v446
        %v473 = vpack.c.b16 %v451, %v449
        %v474 = vpack.c.b16 %v452, %v450
        %v475 = vpack.c.b16 %v455, %v453
        %v476 = vpack.c.b16 %v456, %v454
        %v477 = vpack.c.b16 %v459, %v457
        %v478 = vpack.c.b16 %v460, %v458
        %v479 = vpack.c.b16 %v463, %v461
        %v480 = vpack.c.b16 %v464, %v462
        %497 = vmatprep.subr.bf16.mxu0 %v337
        %498 = vmatpush1.bf16.msra.mxu0 %v336
        %499 = vmatprep.subr.bf16.mxu0 %v339
        %500 = vmatpush1.bf16.msra.mxu0 %v338
        %501 = vmatprep.subr.bf16.mxu0 %v341
        %502 = vmatpush1.bf16.msra.mxu0 %v340
        %503 = vmatprep.subr.bf16.mxu0 %v343
        %504 = vmatpush1.bf16.msra.mxu0 %v342
        %505 = vmatprep.subr.bf16.mxu0 %v345
        %506 = vmatpush1.bf16.msra.mxu0 %v344
        %507 = vmatprep.subr.bf16.mxu0 %v347
        %508 = vmatpush1.bf16.msra.mxu0 %v346
        %509 = vmatprep.subr.bf16.mxu0 %v349
        %510 = vmatpush1.bf16.msra.mxu0 %v348
        %511 = vmatprep.subr.bf16.mxu0 %v351
        %512 = vmatpush1.bf16.msra.mxu0 %v350
        %513 = vmatprep.subr.bf16.mxu0 %v353
        %514 = vmatpush1.bf16.msra.mxu0 %v352
        %515 = vmatprep.subr.bf16.mxu0 %v355
        %516 = vmatpush1.bf16.msra.mxu0 %v354
        %517 = vmatprep.subr.bf16.mxu0 %v357
        %518 = vmatpush1.bf16.msra.mxu0 %v356
        %519 = vmatprep.subr.bf16.mxu0 %v359
        %520 = vmatpush1.bf16.msra.mxu0 %v358
        %521 = vmatprep.subr.bf16.mxu0 %v361
        %522 = vmatpush1.bf16.msra.mxu0 %v360
        %523 = vmatprep.subr.bf16.mxu0 %v363
        %524 = vmatpush1.bf16.msra.mxu0 %v362
        %525 = vmatprep.subr.bf16.mxu0 %v365
        %526 = vmatpush1.bf16.msra.mxu0 %v364
        %527 = vmatprep.subr.bf16.mxu0 %v367
        %528 = vmatpush1.bf16.msra.mxu0 %v366
        %529 = vmatprep.mubr.bf16.mxu0 %v466
        %530 = vmatmul.mubr.bf16.gmra.mrb[0].mxu0 %v465
        %v531 = vpop.f32.mrb[0].mxu0
        %v532 = vadd.f32 0.0, %v531
        %v533 = vpop.f32.mrb[0].mxu0
        %v534 = vadd.f32 0.0, %v533
        %v535 = vpop.f32.mrb[0].mxu0
        %v536 = vadd.f32 0.0, %v535
        %v537 = vpop.f32.mrb[0].mxu0
        %v538 = vadd.f32 0.0, %v537
        %539 = vmatprep.mubr.bf16.mxu0 %v468
        %540 = vmatmul.mubr.bf16.gmra.mrb[0].mxu0 %v467
        %v541 = vpop.f32.mrb[0].mxu0
        %v542 = vadd.f32 0.0, %v541
        %v543 = vpop.f32.mrb[0].mxu0
        %v544 = vadd.f32 0.0, %v543
        %v545 = vpop.f32.mrb[0].mxu0
        %v546 = vadd.f32 0.0, %v545
        %v547 = vpop.f32.mrb[0].mxu0
        %v548 = vadd.f32 0.0, %v547
        %549 = vmatprep.mubr.bf16.mxu0 %v470
        %550 = vmatmul.mubr.bf16.gmra.mrb[0].mxu0 %v469
        %v551 = vpop.f32.mrb[0].mxu0
        %v552 = vadd.f32 0.0, %v551
        %v553 = vpop.f32.mrb[0].mxu0
        %v554 = vadd.f32 0.0, %v553
        %v555 = vpop.f32.mrb[0].mxu0
        %v556 = vadd.f32 0.0, %v555
        %v557 = vpop.f32.mrb[0].mxu0
        %v558 = vadd.f32 0.0, %v557
        %559 = vmatprep.mubr.bf16.mxu0 %v472
        %560 = vmatmul.mubr.bf16.gmra.mrb[0].mxu0 %v471
        %v561 = vpop.f32.mrb[0].mxu0
        %v562 = vadd.f32 0.0, %v561
        %v563 = vpop.f32.mrb[0].mxu0
        %v564 = vadd.f32 0.0, %v563
        %v565 = vpop.f32.mrb[0].mxu0
        %v566 = vadd.f32 0.0, %v565
        %v567 = vpop.f32.mrb[0].mxu0
        %v568 = vadd.f32 0.0, %v567
        %569 = vmatprep.mubr.bf16.mxu0 %v474
        %570 = vmatmul.mubr.bf16.gmra.mrb[0].mxu0 %v473
        %v571 = vpop.f32.mrb[0].mxu0
        %v572 = vadd.f32 0.0, %v571
        %v573 = vpop.f32.mrb[0].mxu0
        %v574 = vadd.f32 0.0, %v573
        %v575 = vpop.f32.mrb[0].mxu0
        %v576 = vadd.f32 0.0, %v575
        %v577 = vpop.f32.mrb[0].mxu0
        %v578 = vadd.f32 0.0, %v577
        %579 = vmatprep.mubr.bf16.mxu0 %v476
        %580 = vmatmul.mubr.bf16.gmra.mrb[0].mxu0 %v475
        %v581 = vpop.f32.mrb[0].mxu0
        %v582 = vadd.f32 0.0, %v581
        %v583 = vpop.f32.mrb[0].mxu0
        %v584 = vadd.f32 0.0, %v583
        %v585 = vpop.f32.mrb[0].mxu0
        %v586 = vadd.f32 0.0, %v585
        %v587 = vpop.f32.mrb[0].mxu0
        %v588 = vadd.f32 0.0, %v587
        %589 = vmatprep.mubr.bf16.mxu0 %v478
        %590 = vmatmul.mubr.bf16.gmra.mrb[0].mxu0 %v477
        %v591 = vpop.f32.mrb[0].mxu0
        %v592 = vadd.f32 0.0, %v591
        %v593 = vpop.f32.mrb[0].mxu0
        %v594 = vadd.f32 0.0, %v593
        %v595 = vpop.f32.mrb[0].mxu0
        %v596 = vadd.f32 0.0, %v595
        %v597 = vpop.f32.mrb[0].mxu0
        %v598 = vadd.f32 0.0, %v597
        %599 = vmatprep.mubr.bf16.mxu0 %v480
        %600 = vmatmul.mubr.bf16.gmra.mrb[0].mxu0 %v479
        %v601 = vpop.f32.mrb[0].mxu0
        %v602 = vadd.f32 0.0, %v601
        %v603 = vpop.f32.mrb[0].mxu0
        %v604 = vadd.f32 0.0, %v603
        %v605 = vpop.f32.mrb[0].mxu0
        %v606 = vadd.f32 0.0, %v605
        %v607 = vpop.f32.mrb[0].mxu0
        %v608 = vadd.f32 0.0, %v607
        %609 = vdwg.mxu0
        %v626 = vunpack.c.l.b16 %v239
        %v627 = vunpack.c.h.b16 %v239
        %v628 = vunpack.c.l.b16 %v240
        %v629 = vunpack.c.h.b16 %v240
        %v630 = vunpack.c.l.b16 %v241
        %v631 = vunpack.c.h.b16 %v241
        %v632 = vunpack.c.l.b16 %v242
        %v633 = vunpack.c.h.b16 %v242
        %v634 = vunpack.c.l.b16 %v243
        %v635 = vunpack.c.h.b16 %v243
        %v636 = vunpack.c.l.b16 %v244
        %v637 = vunpack.c.h.b16 %v244
        %v638 = vunpack.c.l.b16 %v245
        %v639 = vunpack.c.h.b16 %v245
        %v640 = vunpack.c.l.b16 %v246
        %v641 = vunpack.c.h.b16 %v246
        %v642 = vunpack.c.l.b16 %v247
        %v643 = vunpack.c.h.b16 %v247
        %v644 = vunpack.c.l.b16 %v248
        %v645 = vunpack.c.h.b16 %v248
        %v646 = vunpack.c.l.b16 %v249
        %v647 = vunpack.c.h.b16 %v249
        %v648 = vunpack.c.l.b16 %v250
        %v649 = vunpack.c.h.b16 %v250
        %v650 = vunpack.c.l.b16 %v251
        %v651 = vunpack.c.h.b16 %v251
        %v652 = vunpack.c.l.b16 %v252
        %v653 = vunpack.c.h.b16 %v252
        %v654 = vunpack.c.l.b16 %v253
        %v655 = vunpack.c.h.b16 %v253
        %v656 = vunpack.c.l.b16 %v254
        %v657 = vunpack.c.h.b16 %v254
        %v658 = vpack.c.b16 %v628, %v626
        %v659 = vpack.c.b16 %v629, %v627
        %v660 = vpack.c.b16 %v632, %v630
        %v661 = vpack.c.b16 %v633, %v631
        %v662 = vpack.c.b16 %v636, %v634
        %v663 = vpack.c.b16 %v637, %v635
        %v664 = vpack.c.b16 %v640, %v638
        %v665 = vpack.c.b16 %v641, %v639
        %v666 = vpack.c.b16 %v644, %v642
        %v667 = vpack.c.b16 %v645, %v643
        %v668 = vpack.c.b16 %v648, %v646
        %v669 = vpack.c.b16 %v649, %v647
        %v670 = vpack.c.b16 %v652, %v650
        %v671 = vpack.c.b16 %v653, %v651
        %v672 = vpack.c.b16 %v656, %v654
        %v673 = vpack.c.b16 %v657, %v655
        %690 = vmatprep.subr.bf16.mxu0 %v386
        %691 = vmatpush1.bf16.msra.mxu0 %v385
        %692 = vmatprep.subr.bf16.mxu0 %v388
        %693 = vmatpush1.bf16.msra.mxu0 %v387
        %694 = vmatprep.subr.bf16.mxu0 %v390
        %695 = vmatpush1.bf16.msra.mxu0 %v389
        %696 = vmatprep.subr.bf16.mxu0 %v392
        %697 = vmatpush1.bf16.msra.mxu0 %v391
        %698 = vmatprep.subr.bf16.mxu0 %v394
        %699 = vmatpush1.bf16.msra.mxu0 %v393
        %700 = vmatprep.subr.bf16.mxu0 %v396
        %701 = vmatpush1.bf16.msra.mxu0 %v395
        %702 = vmatprep.subr.bf16.mxu0 %v398
        %703 = vmatpush1.bf16.msra.mxu0 %v397
        %704 = vmatprep.subr.bf16.mxu0 %v400
        %705 = vmatpush1.bf16.msra.mxu0 %v399
        %706 = vmatprep.subr.bf16.mxu0 %v402
        %707 = vmatpush1.bf16.msra.mxu0 %v401
        %708 = vmatprep.subr.bf16.mxu0 %v404
        %709 = vmatpush1.bf16.msra.mxu0 %v403
        %710 = vmatprep.subr.bf16.mxu0 %v406
        %711 = vmatpush1.bf16.msra.mxu0 %v405
        %712 = vmatprep.subr.bf16.mxu0 %v408
        %713 = vmatpush1.bf16.msra.mxu0 %v407
        %714 = vmatprep.subr.bf16.mxu0 %v410
        %715 = vmatpush1.bf16.msra.mxu0 %v409
        %716 = vmatprep.subr.bf16.mxu0 %v412
        %717 = vmatpush1.bf16.msra.mxu0 %v411
        %718 = vmatprep.subr.bf16.mxu0 %v414
        %719 = vmatpush1.bf16.msra.mxu0 %v413
        %720 = vmatprep.subr.bf16.mxu0 %v416
        %721 = vmatpush1.bf16.msra.mxu0 %v415
        %722 = vmatprep.mubr.bf16.mxu0 %v659
        %723 = vmatmul.mubr.bf16.gmra.mrb[0].mxu0 %v658
        %v724 = vpop.f32.mrb[0].mxu0
        %v725 = vadd.f32 0.0, %v724
        %v726 = vpop.f32.mrb[0].mxu0
        %v727 = vadd.f32 0.0, %v726
        %v728 = vpop.f32.mrb[0].mxu0
        %v729 = vadd.f32 0.0, %v728
        %v730 = vpop.f32.mrb[0].mxu0
        %v731 = vadd.f32 0.0, %v730
        %732 = vmatprep.mubr.bf16.mxu0 %v661
        %733 = vmatmul.mubr.bf16.gmra.mrb[0].mxu0 %v660
        %v734 = vpop.f32.mrb[0].mxu0
        %v735 = vadd.f32 0.0, %v734
        %v736 = vpop.f32.mrb[0].mxu0
        %v737 = vadd.f32 0.0, %v736
        %v738 = vpop.f32.mrb[0].mxu0
        %v739 = vadd.f32 0.0, %v738
        %v740 = vpop.f32.mrb[0].mxu0
        %v741 = vadd.f32 0.0, %v740
        %742 = vmatprep.mubr.bf16.mxu0 %v663
        %743 = vmatmul.mubr.bf16.gmra.mrb[0].mxu0 %v662
        %v744 = vpop.f32.mrb[0].mxu0
        %v745 = vadd.f32 0.0, %v744
        %v746 = vpop.f32.mrb[0].mxu0
        %v747 = vadd.f32 0.0, %v746
        %v748 = vpop.f32.mrb[0].mxu0
        %v749 = vadd.f32 0.0, %v748
        %v750 = vpop.f32.mrb[0].mxu0
        %v751 = vadd.f32 0.0, %v750
        %752 = vmatprep.mubr.bf16.mxu0 %v665
        %753 = vmatmul.mubr.bf16.gmra.mrb[0].mxu0 %v664
        %v754 = vpop.f32.mrb[0].mxu0
        %v755 = vadd.f32 0.0, %v754
        %v756 = vpop.f32.mrb[0].mxu0
        %v757 = vadd.f32 0.0, %v756
        %v758 = vpop.f32.mrb[0].mxu0
        %v759 = vadd.f32 0.0, %v758
        %v760 = vpop.f32.mrb[0].mxu0
        %v761 = vadd.f32 0.0, %v760
        %762 = vmatprep.mubr.bf16.mxu0 %v667
        %763 = vmatmul.mubr.bf16.gmra.mrb[0].mxu0 %v666
        %v764 = vpop.f32.mrb[0].mxu0
        %v765 = vadd.f32 0.0, %v764
        %v766 = vpop.f32.mrb[0].mxu0
        %v767 = vadd.f32 0.0, %v766
        %v768 = vpop.f32.mrb[0].mxu0
        %v769 = vadd.f32 0.0, %v768
        %v770 = vpop.f32.mrb[0].mxu0
        %v771 = vadd.f32 0.0, %v770
        %772 = vmatprep.mubr.bf16.mxu0 %v669
        %773 = vmatmul.mubr.bf16.gmra.mrb[0].mxu0 %v668
        %v774 = vpop.f32.mrb[0].mxu0
        %v775 = vadd.f32 0.0, %v774
        %v776 = vpop.f32.mrb[0].mxu0
        %v777 = vadd.f32 0.0, %v776
        %v778 = vpop.f32.mrb[0].mxu0
        %v779 = vadd.f32 0.0, %v778
        %v780 = vpop.f32.mrb[0].mxu0
        %v781 = vadd.f32 0.0, %v780
        %782 = vmatprep.mubr.bf16.mxu0 %v671
        %783 = vmatmul.mubr.bf16.gmra.mrb[0].mxu0 %v670
        %v784 = vpop.f32.mrb[0].mxu0
        %v785 = vadd.f32 0.0, %v784
        %v786 = vpop.f32.mrb[0].mxu0
        %v787 = vadd.f32 0.0, %v786
        %v788 = vpop.f32.mrb[0].mxu0
        %v789 = vadd.f32 0.0, %v788
        %v790 = vpop.f32.mrb[0].mxu0
        %v791 = vadd.f32 0.0, %v790
        %792 = vmatprep.mubr.bf16.mxu0 %v673
        %793 = vmatmul.mubr.bf16.gmra.mrb[0].mxu0 %v672
        %v794 = vpop.f32.mrb[0].mxu0
        %v795 = vadd.f32 0.0, %v794
        %v796 = vpop.f32.mrb[0].mxu0
        %v797 = vadd.f32 0.0, %v796
        %v798 = vpop.f32.mrb[0].mxu0
        %v799 = vadd.f32 0.0, %v798
        %v800 = vpop.f32.mrb[0].mxu0
        %v801 = vadd.f32 0.0, %v800
        %802 = vdwg.mxu0
        %v803 = vpack.c.bf16 %v536, %v532
        %v804 = vpack.c.bf16 %v538, %v534
        %v805 = vpack.c.bf16 %v546, %v542
        %v806 = vpack.c.bf16 %v548, %v544
        %v807 = vpack.c.bf16 %v556, %v552
        %v808 = vpack.c.bf16 %v558, %v554
        %v809 = vpack.c.bf16 %v566, %v562
        %v810 = vpack.c.bf16 %v568, %v564
        %v811 = vpack.c.bf16 %v576, %v572
        %v812 = vpack.c.bf16 %v578, %v574
        %v813 = vpack.c.bf16 %v586, %v582
        %v814 = vpack.c.bf16 %v588, %v584
        %v815 = vpack.c.bf16 %v596, %v592
        %v816 = vpack.c.bf16 %v598, %v594
        %v817 = vpack.c.bf16 %v606, %v602
        %v818 = vpack.c.bf16 %v608, %v604
        %v819 = vpack.c.bf16 %v729, %v725
        %v820 = vpack.c.bf16 %v731, %v727
        %v821 = vpack.c.bf16 %v739, %v735
        %v822 = vpack.c.bf16 %v741, %v737
        %v823 = vpack.c.bf16 %v749, %v745
        %v824 = vpack.c.bf16 %v751, %v747
        %v825 = vpack.c.bf16 %v759, %v755
        %v826 = vpack.c.bf16 %v761, %v757
        %v827 = vpack.c.bf16 %v769, %v765
        %v828 = vpack.c.bf16 %v771, %v767
        %v829 = vpack.c.bf16 %v779, %v775
        %v830 = vpack.c.bf16 %v781, %v777
        %v831 = vpack.c.bf16 %v789, %v785
        %v832 = vpack.c.bf16 %v791, %v787
        %v833 = vpack.c.bf16 %v799, %v795
        %v834 = vpack.c.bf16 %v801, %v797
        %v835 = vunpack.c.l.bf16 %v803
        %v836 = vunpack.c.l.bf16 %v804
        %v837 = vunpack.c.h.bf16 %v803
        %v838 = vunpack.c.h.bf16 %v804
        %v839 = vunpack.c.l.bf16 %v805
        %v840 = vunpack.c.l.bf16 %v806
        %v841 = vunpack.c.h.bf16 %v805
        %v842 = vunpack.c.h.bf16 %v806
        %v843 = vunpack.c.l.bf16 %v807
        %v844 = vunpack.c.l.bf16 %v808
        %v845 = vunpack.c.h.bf16 %v807
        %v846 = vunpack.c.h.bf16 %v808
        %v847 = vunpack.c.l.bf16 %v809
        %v848 = vunpack.c.l.bf16 %v810
        %v849 = vunpack.c.h.bf16 %v809
        %v850 = vunpack.c.h.bf16 %v810
        %v851 = vunpack.c.l.bf16 %v811
        %v852 = vunpack.c.l.bf16 %v812
        %v853 = vunpack.c.h.bf16 %v811
        %v854 = vunpack.c.h.bf16 %v812
        %v855 = vunpack.c.l.bf16 %v813
        %v856 = vunpack.c.l.bf16 %v814
        %v857 = vunpack.c.h.bf16 %v813
        %v858 = vunpack.c.h.bf16 %v814
        %v859 = vunpack.c.l.bf16 %v815
        %v860 = vunpack.c.l.bf16 %v816
        %v861 = vunpack.c.h.bf16 %v815
        %v862 = vunpack.c.h.bf16 %v816
        %v863 = vunpack.c.l.bf16 %v817
        %v864 = vunpack.c.l.bf16 %v818
        %v865 = vunpack.c.h.bf16 %v817
        %v866 = vunpack.c.h.bf16 %v818
        %v867 = vunpack.c.l.bf16 %v819
        %v868 = vunpack.c.l.bf16 %v820
        %v869 = vunpack.c.h.bf16 %v819
        %v870 = vunpack.c.h.bf16 %v820
        %v871 = vunpack.c.l.bf16 %v821
        %v872 = vunpack.c.l.bf16 %v822
        %v873 = vunpack.c.h.bf16 %v821
        %v874 = vunpack.c.h.bf16 %v822
        %v875 = vunpack.c.l.bf16 %v823
        %v876 = vunpack.c.l.bf16 %v824
        %v877 = vunpack.c.h.bf16 %v823
        %v878 = vunpack.c.h.bf16 %v824
        %v879 = vunpack.c.l.bf16 %v825
        %v880 = vunpack.c.l.bf16 %v826
        %v881 = vunpack.c.h.bf16 %v825
        %v882 = vunpack.c.h.bf16 %v826
        %v883 = vunpack.c.l.bf16 %v827
        %v884 = vunpack.c.l.bf16 %v828
        %v885 = vunpack.c.h.bf16 %v827
        %v886 = vunpack.c.h.bf16 %v828
        %v887 = vunpack.c.l.bf16 %v829
        %v888 = vunpack.c.l.bf16 %v830
        %v889 = vunpack.c.h.bf16 %v829
        %v890 = vunpack.c.h.bf16 %v830
        %v891 = vunpack.c.l.bf16 %v831
        %v892 = vunpack.c.l.bf16 %v832
        %v893 = vunpack.c.h.bf16 %v831
        %v894 = vunpack.c.h.bf16 %v832
        %v895 = vunpack.c.l.bf16 %v833
        %v896 = vunpack.c.l.bf16 %v834
        %v897 = vunpack.c.h.bf16 %v833
        %v898 = vunpack.c.h.bf16 %v834
        %v899 = vsub.f32 %v532, %v835
        %v900 = vsub.f32 %v534, %v836
        %v901 = vsub.f32 %v536, %v837
        %v902 = vsub.f32 %v538, %v838
        %v903 = vsub.f32 %v542, %v839
        %v904 = vsub.f32 %v544, %v840
        %v905 = vsub.f32 %v546, %v841
        %v906 = vsub.f32 %v548, %v842
        %v907 = vsub.f32 %v552, %v843
        %v908 = vsub.f32 %v554, %v844
        %v909 = vsub.f32 %v556, %v845
        %v910 = vsub.f32 %v558, %v846
        %v911 = vsub.f32 %v562, %v847
        %v912 = vsub.f32 %v564, %v848
        %v913 = vsub.f32 %v566, %v849
        %v914 = vsub.f32 %v568, %v850
        %v915 = vsub.f32 %v572, %v851
        %v916 = vsub.f32 %v574, %v852
        %v917 = vsub.f32 %v576, %v853
        %v918 = vsub.f32 %v578, %v854
        %v919 = vsub.f32 %v582, %v855
        %v920 = vsub.f32 %v584, %v856
        %v921 = vsub.f32 %v586, %v857
        %v922 = vsub.f32 %v588, %v858
        %v923 = vsub.f32 %v592, %v859
        %v924 = vsub.f32 %v594, %v860
        %v925 = vsub.f32 %v596, %v861
        %v926 = vsub.f32 %v598, %v862
        %v927 = vsub.f32 %v602, %v863
        %v928 = vsub.f32 %v604, %v864
        %v929 = vsub.f32 %v606, %v865
        %v930 = vsub.f32 %v608, %v866
        %v931 = vsub.f32 %v725, %v867
        %v932 = vsub.f32 %v727, %v868
        %v933 = vsub.f32 %v729, %v869
        %v934 = vsub.f32 %v731, %v870
        %v935 = vsub.f32 %v735, %v871
        %v936 = vsub.f32 %v737, %v872
        %v937 = vsub.f32 %v739, %v873
        %v938 = vsub.f32 %v741, %v874
        %v939 = vsub.f32 %v745, %v875
        %v940 = vsub.f32 %v747, %v876
        %v941 = vsub.f32 %v749, %v877
        %v942 = vsub.f32 %v751, %v878
        %v943 = vsub.f32 %v755, %v879
        %v944 = vsub.f32 %v757, %v880
        %v945 = vsub.f32 %v759, %v881
        %v946 = vsub.f32 %v761, %v882
        %v947 = vsub.f32 %v765, %v883
        %v948 = vsub.f32 %v767, %v884
        %v949 = vsub.f32 %v769, %v885
        %v950 = vsub.f32 %v771, %v886
        %v951 = vsub.f32 %v775, %v887
        %v952 = vsub.f32 %v777, %v888
        %v953 = vsub.f32 %v779, %v889
        %v954 = vsub.f32 %v781, %v890
        %v955 = vsub.f32 %v785, %v891
        %v956 = vsub.f32 %v787, %v892
        %v957 = vsub.f32 %v789, %v893
        %v958 = vsub.f32 %v791, %v894
        %v959 = vsub.f32 %v795, %v895
        %v960 = vsub.f32 %v797, %v896
        %v961 = vsub.f32 %v799, %v897
        %v962 = vsub.f32 %v801, %v898
        %v963 = vpack.c.bf16 %v901, %v899
        %v964 = vpack.c.bf16 %v902, %v900
        %v965 = vpack.c.bf16 %v905, %v903
        %v966 = vpack.c.bf16 %v906, %v904
        %v967 = vpack.c.bf16 %v909, %v907
        %v968 = vpack.c.bf16 %v910, %v908
        %v969 = vpack.c.bf16 %v913, %v911
        %v970 = vpack.c.bf16 %v914, %v912
        %v971 = vpack.c.bf16 %v917, %v915
        %v972 = vpack.c.bf16 %v918, %v916
        %v973 = vpack.c.bf16 %v921, %v919
        %v974 = vpack.c.bf16 %v922, %v920
        %v975 = vpack.c.bf16 %v925, %v923
        %v976 = vpack.c.bf16 %v926, %v924
        %v977 = vpack.c.bf16 %v929, %v927
        %v978 = vpack.c.bf16 %v930, %v928
        %v979 = vpack.c.bf16 %v933, %v931
        %v980 = vpack.c.bf16 %v934, %v932
        %v981 = vpack.c.bf16 %v937, %v935
        %v982 = vpack.c.bf16 %v938, %v936
        %v983 = vpack.c.bf16 %v941, %v939
        %v984 = vpack.c.bf16 %v942, %v940
        %v985 = vpack.c.bf16 %v945, %v943
        %v986 = vpack.c.bf16 %v946, %v944
        %v987 = vpack.c.bf16 %v949, %v947
        %v988 = vpack.c.bf16 %v950, %v948
        %v989 = vpack.c.bf16 %v953, %v951
        %v990 = vpack.c.bf16 %v954, %v952
        %v991 = vpack.c.bf16 %v957, %v955
        %v992 = vpack.c.bf16 %v958, %v956
        %v993 = vpack.c.bf16 %v961, %v959
        %v994 = vpack.c.bf16 %v962, %v960
        %v1027 = vunpack.c.l.b16 %v255
        %v1028 = vunpack.c.l.b16 %v256
        %v1029 = vunpack.c.l.b16 %v257
        %v1030 = vunpack.c.l.b16 %v258
        %v1031 = vunpack.c.l.b16 %v259
        %v1032 = vunpack.c.l.b16 %v260
        %v1033 = vunpack.c.l.b16 %v261
        %v1034 = vunpack.c.l.b16 %v262
        %v1035 = vunpack.c.l.b16 %v263
        %v1036 = vunpack.c.l.b16 %v264
        %v1037 = vunpack.c.l.b16 %v265
        %v1038 = vunpack.c.l.b16 %v266
        %v1039 = vunpack.c.l.b16 %v267
        %v1040 = vunpack.c.l.b16 %v268
        %v1041 = vunpack.c.l.b16 %v269
        %v1042 = vunpack.c.l.b16 %v270
        %v1043 = vunpack.c.l.b16 %v271
        %v1044 = vunpack.c.l.b16 %v272
        %v1045 = vunpack.c.l.b16 %v273
        %v1046 = vunpack.c.l.b16 %v274
        %v1047 = vunpack.c.l.b16 %v275
        %v1048 = vunpack.c.l.b16 %v276
        %v1049 = vunpack.c.l.b16 %v277
        %v1050 = vunpack.c.l.b16 %v278
        %v1051 = vunpack.c.l.b16 %v279
        %v1052 = vunpack.c.l.b16 %v280
        %v1053 = vunpack.c.l.b16 %v281
        %v1054 = vunpack.c.l.b16 %v282
        %v1055 = vunpack.c.l.b16 %v283
        %v1056 = vunpack.c.l.b16 %v284
        %v1057 = vunpack.c.l.b16 %v285
        %v1058 = vunpack.c.l.b16 %v286
        %v1059 = vpack.c.b16 %v1028, %v1027
        %v1060 = vpack.c.b16 %v1030, %v1029
        %v1061 = vpack.c.b16 %v1032, %v1031
        %v1062 = vpack.c.b16 %v1034, %v1033
        %v1063 = vpack.c.b16 %v1036, %v1035
        %v1064 = vpack.c.b16 %v1038, %v1037
        %v1065 = vpack.c.b16 %v1040, %v1039
        %v1066 = vpack.c.b16 %v1042, %v1041
        %v1067 = vpack.c.b16 %v1044, %v1043
        %v1068 = vpack.c.b16 %v1046, %v1045
        %v1069 = vpack.c.b16 %v1048, %v1047
        %v1070 = vpack.c.b16 %v1050, %v1049
        %v1071 = vpack.c.b16 %v1052, %v1051
        %v1072 = vpack.c.b16 %v1054, %v1053
        %v1073 = vpack.c.b16 %v1056, %v1055
        %v1074 = vpack.c.b16 %v1058, %v1057
        %1091 = vmatprep.subr.bf16.mxu0 0
        %1092 = vmatpush1.bf16.msra.mxu0 %v1059
        %1093 = vmatprep.subr.bf16.mxu0 0
        %1094 = vmatpush1.bf16.msra.mxu0 %v1060
        %1095 = vmatprep.subr.bf16.mxu0 0
        %1096 = vmatpush1.bf16.msra.mxu0 %v1061
        %1097 = vmatprep.subr.bf16.mxu0 0
        %1098 = vmatpush1.bf16.msra.mxu0 %v1062
        %1099 = vmatprep.subr.bf16.mxu0 0
        %1100 = vmatpush1.bf16.msra.mxu0 %v1063
        %1101 = vmatprep.subr.bf16.mxu0 0
        %1102 = vmatpush1.bf16.msra.mxu0 %v1064
        %1103 = vmatprep.subr.bf16.mxu0 0
        %1104 = vmatpush1.bf16.msra.mxu0 %v1065
        %1105 = vmatprep.subr.bf16.mxu0 0
        %1106 = vmatpush1.bf16.msra.mxu0 %v1066
        %1107 = vmatprep.subr.bf16.mxu0 0
        %1108 = vmatpush1.bf16.msra.mxu0 %v1067
        %1109 = vmatprep.subr.bf16.mxu0 0
        %1110 = vmatpush1.bf16.msra.mxu0 %v1068
        %1111 = vmatprep.subr.bf16.mxu0 0
        %1112 = vmatpush1.bf16.msra.mxu0 %v1069
        %1113 = vmatprep.subr.bf16.mxu0 0
        %1114 = vmatpush1.bf16.msra.mxu0 %v1070
        %1115 = vmatprep.subr.bf16.mxu0 0
        %1116 = vmatpush1.bf16.msra.mxu0 %v1071
        %1117 = vmatprep.subr.bf16.mxu0 0
        %1118 = vmatpush1.bf16.msra.mxu0 %v1072
        %1119 = vmatprep.subr.bf16.mxu0 0
        %1120 = vmatpush1.bf16.msra.mxu0 %v1073
        %1121 = vmatprep.subr.bf16.mxu0 0
        %1122 = vmatpush1.bf16.msra.mxu0 %v1074
        %1123 = vmatprep.mubr.bf16.mxu0 %v964
        %1124 = vmatmul.mubr.bf16.gmra.mrb[0].mxu0 %v963
        %v1125 = vpop.f32.mrb[0].mxu0
        %v1126 = vadd.f32 0.0, %v1125
        %v1127 = vpop.f32.mrb[0].mxu0
        %v1128 = vpop.f32.mrb[0].mxu0
        %v1129 = vadd.f32 0.0, %v1128
        %v1130 = vpop.f32.mrb[0].mxu0
        %1131 = vmatprep.mubr.bf16.mxu0 %v966
        %1132 = vmatmul.mubr.bf16.gmra.mrb[0].mxu0 %v965
        %v1133 = vpop.f32.mrb[0].mxu0
        %v1134 = vadd.f32 0.0, %v1133
        %v1135 = vpop.f32.mrb[0].mxu0
        %v1136 = vpop.f32.mrb[0].mxu0
        %v1137 = vadd.f32 0.0, %v1136
        %v1138 = vpop.f32.mrb[0].mxu0
        %1139 = vmatprep.mubr.bf16.mxu0 %v968
        %1140 = vmatmul.mubr.bf16.gmra.mrb[0].mxu0 %v967
        %v1141 = vpop.f32.mrb[0].mxu0
        %v1142 = vadd.f32 0.0, %v1141
        %v1143 = vpop.f32.mrb[0].mxu0
        %v1144 = vpop.f32.mrb[0].mxu0
        %v1145 = vadd.f32 0.0, %v1144
        %v1146 = vpop.f32.mrb[0].mxu0
        %1147 = vmatprep.mubr.bf16.mxu0 %v970
        %1148 = vmatmul.mubr.bf16.gmra.mrb[0].mxu0 %v969
        %v1149 = vpop.f32.mrb[0].mxu0
        %v1150 = vadd.f32 0.0, %v1149
        %v1151 = vpop.f32.mrb[0].mxu0
        %v1152 = vpop.f32.mrb[0].mxu0
        %v1153 = vadd.f32 0.0, %v1152
        %v1154 = vpop.f32.mrb[0].mxu0
        %1155 = vmatprep.mubr.bf16.mxu0 %v972
        %1156 = vmatmul.mubr.bf16.gmra.mrb[0].mxu0 %v971
        %v1157 = vpop.f32.mrb[0].mxu0
        %v1158 = vadd.f32 0.0, %v1157
        %v1159 = vpop.f32.mrb[0].mxu0
        %v1160 = vpop.f32.mrb[0].mxu0
        %v1161 = vadd.f32 0.0, %v1160
        %v1162 = vpop.f32.mrb[0].mxu0
        %1163 = vmatprep.mubr.bf16.mxu0 %v974
        %1164 = vmatmul.mubr.bf16.gmra.mrb[0].mxu0 %v973
        %v1165 = vpop.f32.mrb[0].mxu0
        %v1166 = vadd.f32 0.0, %v1165
        %v1167 = vpop.f32.mrb[0].mxu0
        %v1168 = vpop.f32.mrb[0].mxu0
        %v1169 = vadd.f32 0.0, %v1168
        %v1170 = vpop.f32.mrb[0].mxu0
        %1171 = vmatprep.mubr.bf16.mxu0 %v976
        %1172 = vmatmul.mubr.bf16.gmra.mrb[0].mxu0 %v975
        %v1173 = vpop.f32.mrb[0].mxu0
        %v1174 = vadd.f32 0.0, %v1173
        %v1175 = vpop.f32.mrb[0].mxu0
        %v1176 = vpop.f32.mrb[0].mxu0
        %v1177 = vadd.f32 0.0, %v1176
        %v1178 = vpop.f32.mrb[0].mxu0
        %1179 = vmatprep.mubr.bf16.mxu0 %v978
        %1180 = vmatmul.mubr.bf16.gmra.mrb[0].mxu0 %v977
        %v1181 = vpop.f32.mrb[0].mxu0
        %v1182 = vadd.f32 0.0, %v1181
        %v1183 = vpop.f32.mrb[0].mxu0
        %v1184 = vpop.f32.mrb[0].mxu0
        %v1185 = vadd.f32 0.0, %v1184
        %v1186 = vpop.f32.mrb[0].mxu0
        %1187 = vmatprep.mubr.bf16.mxu0 %v980
        %1188 = vmatmul.mubr.bf16.gmra.mrb[0].mxu0 %v979
        %v1189 = vpop.f32.mrb[0].mxu0
        %v1190 = vadd.f32 0.0, %v1189
        %v1191 = vpop.f32.mrb[0].mxu0
        %v1192 = vpop.f32.mrb[0].mxu0
        %v1193 = vadd.f32 0.0, %v1192
        %v1194 = vpop.f32.mrb[0].mxu0
        %1195 = vmatprep.mubr.bf16.mxu0 %v982
        %1196 = vmatmul.mubr.bf16.gmra.mrb[0].mxu0 %v981
        %v1197 = vpop.f32.mrb[0].mxu0
        %v1198 = vadd.f32 0.0, %v1197
        %v1199 = vpop.f32.mrb[0].mxu0
        %v1200 = vpop.f32.mrb[0].mxu0
        %v1201 = vadd.f32 0.0, %v1200
        %v1202 = vpop.f32.mrb[0].mxu0
        %1203 = vmatprep.mubr.bf16.mxu0 %v984
        %1204 = vmatmul.mubr.bf16.gmra.mrb[0].mxu0 %v983
        %v1205 = vpop.f32.mrb[0].mxu0
        %v1206 = vadd.f32 0.0, %v1205
        %v1207 = vpop.f32.mrb[0].mxu0
        %v1208 = vpop.f32.mrb[0].mxu0
        %v1209 = vadd.f32 0.0, %v1208
        %v1210 = vpop.f32.mrb[0].mxu0
        %1211 = vmatprep.mubr.bf16.mxu0 %v986
        %1212 = vmatmul.mubr.bf16.gmra.mrb[0].mxu0 %v985
        %v1213 = vpop.f32.mrb[0].mxu0
        %v1214 = vadd.f32 0.0, %v1213
        %v1215 = vpop.f32.mrb[0].mxu0
        %v1216 = vpop.f32.mrb[0].mxu0
        %v1217 = vadd.f32 0.0, %v1216
        %v1218 = vpop.f32.mrb[0].mxu0
        %1219 = vmatprep.mubr.bf16.mxu0 %v988
        %1220 = vmatmul.mubr.bf16.gmra.mrb[0].mxu0 %v987
        %v1221 = vpop.f32.mrb[0].mxu0
        %v1222 = vadd.f32 0.0, %v1221
        %v1223 = vpop.f32.mrb[0].mxu0
        %v1224 = vpop.f32.mrb[0].mxu0
        %v1225 = vadd.f32 0.0, %v1224
        %v1226 = vpop.f32.mrb[0].mxu0
        %1227 = vmatprep.mubr.bf16.mxu0 %v990
        %1228 = vmatmul.mubr.bf16.gmra.mrb[0].mxu0 %v989
        %v1229 = vpop.f32.mrb[0].mxu0
        %v1230 = vadd.f32 0.0, %v1229
        %v1231 = vpop.f32.mrb[0].mxu0
        %v1232 = vpop.f32.mrb[0].mxu0
        %v1233 = vadd.f32 0.0, %v1232
        %v1234 = vpop.f32.mrb[0].mxu0
        %1235 = vmatprep.mubr.bf16.mxu0 %v992
        %1236 = vmatmul.mubr.bf16.gmra.mrb[0].mxu0 %v991
        %v1237 = vpop.f32.mrb[0].mxu0
        %v1238 = vadd.f32 0.0, %v1237
        %v1239 = vpop.f32.mrb[0].mxu0
        %v1240 = vpop.f32.mrb[0].mxu0
        %v1241 = vadd.f32 0.0, %v1240
        %v1242 = vpop.f32.mrb[0].mxu0
        %1243 = vmatprep.mubr.bf16.mxu0 %v994
        %1244 = vmatmul.mubr.bf16.gmra.mrb[0].mxu0 %v993
        %v1245 = vpop.f32.mrb[0].mxu0
        %v1246 = vadd.f32 0.0, %v1245
        %v1247 = vpop.f32.mrb[0].mxu0
        %v1248 = vpop.f32.mrb[0].mxu0
        %v1249 = vadd.f32 0.0, %v1248
        %v1250 = vpop.f32.mrb[0].mxu0
        %1251 = vdwg.mxu0
        %1252 = vmatprep.subr.bf16.mxu0 0
        %1253 = vmatpush1.bf16.msra.mxu0 %v1059
        %1254 = vmatprep.subr.bf16.mxu0 0
        %1255 = vmatpush1.bf16.msra.mxu0 %v1060
        %1256 = vmatprep.subr.bf16.mxu0 0
        %1257 = vmatpush1.bf16.msra.mxu0 %v1061
        %1258 = vmatprep.subr.bf16.mxu0 0
        %1259 = vmatpush1.bf16.msra.mxu0 %v1062
        %1260 = vmatprep.subr.bf16.mxu0 0
        %1261 = vmatpush1.bf16.msra.mxu0 %v1063
        %1262 = vmatprep.subr.bf16.mxu0 0
        %1263 = vmatpush1.bf16.msra.mxu0 %v1064
        %1264 = vmatprep.subr.bf16.mxu0 0
        %1265 = vmatpush1.bf16.msra.mxu0 %v1065
        %1266 = vmatprep.subr.bf16.mxu0 0
        %1267 = vmatpush1.bf16.msra.mxu0 %v1066
        %1268 = vmatprep.subr.bf16.mxu0 0
        %1269 = vmatpush1.bf16.msra.mxu0 %v1067
        %1270 = vmatprep.subr.bf16.mxu0 0
        %1271 = vmatpush1.bf16.msra.mxu0 %v1068
        %1272 = vmatprep.subr.bf16.mxu0 0
        %1273 = vmatpush1.bf16.msra.mxu0 %v1069
        %1274 = vmatprep.subr.bf16.mxu0 0
        %1275 = vmatpush1.bf16.msra.mxu0 %v1070
        %1276 = vmatprep.subr.bf16.mxu0 0
        %1277 = vmatpush1.bf16.msra.mxu0 %v1071
        %1278 = vmatprep.subr.bf16.mxu0 0
        %1279 = vmatpush1.bf16.msra.mxu0 %v1072
        %1280 = vmatprep.subr.bf16.mxu0 0
        %1281 = vmatpush1.bf16.msra.mxu0 %v1073
        %1282 = vmatprep.subr.bf16.mxu0 0
        %1283 = vmatpush1.bf16.msra.mxu0 %v1074
        %1284 = vmatprep.mubr.bf16.mxu0 %v804
        %1285 = vmatmul.mubr.bf16.gmra.mrb[0].mxu0 %v803
        %v1286 = vpop.f32.mrb[0].mxu0
        %v1287 = vadd.f32 %v1126, %v1286
        %v1288 = vpop.f32.mrb[0].mxu0
        %v1289 = vpop.f32.mrb[0].mxu0
        %v1290 = vadd.f32 %v1129, %v1289
        %v1291 = vpop.f32.mrb[0].mxu0
        %1292 = vmatprep.mubr.bf16.mxu0 %v806
        %1293 = vmatmul.mubr.bf16.gmra.mrb[0].mxu0 %v805
        %v1294 = vpop.f32.mrb[0].mxu0
        %v1295 = vadd.f32 %v1134, %v1294
        %v1296 = vpop.f32.mrb[0].mxu0
        %v1297 = vpop.f32.mrb[0].mxu0
        %v1298 = vadd.f32 %v1137, %v1297
        %v1299 = vpop.f32.mrb[0].mxu0
        %1300 = vmatprep.mubr.bf16.mxu0 %v808
        %1301 = vmatmul.mubr.bf16.gmra.mrb[0].mxu0 %v807
        %v1302 = vpop.f32.mrb[0].mxu0
        %v1303 = vadd.f32 %v1142, %v1302
        %v1304 = vpop.f32.mrb[0].mxu0
        %v1305 = vpop.f32.mrb[0].mxu0
        %v1306 = vadd.f32 %v1145, %v1305
        %v1307 = vpop.f32.mrb[0].mxu0
        %1308 = vmatprep.mubr.bf16.mxu0 %v810
        %1309 = vmatmul.mubr.bf16.gmra.mrb[0].mxu0 %v809
        %v1310 = vpop.f32.mrb[0].mxu0
        %v1311 = vadd.f32 %v1150, %v1310
        %v1312 = vpop.f32.mrb[0].mxu0
        %v1313 = vpop.f32.mrb[0].mxu0
        %v1314 = vadd.f32 %v1153, %v1313
        %v1315 = vpop.f32.mrb[0].mxu0
        %1316 = vmatprep.mubr.bf16.mxu0 %v812
        %1317 = vmatmul.mubr.bf16.gmra.mrb[0].mxu0 %v811
        %v1318 = vpop.f32.mrb[0].mxu0
        %v1319 = vadd.f32 %v1158, %v1318
        %v1320 = vpop.f32.mrb[0].mxu0
        %v1321 = vpop.f32.mrb[0].mxu0
        %v1322 = vadd.f32 %v1161, %v1321
        %v1323 = vpop.f32.mrb[0].mxu0
        %1324 = vmatprep.mubr.bf16.mxu0 %v814
        %1325 = vmatmul.mubr.bf16.gmra.mrb[0].mxu0 %v813
        %v1326 = vpop.f32.mrb[0].mxu0
        %v1327 = vadd.f32 %v1166, %v1326
        %v1328 = vpop.f32.mrb[0].mxu0
        %v1329 = vpop.f32.mrb[0].mxu0
        %v1330 = vadd.f32 %v1169, %v1329
        %v1331 = vpop.f32.mrb[0].mxu0
        %1332 = vmatprep.mubr.bf16.mxu0 %v816
        %1333 = vmatmul.mubr.bf16.gmra.mrb[0].mxu0 %v815
        %v1334 = vpop.f32.mrb[0].mxu0
        %v1335 = vadd.f32 %v1174, %v1334
        %v1336 = vpop.f32.mrb[0].mxu0
        %v1337 = vpop.f32.mrb[0].mxu0
        %v1338 = vadd.f32 %v1177, %v1337
        %v1339 = vpop.f32.mrb[0].mxu0
        %1340 = vmatprep.mubr.bf16.mxu0 %v818
        %1341 = vmatmul.mubr.bf16.gmra.mrb[0].mxu0 %v817
        %v1342 = vpop.f32.mrb[0].mxu0
        %v1343 = vadd.f32 %v1182, %v1342
        %v1344 = vpop.f32.mrb[0].mxu0
        %v1345 = vpop.f32.mrb[0].mxu0
        %v1346 = vadd.f32 %v1185, %v1345
        %v1347 = vpop.f32.mrb[0].mxu0
        %1348 = vmatprep.mubr.bf16.mxu0 %v820
        %1349 = vmatmul.mubr.bf16.gmra.mrb[0].mxu0 %v819
        %v1350 = vpop.f32.mrb[0].mxu0
        %v1351 = vadd.f32 %v1190, %v1350
        %v1352 = vpop.f32.mrb[0].mxu0
        %v1353 = vpop.f32.mrb[0].mxu0
        %v1354 = vadd.f32 %v1193, %v1353
        %v1355 = vpop.f32.mrb[0].mxu0
        %1356 = vmatprep.mubr.bf16.mxu0 %v822
        %1357 = vmatmul.mubr.bf16.gmra.mrb[0].mxu0 %v821
        %v1358 = vpop.f32.mrb[0].mxu0
        %v1359 = vadd.f32 %v1198, %v1358
        %v1360 = vpop.f32.mrb[0].mxu0
        %v1361 = vpop.f32.mrb[0].mxu0
        %v1362 = vadd.f32 %v1201, %v1361
        %v1363 = vpop.f32.mrb[0].mxu0
        %1364 = vmatprep.mubr.bf16.mxu0 %v824
        %1365 = vmatmul.mubr.bf16.gmra.mrb[0].mxu0 %v823
        %v1366 = vpop.f32.mrb[0].mxu0
        %v1367 = vadd.f32 %v1206, %v1366
        %v1368 = vpop.f32.mrb[0].mxu0
        %v1369 = vpop.f32.mrb[0].mxu0
        %v1370 = vadd.f32 %v1209, %v1369
        %v1371 = vpop.f32.mrb[0].mxu0
        %1372 = vmatprep.mubr.bf16.mxu0 %v826
        %1373 = vmatmul.mubr.bf16.gmra.mrb[0].mxu0 %v825
        %v1374 = vpop.f32.mrb[0].mxu0
        %v1375 = vadd.f32 %v1214, %v1374
        %v1376 = vpop.f32.mrb[0].mxu0
        %v1377 = vpop.f32.mrb[0].mxu0
        %v1378 = vadd.f32 %v1217, %v1377
        %v1379 = vpop.f32.mrb[0].mxu0
        %1380 = vmatprep.mubr.bf16.mxu0 %v828
        %1381 = vmatmul.mubr.bf16.gmra.mrb[0].mxu0 %v827
        %v1382 = vpop.f32.mrb[0].mxu0
        %v1383 = vadd.f32 %v1222, %v1382
        %v1384 = vpop.f32.mrb[0].mxu0
        %v1385 = vpop.f32.mrb[0].mxu0
        %v1386 = vadd.f32 %v1225, %v1385
        %v1387 = vpop.f32.mrb[0].mxu0
        %1388 = vmatprep.mubr.bf16.mxu0 %v830
        %1389 = vmatmul.mubr.bf16.gmra.mrb[0].mxu0 %v829
        %v1390 = vpop.f32.mrb[0].mxu0
        %v1391 = vadd.f32 %v1230, %v1390
        %v1392 = vpop.f32.mrb[0].mxu0
        %v1393 = vpop.f32.mrb[0].mxu0
        %v1394 = vadd.f32 %v1233, %v1393
        %v1395 = vpop.f32.mrb[0].mxu0
        %1396 = vmatprep.mubr.bf16.mxu0 %v832
        %1397 = vmatmul.mubr.bf16.gmra.mrb[0].mxu0 %v831
        %v1398 = vpop.f32.mrb[0].mxu0
        %v1399 = vadd.f32 %v1238, %v1398
        %v1400 = vpop.f32.mrb[0].mxu0
        %v1401 = vpop.f32.mrb[0].mxu0
        %v1402 = vadd.f32 %v1241, %v1401
        %v1403 = vpop.f32.mrb[0].mxu0
        %1404 = vmatprep.mubr.bf16.mxu0 %v834
        %1405 = vmatmul.mubr.bf16.gmra.mrb[0].mxu0 %v833
        %v1406 = vpop.f32.mrb[0].mxu0
        %v1407 = vadd.f32 %v1246, %v1406
        %v1408 = vpop.f32.mrb[0].mxu0
        %v1409 = vpop.f32.mrb[0].mxu0
        %v1410 = vadd.f32 %v1249, %v1409
        %v1411 = vpop.f32.mrb[0].mxu0
        %1412 = vdwg.mxu0
        %s1413 = scalar_lea.vmem %s188, 128 [#allocation2]
        %v1414 = vld [vmem:[%s1413] sm:$0xff]
        %v1415 = vld [vmem:[%s1413 + $0x8] sm:$0xff]
        %v1416 = vld [vmem:[%s1413 + $0x10] sm:$0xff]
        %v1417 = vld [vmem:[%s1413 + $0x18] sm:$0xff]
        %v1418 = vld [vmem:[%s1413 + $0x20] sm:$0xff]
        %v1419 = vld [vmem:[%s1413 + $0x28] sm:$0xff]
        %v1420 = vld [vmem:[%s1413 + $0x30] sm:$0xff]
        %v1421 = vld [vmem:[%s1413 + $0x38] sm:$0xff]
        %v1422 = vld [vmem:[%s1413 + $0x40] sm:$0xff]
        %v1423 = vld [vmem:[%s1413 + $0x48] sm:$0xff]
        %v1424 = vld [vmem:[%s1413 + $0x50] sm:$0xff]
        %v1425 = vld [vmem:[%s1413 + $0x58] sm:$0xff]
        %v1426 = vld [vmem:[%s1413 + $0x60] sm:$0xff]
        %v1427 = vld [vmem:[%s1413 + $0x68] sm:$0xff]
        %v1428 = vld [vmem:[%s1413 + $0x70] sm:$0xff]
        %v1429 = vld [vmem:[%s1413 + $0x78] sm:$0xff]
        %v1430 = vunpack.c.l.u8.bf16 %v1414
        %v1431 = vunpack.c.l.u8.bf16 %v1415
        %v1432 = vunpack.c.h.u8.bf16 %v1414
        %v1433 = vunpack.c.h.u8.bf16 %v1415
        %v1434 = vunpack.c.l.u8.bf16 %v1416
        %v1435 = vunpack.c.l.u8.bf16 %v1417
        %v1436 = vunpack.c.h.u8.bf16 %v1416
        %v1437 = vunpack.c.h.u8.bf16 %v1417
        %v1438 = vunpack.c.l.u8.bf16 %v1418
        %v1439 = vunpack.c.l.u8.bf16 %v1419
        %v1440 = vunpack.c.h.u8.bf16 %v1418
        %v1441 = vunpack.c.h.u8.bf16 %v1419
        %v1442 = vunpack.c.l.u8.bf16 %v1420
        %v1443 = vunpack.c.l.u8.bf16 %v1421
        %v1444 = vunpack.c.h.u8.bf16 %v1420
        %v1445 = vunpack.c.h.u8.bf16 %v1421
        %v1446 = vunpack.c.l.u8.bf16 %v1422
        %v1447 = vunpack.c.l.u8.bf16 %v1423
        %v1448 = vunpack.c.h.u8.bf16 %v1422
        %v1449 = vunpack.c.h.u8.bf16 %v1423
        %v1450 = vunpack.c.l.u8.bf16 %v1424
        %v1451 = vunpack.c.l.u8.bf16 %v1425
        %v1452 = vunpack.c.h.u8.bf16 %v1424
        %v1453 = vunpack.c.h.u8.bf16 %v1425
        %v1454 = vunpack.c.l.u8.bf16 %v1426
        %v1455 = vunpack.c.l.u8.bf16 %v1427
        %v1456 = vunpack.c.h.u8.bf16 %v1426
        %v1457 = vunpack.c.h.u8.bf16 %v1427
        %v1458 = vunpack.c.l.u8.bf16 %v1428
        %v1459 = vunpack.c.l.u8.bf16 %v1429
        %v1460 = vunpack.c.h.u8.bf16 %v1428
        %v1461 = vunpack.c.h.u8.bf16 %v1429
        %s1462 = scalar_lea.vmem %s188, 384 [#allocation2]
        %v1463 = vld [vmem:[%s1462] sm:$0xff]
        %v1464 = vld [vmem:[%s1462 + $0x8] sm:$0xff]
        %v1465 = vld [vmem:[%s1462 + $0x10] sm:$0xff]
        %v1466 = vld [vmem:[%s1462 + $0x18] sm:$0xff]
        %v1467 = vld [vmem:[%s1462 + $0x20] sm:$0xff]
        %v1468 = vld [vmem:[%s1462 + $0x28] sm:$0xff]
        %v1469 = vld [vmem:[%s1462 + $0x30] sm:$0xff]
        %v1470 = vld [vmem:[%s1462 + $0x38] sm:$0xff]
        %v1471 = vld [vmem:[%s1462 + $0x40] sm:$0xff]
        %v1472 = vld [vmem:[%s1462 + $0x48] sm:$0xff]
        %v1473 = vld [vmem:[%s1462 + $0x50] sm:$0xff]
        %v1474 = vld [vmem:[%s1462 + $0x58] sm:$0xff]
        %v1475 = vld [vmem:[%s1462 + $0x60] sm:$0xff]
        %v1476 = vld [vmem:[%s1462 + $0x68] sm:$0xff]
        %v1477 = vld [vmem:[%s1462 + $0x70] sm:$0xff]
        %v1478 = vld [vmem:[%s1462 + $0x78] sm:$0xff]
        %v1479 = vunpack.c.l.u8.bf16 %v1463
        %v1480 = vunpack.c.l.u8.bf16 %v1464
        %v1481 = vunpack.c.h.u8.bf16 %v1463
        %v1482 = vunpack.c.h.u8.bf16 %v1464
        %v1483 = vunpack.c.l.u8.bf16 %v1465
        %v1484 = vunpack.c.l.u8.bf16 %v1466
        %v1485 = vunpack.c.h.u8.bf16 %v1465
        %v1486 = vunpack.c.h.u8.bf16 %v1466
        %v1487 = vunpack.c.l.u8.bf16 %v1467
        %v1488 = vunpack.c.l.u8.bf16 %v1468
        %v1489 = vunpack.c.h.u8.bf16 %v1467
        %v1490 = vunpack.c.h.u8.bf16 %v1468
        %v1491 = vunpack.c.l.u8.bf16 %v1469
        %v1492 = vunpack.c.l.u8.bf16 %v1470
        %v1493 = vunpack.c.h.u8.bf16 %v1469
        %v1494 = vunpack.c.h.u8.bf16 %v1470
        %v1495 = vunpack.c.l.u8.bf16 %v1471
        %v1496 = vunpack.c.l.u8.bf16 %v1472
        %v1497 = vunpack.c.h.u8.bf16 %v1471
        %v1498 = vunpack.c.h.u8.bf16 %v1472
        %v1499 = vunpack.c.l.u8.bf16 %v1473
        %v1500 = vunpack.c.l.u8.bf16 %v1474
        %v1501 = vunpack.c.h.u8.bf16 %v1473
        %v1502 = vunpack.c.h.u8.bf16 %v1474
        %v1503 = vunpack.c.l.u8.bf16 %v1475
        %v1504 = vunpack.c.l.u8.bf16 %v1476
        %v1505 = vunpack.c.h.u8.bf16 %v1475
        %v1506 = vunpack.c.h.u8.bf16 %v1476
        %v1507 = vunpack.c.l.u8.bf16 %v1477
        %v1508 = vunpack.c.l.u8.bf16 %v1478
        %v1509 = vunpack.c.h.u8.bf16 %v1477
        %v1510 = vunpack.c.h.u8.bf16 %v1478
        %1511 = vmatprep.subr.bf16.mxu0 %v1431
        %1512 = vmatpush1.bf16.msra.mxu0 %v1430
        %1513 = vmatprep.subr.bf16.mxu0 %v1433
        %1514 = vmatpush1.bf16.msra.mxu0 %v1432
        %1515 = vmatprep.subr.bf16.mxu0 %v1435
        %1516 = vmatpush1.bf16.msra.mxu0 %v1434
        %1517 = vmatprep.subr.bf16.mxu0 %v1437
        %1518 = vmatpush1.bf16.msra.mxu0 %v1436
        %1519 = vmatprep.subr.bf16.mxu0 %v1439
        %1520 = vmatpush1.bf16.msra.mxu0 %v1438
        %1521 = vmatprep.subr.bf16.mxu0 %v1441
        %1522 = vmatpush1.bf16.msra.mxu0 %v1440
        %1523 = vmatprep.subr.bf16.mxu0 %v1443
        %1524 = vmatpush1.bf16.msra.mxu0 %v1442
        %1525 = vmatprep.subr.bf16.mxu0 %v1445
        %1526 = vmatpush1.bf16.msra.mxu0 %v1444
        %1527 = vmatprep.subr.bf16.mxu0 %v1447
        %1528 = vmatpush1.bf16.msra.mxu0 %v1446
        %1529 = vmatprep.subr.bf16.mxu0 %v1449
        %1530 = vmatpush1.bf16.msra.mxu0 %v1448
        %1531 = vmatprep.subr.bf16.mxu0 %v1451
        %1532 = vmatpush1.bf16.msra.mxu0 %v1450
        %1533 = vmatprep.subr.bf16.mxu0 %v1453
        %1534 = vmatpush1.bf16.msra.mxu0 %v1452
        %1535 = vmatprep.subr.bf16.mxu0 %v1455
        %1536 = vmatpush1.bf16.msra.mxu0 %v1454
        %1537 = vmatprep.subr.bf16.mxu0 %v1457
        %1538 = vmatpush1.bf16.msra.mxu0 %v1456
        %1539 = vmatprep.subr.bf16.mxu0 %v1459
        %1540 = vmatpush1.bf16.msra.mxu0 %v1458
        %1541 = vmatprep.subr.bf16.mxu0 %v1461
        %1542 = vmatpush1.bf16.msra.mxu0 %v1460
        %1543 = vmatprep.mubr.bf16.mxu0 %v466
        %1544 = vmatmul.mubr.bf16.gmra.mrb[0].mxu0 %v465
        %v1545 = vpop.f32.mrb[0].mxu0
        %v1546 = vadd.f32 0.0, %v1545
        %v1547 = vpop.f32.mrb[0].mxu0
        %v1548 = vadd.f32 0.0, %v1547
        %v1549 = vpop.f32.mrb[0].mxu0
        %v1550 = vadd.f32 0.0, %v1549
        %v1551 = vpop.f32.mrb[0].mxu0
        %v1552 = vadd.f32 0.0, %v1551
        %1553 = vmatprep.mubr.bf16.mxu0 %v468
        %1554 = vmatmul.mubr.bf16.gmra.mrb[0].mxu0 %v467
        %v1555 = vpop.f32.mrb[0].mxu0
        %v1556 = vadd.f32 0.0, %v1555
        %v1557 = vpop.f32.mrb[0].mxu0
        %v1558 = vadd.f32 0.0, %v1557
        %v1559 = vpop.f32.mrb[0].mxu0
        %v1560 = vadd.f32 0.0, %v1559
        %v1561 = vpop.f32.mrb[0].mxu0
        %v1562 = vadd.f32 0.0, %v1561
        %1563 = vmatprep.mubr.bf16.mxu0 %v470
        %1564 = vmatmul.mubr.bf16.gmra.mrb[0].mxu0 %v469
        %v1565 = vpop.f32.mrb[0].mxu0
        %v1566 = vadd.f32 0.0, %v1565
        %v1567 = vpop.f32.mrb[0].mxu0
        %v1568 = vadd.f32 0.0, %v1567
        %v1569 = vpop.f32.mrb[0].mxu0
        %v1570 = vadd.f32 0.0, %v1569
        %v1571 = vpop.f32.mrb[0].mxu0
        %v1572 = vadd.f32 0.0, %v1571
        %1573 = vmatprep.mubr.bf16.mxu0 %v472
        %1574 = vmatmul.mubr.bf16.gmra.mrb[0].mxu0 %v471
        %v1575 = vpop.f32.mrb[0].mxu0
        %v1576 = vadd.f32 0.0, %v1575
        %v1577 = vpop.f32.mrb[0].mxu0
        %v1578 = vadd.f32 0.0, %v1577
        %v1579 = vpop.f32.mrb[0].mxu0
        %v1580 = vadd.f32 0.0, %v1579
        %v1581 = vpop.f32.mrb[0].mxu0
        %v1582 = vadd.f32 0.0, %v1581
        %1583 = vmatprep.mubr.bf16.mxu0 %v474
        %1584 = vmatmul.mubr.bf16.gmra.mrb[0].mxu0 %v473
        %v1585 = vpop.f32.mrb[0].mxu0
        %v1586 = vadd.f32 0.0, %v1585
        %v1587 = vpop.f32.mrb[0].mxu0
        %v1588 = vadd.f32 0.0, %v1587
        %v1589 = vpop.f32.mrb[0].mxu0
        %v1590 = vadd.f32 0.0, %v1589
        %v1591 = vpop.f32.mrb[0].mxu0
        %v1592 = vadd.f32 0.0, %v1591
        %1593 = vmatprep.mubr.bf16.mxu0 %v476
        %1594 = vmatmul.mubr.bf16.gmra.mrb[0].mxu0 %v475
        %v1595 = vpop.f32.mrb[0].mxu0
        %v1596 = vadd.f32 0.0, %v1595
        %v1597 = vpop.f32.mrb[0].mxu0
        %v1598 = vadd.f32 0.0, %v1597
        %v1599 = vpop.f32.mrb[0].mxu0
        %v1600 = vadd.f32 0.0, %v1599
        %v1601 = vpop.f32.mrb[0].mxu0
        %v1602 = vadd.f32 0.0, %v1601
        %1603 = vmatprep.mubr.bf16.mxu0 %v478
        %1604 = vmatmul.mubr.bf16.gmra.mrb[0].mxu0 %v477
        %v1605 = vpop.f32.mrb[0].mxu0
        %v1606 = vadd.f32 0.0, %v1605
        %v1607 = vpop.f32.mrb[0].mxu0
        %v1608 = vadd.f32 0.0, %v1607
        %v1609 = vpop.f32.mrb[0].mxu0
        %v1610 = vadd.f32 0.0, %v1609
        %v1611 = vpop.f32.mrb[0].mxu0
        %v1612 = vadd.f32 0.0, %v1611
        %1613 = vmatprep.mubr.bf16.mxu0 %v480
        %1614 = vmatmul.mubr.bf16.gmra.mrb[0].mxu0 %v479
        %v1615 = vpop.f32.mrb[0].mxu0
        %v1616 = vadd.f32 0.0, %v1615
        %v1617 = vpop.f32.mrb[0].mxu0
        %v1618 = vadd.f32 0.0, %v1617
        %v1619 = vpop.f32.mrb[0].mxu0
        %v1620 = vadd.f32 0.0, %v1619
        %v1621 = vpop.f32.mrb[0].mxu0
        %v1622 = vadd.f32 0.0, %v1621
        %1623 = vdwg.mxu0
        %1624 = vmatprep.subr.bf16.mxu0 %v1480
        %1625 = vmatpush1.bf16.msra.mxu0 %v1479
        %1626 = vmatprep.subr.bf16.mxu0 %v1482
        %1627 = vmatpush1.bf16.msra.mxu0 %v1481
        %1628 = vmatprep.subr.bf16.mxu0 %v1484
        %1629 = vmatpush1.bf16.msra.mxu0 %v1483
        %1630 = vmatprep.subr.bf16.mxu0 %v1486
        %1631 = vmatpush1.bf16.msra.mxu0 %v1485
        %1632 = vmatprep.subr.bf16.mxu0 %v1488
        %1633 = vmatpush1.bf16.msra.mxu0 %v1487
        %1634 = vmatprep.subr.bf16.mxu0 %v1490
        %1635 = vmatpush1.bf16.msra.mxu0 %v1489
        %1636 = vmatprep.subr.bf16.mxu0 %v1492
        %1637 = vmatpush1.bf16.msra.mxu0 %v1491
        %1638 = vmatprep.subr.bf16.mxu0 %v1494
        %1639 = vmatpush1.bf16.msra.mxu0 %v1493
        %1640 = vmatprep.subr.bf16.mxu0 %v1496
        %1641 = vmatpush1.bf16.msra.mxu0 %v1495
        %1642 = vmatprep.subr.bf16.mxu0 %v1498
        %1643 = vmatpush1.bf16.msra.mxu0 %v1497
        %1644 = vmatprep.subr.bf16.mxu0 %v1500
        %1645 = vmatpush1.bf16.msra.mxu0 %v1499
        %1646 = vmatprep.subr.bf16.mxu0 %v1502
        %1647 = vmatpush1.bf16.msra.mxu0 %v1501
        %1648 = vmatprep.subr.bf16.mxu0 %v1504
        %1649 = vmatpush1.bf16.msra.mxu0 %v1503
        %1650 = vmatprep.subr.bf16.mxu0 %v1506
        %1651 = vmatpush1.bf16.msra.mxu0 %v1505
        %1652 = vmatprep.subr.bf16.mxu0 %v1508
        %1653 = vmatpush1.bf16.msra.mxu0 %v1507
        %1654 = vmatprep.subr.bf16.mxu0 %v1510
        %1655 = vmatpush1.bf16.msra.mxu0 %v1509
        %1656 = vmatprep.mubr.bf16.mxu0 %v659
        %1657 = vmatmul.mubr.bf16.gmra.mrb[0].mxu0 %v658
        %v1658 = vpop.f32.mrb[0].mxu0
        %v1659 = vadd.f32 0.0, %v1658
        %v1660 = vpop.f32.mrb[0].mxu0
        %v1661 = vadd.f32 0.0, %v1660
        %v1662 = vpop.f32.mrb[0].mxu0
        %v1663 = vadd.f32 0.0, %v1662
        %v1664 = vpop.f32.mrb[0].mxu0
        %v1665 = vadd.f32 0.0, %v1664
        %1666 = vmatprep.mubr.bf16.mxu0 %v661
        %1667 = vmatmul.mubr.bf16.gmra.mrb[0].mxu0 %v660
        %v1668 = vpop.f32.mrb[0].mxu0
        %v1669 = vadd.f32 0.0, %v1668
        %v1670 = vpop.f32.mrb[0].mxu0
        %v1671 = vadd.f32 0.0, %v1670
        %v1672 = vpop.f32.mrb[0].mxu0
        %v1673 = vadd.f32 0.0, %v1672
        %v1674 = vpop.f32.mrb[0].mxu0
        %v1675 = vadd.f32 0.0, %v1674
        %1676 = vmatprep.mubr.bf16.mxu0 %v663
        %1677 = vmatmul.mubr.bf16.gmra.mrb[0].mxu0 %v662
        %v1678 = vpop.f32.mrb[0].mxu0
        %v1679 = vadd.f32 0.0, %v1678
        %v1680 = vpop.f32.mrb[0].mxu0
        %v1681 = vadd.f32 0.0, %v1680
        %v1682 = vpop.f32.mrb[0].mxu0
        %v1683 = vadd.f32 0.0, %v1682
        %v1684 = vpop.f32.mrb[0].mxu0
        %v1685 = vadd.f32 0.0, %v1684
        %1686 = vmatprep.mubr.bf16.mxu0 %v665
        %1687 = vmatmul.mubr.bf16.gmra.mrb[0].mxu0 %v664
        %v1688 = vpop.f32.mrb[0].mxu0
        %v1689 = vadd.f32 0.0, %v1688
        %v1690 = vpop.f32.mrb[0].mxu0
        %v1691 = vadd.f32 0.0, %v1690
        %v1692 = vpop.f32.mrb[0].mxu0
        %v1693 = vadd.f32 0.0, %v1692
        %v1694 = vpop.f32.mrb[0].mxu0
        %v1695 = vadd.f32 0.0, %v1694
        %1696 = vmatprep.mubr.bf16.mxu0 %v667
        %1697 = vmatmul.mubr.bf16.gmra.mrb[0].mxu0 %v666
        %v1698 = vpop.f32.mrb[0].mxu0
        %v1699 = vadd.f32 0.0, %v1698
        %v1700 = vpop.f32.mrb[0].mxu0
        %v1701 = vadd.f32 0.0, %v1700
        %v1702 = vpop.f32.mrb[0].mxu0
        %v1703 = vadd.f32 0.0, %v1702
        %v1704 = vpop.f32.mrb[0].mxu0
        %v1705 = vadd.f32 0.0, %v1704
        %1706 = vmatprep.mubr.bf16.mxu0 %v669
        %1707 = vmatmul.mubr.bf16.gmra.mrb[0].mxu0 %v668
        %v1708 = vpop.f32.mrb[0].mxu0
        %v1709 = vadd.f32 0.0, %v1708
        %v1710 = vpop.f32.mrb[0].mxu0
        %v1711 = vadd.f32 0.0, %v1710
        %v1712 = vpop.f32.mrb[0].mxu0
        %v1713 = vadd.f32 0.0, %v1712
        %v1714 = vpop.f32.mrb[0].mxu0
        %v1715 = vadd.f32 0.0, %v1714
        %1716 = vmatprep.mubr.bf16.mxu0 %v671
        %1717 = vmatmul.mubr.bf16.gmra.mrb[0].mxu0 %v670
        %v1718 = vpop.f32.mrb[0].mxu0
        %v1719 = vadd.f32 0.0, %v1718
        %v1720 = vpop.f32.mrb[0].mxu0
        %v1721 = vadd.f32 0.0, %v1720
        %v1722 = vpop.f32.mrb[0].mxu0
        %v1723 = vadd.f32 0.0, %v1722
        %v1724 = vpop.f32.mrb[0].mxu0
        %v1725 = vadd.f32 0.0, %v1724
        %1726 = vmatprep.mubr.bf16.mxu0 %v673
        %1727 = vmatmul.mubr.bf16.gmra.mrb[0].mxu0 %v672
        %v1728 = vpop.f32.mrb[0].mxu0
        %v1729 = vadd.f32 0.0, %v1728
        %v1730 = vpop.f32.mrb[0].mxu0
        %v1731 = vadd.f32 0.0, %v1730
        %v1732 = vpop.f32.mrb[0].mxu0
        %v1733 = vadd.f32 0.0, %v1732
        %v1734 = vpop.f32.mrb[0].mxu0
        %v1735 = vadd.f32 0.0, %v1734
        %1736 = vdwg.mxu0
        %v1737 = vpack.c.bf16 %v1550, %v1546
        %v1738 = vpack.c.bf16 %v1552, %v1548
        %v1739 = vpack.c.bf16 %v1560, %v1556
        %v1740 = vpack.c.bf16 %v1562, %v1558
        %v1741 = vpack.c.bf16 %v1570, %v1566
        %v1742 = vpack.c.bf16 %v1572, %v1568
        %v1743 = vpack.c.bf16 %v1580, %v1576
        %v1744 = vpack.c.bf16 %v1582, %v1578
        %v1745 = vpack.c.bf16 %v1590, %v1586
        %v1746 = vpack.c.bf16 %v1592, %v1588
        %v1747 = vpack.c.bf16 %v1600, %v1596
        %v1748 = vpack.c.bf16 %v1602, %v1598
        %v1749 = vpack.c.bf16 %v1610, %v1606
        %v1750 = vpack.c.bf16 %v1612, %v1608
        %v1751 = vpack.c.bf16 %v1620, %v1616
        %v1752 = vpack.c.bf16 %v1622, %v1618
        %v1753 = vpack.c.bf16 %v1663, %v1659
        %v1754 = vpack.c.bf16 %v1665, %v1661
        %v1755 = vpack.c.bf16 %v1673, %v1669
        %v1756 = vpack.c.bf16 %v1675, %v1671
        %v1757 = vpack.c.bf16 %v1683, %v1679
        %v1758 = vpack.c.bf16 %v1685, %v1681
        %v1759 = vpack.c.bf16 %v1693, %v1689
        %v1760 = vpack.c.bf16 %v1695, %v1691
        %v1761 = vpack.c.bf16 %v1703, %v1699
        %v1762 = vpack.c.bf16 %v1705, %v1701
        %v1763 = vpack.c.bf16 %v1713, %v1709
        %v1764 = vpack.c.bf16 %v1715, %v1711
        %v1765 = vpack.c.bf16 %v1723, %v1719
        %v1766 = vpack.c.bf16 %v1725, %v1721
        %v1767 = vpack.c.bf16 %v1733, %v1729
        %v1768 = vpack.c.bf16 %v1735, %v1731
        %v1769 = vunpack.c.l.bf16 %v1737
        %v1770 = vunpack.c.l.bf16 %v1738
        %v1771 = vunpack.c.h.bf16 %v1737
        %v1772 = vunpack.c.h.bf16 %v1738
        %v1773 = vunpack.c.l.bf16 %v1739
        %v1774 = vunpack.c.l.bf16 %v1740
        %v1775 = vunpack.c.h.bf16 %v1739
        %v1776 = vunpack.c.h.bf16 %v1740
        %v1777 = vunpack.c.l.bf16 %v1741
        %v1778 = vunpack.c.l.bf16 %v1742
        %v1779 = vunpack.c.h.bf16 %v1741
        %v1780 = vunpack.c.h.bf16 %v1742
        %v1781 = vunpack.c.l.bf16 %v1743
        %v1782 = vunpack.c.l.bf16 %v1744
        %v1783 = vunpack.c.h.bf16 %v1743
        %v1784 = vunpack.c.h.bf16 %v1744
        %v1785 = vunpack.c.l.bf16 %v1745
        %v1786 = vunpack.c.l.bf16 %v1746
        %v1787 = vunpack.c.h.bf16 %v1745
        %v1788 = vunpack.c.h.bf16 %v1746
        %v1789 = vunpack.c.l.bf16 %v1747
        %v1790 = vunpack.c.l.bf16 %v1748
        %v1791 = vunpack.c.h.bf16 %v1747
        %v1792 = vunpack.c.h.bf16 %v1748
        %v1793 = vunpack.c.l.bf16 %v1749
        %v1794 = vunpack.c.l.bf16 %v1750
        %v1795 = vunpack.c.h.bf16 %v1749
        %v1796 = vunpack.c.h.bf16 %v1750
        %v1797 = vunpack.c.l.bf16 %v1751
        %v1798 = vunpack.c.l.bf16 %v1752
        %v1799 = vunpack.c.h.bf16 %v1751
        %v1800 = vunpack.c.h.bf16 %v1752
        %v1801 = vunpack.c.l.bf16 %v1753
        %v1802 = vunpack.c.l.bf16 %v1754
        %v1803 = vunpack.c.h.bf16 %v1753
        %v1804 = vunpack.c.h.bf16 %v1754
        %v1805 = vunpack.c.l.bf16 %v1755
        %v1806 = vunpack.c.l.bf16 %v1756
        %v1807 = vunpack.c.h.bf16 %v1755
        %v1808 = vunpack.c.h.bf16 %v1756
        %v1809 = vunpack.c.l.bf16 %v1757
        %v1810 = vunpack.c.l.bf16 %v1758
        %v1811 = vunpack.c.h.bf16 %v1757
        %v1812 = vunpack.c.h.bf16 %v1758
        %v1813 = vunpack.c.l.bf16 %v1759
        %v1814 = vunpack.c.l.bf16 %v1760
        %v1815 = vunpack.c.h.bf16 %v1759
        %v1816 = vunpack.c.h.bf16 %v1760
        %v1817 = vunpack.c.l.bf16 %v1761
        %v1818 = vunpack.c.l.bf16 %v1762
        %v1819 = vunpack.c.h.bf16 %v1761
        %v1820 = vunpack.c.h.bf16 %v1762
        %v1821 = vunpack.c.l.bf16 %v1763
        %v1822 = vunpack.c.l.bf16 %v1764
        %v1823 = vunpack.c.h.bf16 %v1763
        %v1824 = vunpack.c.h.bf16 %v1764
        %v1825 = vunpack.c.l.bf16 %v1765
        %v1826 = vunpack.c.l.bf16 %v1766
        %v1827 = vunpack.c.h.bf16 %v1765
        %v1828 = vunpack.c.h.bf16 %v1766
        %v1829 = vunpack.c.l.bf16 %v1767
        %v1830 = vunpack.c.l.bf16 %v1768
        %v1831 = vunpack.c.h.bf16 %v1767
        %v1832 = vunpack.c.h.bf16 %v1768
        %v1833 = vsub.f32 %v1546, %v1769
        %v1834 = vsub.f32 %v1548, %v1770
        %v1835 = vsub.f32 %v1550, %v1771
        %v1836 = vsub.f32 %v1552, %v1772
        %v1837 = vsub.f32 %v1556, %v1773
        %v1838 = vsub.f32 %v1558, %v1774
        %v1839 = vsub.f32 %v1560, %v1775
        %v1840 = vsub.f32 %v1562, %v1776
        %v1841 = vsub.f32 %v1566, %v1777
        %v1842 = vsub.f32 %v1568, %v1778
        %v1843 = vsub.f32 %v1570, %v1779
        %v1844 = vsub.f32 %v1572, %v1780
        %v1845 = vsub.f32 %v1576, %v1781
        %v1846 = vsub.f32 %v1578, %v1782
        %v1847 = vsub.f32 %v1580, %v1783
        %v1848 = vsub.f32 %v1582, %v1784
        %v1849 = vsub.f32 %v1586, %v1785
        %v1850 = vsub.f32 %v1588, %v1786
        %v1851 = vsub.f32 %v1590, %v1787
        %v1852 = vsub.f32 %v1592, %v1788
        %v1853 = vsub.f32 %v1596, %v1789
        %v1854 = vsub.f32 %v1598, %v1790
        %v1855 = vsub.f32 %v1600, %v1791
        %v1856 = vsub.f32 %v1602, %v1792
        %v1857 = vsub.f32 %v1606, %v1793
        %v1858 = vsub.f32 %v1608, %v1794
        %v1859 = vsub.f32 %v1610, %v1795
        %v1860 = vsub.f32 %v1612, %v1796
        %v1861 = vsub.f32 %v1616, %v1797
        %v1862 = vsub.f32 %v1618, %v1798
        %v1863 = vsub.f32 %v1620, %v1799
        %v1864 = vsub.f32 %v1622, %v1800
        %v1865 = vsub.f32 %v1659, %v1801
        %v1866 = vsub.f32 %v1661, %v1802
        %v1867 = vsub.f32 %v1663, %v1803
        %v1868 = vsub.f32 %v1665, %v1804
        %v1869 = vsub.f32 %v1669, %v1805
        %v1870 = vsub.f32 %v1671, %v1806
        %v1871 = vsub.f32 %v1673, %v1807
        %v1872 = vsub.f32 %v1675, %v1808
        %v1873 = vsub.f32 %v1679, %v1809
        %v1874 = vsub.f32 %v1681, %v1810
        %v1875 = vsub.f32 %v1683, %v1811
        %v1876 = vsub.f32 %v1685, %v1812
        %v1877 = vsub.f32 %v1689, %v1813
        %v1878 = vsub.f32 %v1691, %v1814
        %v1879 = vsub.f32 %v1693, %v1815
        %v1880 = vsub.f32 %v1695, %v1816
        %v1881 = vsub.f32 %v1699, %v1817
        %v1882 = vsub.f32 %v1701, %v1818
        %v1883 = vsub.f32 %v1703, %v1819
        %v1884 = vsub.f32 %v1705, %v1820
        %v1885 = vsub.f32 %v1709, %v1821
        %v1886 = vsub.f32 %v1711, %v1822
        %v1887 = vsub.f32 %v1713, %v1823
        %v1888 = vsub.f32 %v1715, %v1824
        %v1889 = vsub.f32 %v1719, %v1825
        %v1890 = vsub.f32 %v1721, %v1826
        %v1891 = vsub.f32 %v1723, %v1827
        %v1892 = vsub.f32 %v1725, %v1828
        %v1893 = vsub.f32 %v1729, %v1829
        %v1894 = vsub.f32 %v1731, %v1830
        %v1895 = vsub.f32 %v1733, %v1831
        %v1896 = vsub.f32 %v1735, %v1832
        %v1897 = vpack.c.bf16 %v1835, %v1833
        %v1898 = vpack.c.bf16 %v1836, %v1834
        %v1899 = vpack.c.bf16 %v1839, %v1837
        %v1900 = vpack.c.bf16 %v1840, %v1838
        %v1901 = vpack.c.bf16 %v1843, %v1841
        %v1902 = vpack.c.bf16 %v1844, %v1842
        %v1903 = vpack.c.bf16 %v1847, %v1845
        %v1904 = vpack.c.bf16 %v1848, %v1846
        %v1905 = vpack.c.bf16 %v1851, %v1849
        %v1906 = vpack.c.bf16 %v1852, %v1850
        %v1907 = vpack.c.bf16 %v1855, %v1853
        %v1908 = vpack.c.bf16 %v1856, %v1854
        %v1909 = vpack.c.bf16 %v1859, %v1857
        %v1910 = vpack.c.bf16 %v1860, %v1858
        %v1911 = vpack.c.bf16 %v1863, %v1861
        %v1912 = vpack.c.bf16 %v1864, %v1862
        %v1913 = vpack.c.bf16 %v1867, %v1865
        %v1914 = vpack.c.bf16 %v1868, %v1866
        %v1915 = vpack.c.bf16 %v1871, %v1869
        %v1916 = vpack.c.bf16 %v1872, %v1870
        %v1917 = vpack.c.bf16 %v1875, %v1873
        %v1918 = vpack.c.bf16 %v1876, %v1874
        %v1919 = vpack.c.bf16 %v1879, %v1877
        %v1920 = vpack.c.bf16 %v1880, %v1878
        %v1921 = vpack.c.bf16 %v1883, %v1881
        %v1922 = vpack.c.bf16 %v1884, %v1882
        %v1923 = vpack.c.bf16 %v1887, %v1885
        %v1924 = vpack.c.bf16 %v1888, %v1886
        %v1925 = vpack.c.bf16 %v1891, %v1889
        %v1926 = vpack.c.bf16 %v1892, %v1890
        %v1927 = vpack.c.bf16 %v1895, %v1893
        %v1928 = vpack.c.bf16 %v1896, %v1894
        %v1961 = vunpack.c.l.b16 %v288
        %v1962 = vunpack.c.l.b16 %v289
        %v1963 = vunpack.c.l.b16 %v290
        %v1964 = vunpack.c.l.b16 %v291
        %v1965 = vunpack.c.l.b16 %v292
        %v1966 = vunpack.c.l.b16 %v293
        %v1967 = vunpack.c.l.b16 %v294
        %v1968 = vunpack.c.l.b16 %v295
        %v1969 = vunpack.c.l.b16 %v296
        %v1970 = vunpack.c.l.b16 %v297
        %v1971 = vunpack.c.l.b16 %v298
        %v1972 = vunpack.c.l.b16 %v299
        %v1973 = vunpack.c.l.b16 %v300
        %v1974 = vunpack.c.l.b16 %v301
        %v1975 = vunpack.c.l.b16 %v302
        %v1976 = vunpack.c.l.b16 %v303
        %v1977 = vunpack.c.l.b16 %v304
        %v1978 = vunpack.c.l.b16 %v305
        %v1979 = vunpack.c.l.b16 %v306
        %v1980 = vunpack.c.l.b16 %v307
        %v1981 = vunpack.c.l.b16 %v308
        %v1982 = vunpack.c.l.b16 %v309
        %v1983 = vunpack.c.l.b16 %v310
        %v1984 = vunpack.c.l.b16 %v311
        %v1985 = vunpack.c.l.b16 %v312
        %v1986 = vunpack.c.l.b16 %v313
        %v1987 = vunpack.c.l.b16 %v314
        %v1988 = vunpack.c.l.b16 %v315
        %v1989 = vunpack.c.l.b16 %v316
        %v1990 = vunpack.c.l.b16 %v317
        %v1991 = vunpack.c.l.b16 %v318
        %v1992 = vunpack.c.l.b16 %v319
        %v1993 = vpack.c.b16 %v1962, %v1961
        %v1994 = vpack.c.b16 %v1964, %v1963
        %v1995 = vpack.c.b16 %v1966, %v1965
        %v1996 = vpack.c.b16 %v1968, %v1967
        %v1997 = vpack.c.b16 %v1970, %v1969
        %v1998 = vpack.c.b16 %v1972, %v1971
        %v1999 = vpack.c.b16 %v1974, %v1973
        %v2000 = vpack.c.b16 %v1976, %v1975
        %v2001 = vpack.c.b16 %v1978, %v1977
        %v2002 = vpack.c.b16 %v1980, %v1979
        %v2003 = vpack.c.b16 %v1982, %v1981
        %v2004 = vpack.c.b16 %v1984, %v1983
        %v2005 = vpack.c.b16 %v1986, %v1985
        %v2006 = vpack.c.b16 %v1988, %v1987
        %v2007 = vpack.c.b16 %v1990, %v1989
        %v2008 = vpack.c.b16 %v1992, %v1991
        %2025 = vmatprep.subr.bf16.mxu0 0
        %2026 = vmatpush1.bf16.msra.mxu0 %v1993
        %2027 = vmatprep.subr.bf16.mxu0 0
        %2028 = vmatpush1.bf16.msra.mxu0 %v1994
        %2029 = vmatprep.subr.bf16.mxu0 0
        %2030 = vmatpush1.bf16.msra.mxu0 %v1995
        %2031 = vmatprep.subr.bf16.mxu0 0
        %2032 = vmatpush1.bf16.msra.mxu0 %v1996
        %2033 = vmatprep.subr.bf16.mxu0 0
        %2034 = vmatpush1.bf16.msra.mxu0 %v1997
        %2035 = vmatprep.subr.bf16.mxu0 0
        %2036 = vmatpush1.bf16.msra.mxu0 %v1998
        %2037 = vmatprep.subr.bf16.mxu0 0
        %2038 = vmatpush1.bf16.msra.mxu0 %v1999
        %2039 = vmatprep.subr.bf16.mxu0 0
        %2040 = vmatpush1.bf16.msra.mxu0 %v2000
        %2041 = vmatprep.subr.bf16.mxu0 0
        %2042 = vmatpush1.bf16.msra.mxu0 %v2001
        %2043 = vmatprep.subr.bf16.mxu0 0
        %2044 = vmatpush1.bf16.msra.mxu0 %v2002
        %2045 = vmatprep.subr.bf16.mxu0 0
        %2046 = vmatpush1.bf16.msra.mxu0 %v2003
        %2047 = vmatprep.subr.bf16.mxu0 0
        %2048 = vmatpush1.bf16.msra.mxu0 %v2004
        %2049 = vmatprep.subr.bf16.mxu0 0
        %2050 = vmatpush1.bf16.msra.mxu0 %v2005
        %2051 = vmatprep.subr.bf16.mxu0 0
        %2052 = vmatpush1.bf16.msra.mxu0 %v2006
        %2053 = vmatprep.subr.bf16.mxu0 0
        %2054 = vmatpush1.bf16.msra.mxu0 %v2007
        %2055 = vmatprep.subr.bf16.mxu0 0
        %2056 = vmatpush1.bf16.msra.mxu0 %v2008
        %2057 = vmatprep.mubr.bf16.mxu0 %v1898
        %2058 = vmatmul.mubr.bf16.gmra.mrb[0].mxu0 %v1897
        %v2059 = vpop.f32.mrb[0].mxu0
        %v2060 = vadd.f32 0.0, %v2059
        %v2061 = vpop.f32.mrb[0].mxu0
        %v2062 = vpop.f32.mrb[0].mxu0
        %v2063 = vadd.f32 0.0, %v2062
        %v2064 = vpop.f32.mrb[0].mxu0
        %2065 = vmatprep.mubr.bf16.mxu0 %v1900
        %2066 = vmatmul.mubr.bf16.gmra.mrb[0].mxu0 %v1899
        %v2067 = vpop.f32.mrb[0].mxu0
        %v2068 = vadd.f32 0.0, %v2067
        %v2069 = vpop.f32.mrb[0].mxu0
        %v2070 = vpop.f32.mrb[0].mxu0
        %v2071 = vadd.f32 0.0, %v2070
        %v2072 = vpop.f32.mrb[0].mxu0
        %2073 = vmatprep.mubr.bf16.mxu0 %v1902
        %2074 = vmatmul.mubr.bf16.gmra.mrb[0].mxu0 %v1901
        %v2075 = vpop.f32.mrb[0].mxu0
        %v2076 = vadd.f32 0.0, %v2075
        %v2077 = vpop.f32.mrb[0].mxu0
        %v2078 = vpop.f32.mrb[0].mxu0
        %v2079 = vadd.f32 0.0, %v2078
        %v2080 = vpop.f32.mrb[0].mxu0
        %2081 = vmatprep.mubr.bf16.mxu0 %v1904
        %2082 = vmatmul.mubr.bf16.gmra.mrb[0].mxu0 %v1903
        %v2083 = vpop.f32.mrb[0].mxu0
        %v2084 = vadd.f32 0.0, %v2083
        %v2085 = vpop.f32.mrb[0].mxu0
        %v2086 = vpop.f32.mrb[0].mxu0
        %v2087 = vadd.f32 0.0, %v2086
        %v2088 = vpop.f32.mrb[0].mxu0
        %2089 = vmatprep.mubr.bf16.mxu0 %v1906
        %2090 = vmatmul.mubr.bf16.gmra.mrb[0].mxu0 %v1905
        %v2091 = vpop.f32.mrb[0].mxu0
        %v2092 = vadd.f32 0.0, %v2091
        %v2093 = vpop.f32.mrb[0].mxu0
        %v2094 = vpop.f32.mrb[0].mxu0
        %v2095 = vadd.f32 0.0, %v2094
        %v2096 = vpop.f32.mrb[0].mxu0
        %2097 = vmatprep.mubr.bf16.mxu0 %v1908
        %2098 = vmatmul.mubr.bf16.gmra.mrb[0].mxu0 %v1907
        %v2099 = vpop.f32.mrb[0].mxu0
        %v2100 = vadd.f32 0.0, %v2099
        %v2101 = vpop.f32.mrb[0].mxu0
        %v2102 = vpop.f32.mrb[0].mxu0
        %v2103 = vadd.f32 0.0, %v2102
        %v2104 = vpop.f32.mrb[0].mxu0
        %2105 = vmatprep.mubr.bf16.mxu0 %v1910
        %2106 = vmatmul.mubr.bf16.gmra.mrb[0].mxu0 %v1909
        %v2107 = vpop.f32.mrb[0].mxu0
        %v2108 = vadd.f32 0.0, %v2107
        %v2109 = vpop.f32.mrb[0].mxu0
        %v2110 = vpop.f32.mrb[0].mxu0
        %v2111 = vadd.f32 0.0, %v2110
        %v2112 = vpop.f32.mrb[0].mxu0
        %2113 = vmatprep.mubr.bf16.mxu0 %v1912
        %2114 = vmatmul.mubr.bf16.gmra.mrb[0].mxu0 %v1911
        %v2115 = vpop.f32.mrb[0].mxu0
        %v2116 = vadd.f32 0.0, %v2115
        %v2117 = vpop.f32.mrb[0].mxu0
        %v2118 = vpop.f32.mrb[0].mxu0
        %v2119 = vadd.f32 0.0, %v2118
        %v2120 = vpop.f32.mrb[0].mxu0
        %2121 = vmatprep.mubr.bf16.mxu0 %v1914
        %2122 = vmatmul.mubr.bf16.gmra.mrb[0].mxu0 %v1913
        %v2123 = vpop.f32.mrb[0].mxu0
        %v2124 = vadd.f32 0.0, %v2123
        %v2125 = vpop.f32.mrb[0].mxu0
        %v2126 = vpop.f32.mrb[0].mxu0
        %v2127 = vadd.f32 0.0, %v2126
        %v2128 = vpop.f32.mrb[0].mxu0
        %2129 = vmatprep.mubr.bf16.mxu0 %v1916
        %2130 = vmatmul.mubr.bf16.gmra.mrb[0].mxu0 %v1915
        %v2131 = vpop.f32.mrb[0].mxu0
        %v2132 = vadd.f32 0.0, %v2131
        %v2133 = vpop.f32.mrb[0].mxu0
        %v2134 = vpop.f32.mrb[0].mxu0
        %v2135 = vadd.f32 0.0, %v2134
        %v2136 = vpop.f32.mrb[0].mxu0
        %2137 = vmatprep.mubr.bf16.mxu0 %v1918
        %2138 = vmatmul.mubr.bf16.gmra.mrb[0].mxu0 %v1917
        %v2139 = vpop.f32.mrb[0].mxu0
        %v2140 = vadd.f32 0.0, %v2139
        %v2141 = vpop.f32.mrb[0].mxu0
        %v2142 = vpop.f32.mrb[0].mxu0
        %v2143 = vadd.f32 0.0, %v2142
        %v2144 = vpop.f32.mrb[0].mxu0
        %2145 = vmatprep.mubr.bf16.mxu0 %v1920
        %2146 = vmatmul.mubr.bf16.gmra.mrb[0].mxu0 %v1919
        %v2147 = vpop.f32.mrb[0].mxu0
        %v2148 = vadd.f32 0.0, %v2147
        %v2149 = vpop.f32.mrb[0].mxu0
        %v2150 = vpop.f32.mrb[0].mxu0
        %v2151 = vadd.f32 0.0, %v2150
        %v2152 = vpop.f32.mrb[0].mxu0
        %2153 = vmatprep.mubr.bf16.mxu0 %v1922
        %2154 = vmatmul.mubr.bf16.gmra.mrb[0].mxu0 %v1921
        %v2155 = vpop.f32.mrb[0].mxu0
        %v2156 = vadd.f32 0.0, %v2155
        %v2157 = vpop.f32.mrb[0].mxu0
        %v2158 = vpop.f32.mrb[0].mxu0
        %v2159 = vadd.f32 0.0, %v2158
        %v2160 = vpop.f32.mrb[0].mxu0
        %2161 = vmatprep.mubr.bf16.mxu0 %v1924
        %2162 = vmatmul.mubr.bf16.gmra.mrb[0].mxu0 %v1923
        %v2163 = vpop.f32.mrb[0].mxu0
        %v2164 = vadd.f32 0.0, %v2163
        %v2165 = vpop.f32.mrb[0].mxu0
        %v2166 = vpop.f32.mrb[0].mxu0
        %v2167 = vadd.f32 0.0, %v2166
        %v2168 = vpop.f32.mrb[0].mxu0
        %2169 = vmatprep.mubr.bf16.mxu0 %v1926
        %2170 = vmatmul.mubr.bf16.gmra.mrb[0].mxu0 %v1925
        %v2171 = vpop.f32.mrb[0].mxu0
        %v2172 = vadd.f32 0.0, %v2171
        %v2173 = vpop.f32.mrb[0].mxu0
        %v2174 = vpop.f32.mrb[0].mxu0
        %v2175 = vadd.f32 0.0, %v2174
        %v2176 = vpop.f32.mrb[0].mxu0
        %2177 = vmatprep.mubr.bf16.mxu0 %v1928
        %2178 = vmatmul.mubr.bf16.gmra.mrb[0].mxu0 %v1927
        %v2179 = vpop.f32.mrb[0].mxu0
        %v2180 = vadd.f32 0.0, %v2179
        %v2181 = vpop.f32.mrb[0].mxu0
        %v2182 = vpop.f32.mrb[0].mxu0
        %v2183 = vadd.f32 0.0, %v2182
        %v2184 = vpop.f32.mrb[0].mxu0
        %2185 = vdwg.mxu0
        %2186 = vmatprep.subr.bf16.mxu0 0
        %2187 = vmatpush1.bf16.msra.mxu0 %v1993
        %2188 = vmatprep.subr.bf16.mxu0 0
        %2189 = vmatpush1.bf16.msra.mxu0 %v1994
        %2190 = vmatprep.subr.bf16.mxu0 0
        %2191 = vmatpush1.bf16.msra.mxu0 %v1995
        %2192 = vmatprep.subr.bf16.mxu0 0
        %2193 = vmatpush1.bf16.msra.mxu0 %v1996
        %2194 = vmatprep.subr.bf16.mxu0 0
        %2195 = vmatpush1.bf16.msra.mxu0 %v1997
        %2196 = vmatprep.subr.bf16.mxu0 0
        %2197 = vmatpush1.bf16.msra.mxu0 %v1998
        %2198 = vmatprep.subr.bf16.mxu0 0
        %2199 = vmatpush1.bf16.msra.mxu0 %v1999
        %2200 = vmatprep.subr.bf16.mxu0 0
        %2201 = vmatpush1.bf16.msra.mxu0 %v2000
        %2202 = vmatprep.subr.bf16.mxu0 0
        %2203 = vmatpush1.bf16.msra.mxu0 %v2001
        %2204 = vmatprep.subr.bf16.mxu0 0
        %2205 = vmatpush1.bf16.msra.mxu0 %v2002
        %2206 = vmatprep.subr.bf16.mxu0 0
        %2207 = vmatpush1.bf16.msra.mxu0 %v2003
        %2208 = vmatprep.subr.bf16.mxu0 0
        %2209 = vmatpush1.bf16.msra.mxu0 %v2004
        %2210 = vmatprep.subr.bf16.mxu0 0
        %2211 = vmatpush1.bf16.msra.mxu0 %v2005
        %2212 = vmatprep.subr.bf16.mxu0 0
        %2213 = vmatpush1.bf16.msra.mxu0 %v2006
        %2214 = vmatprep.subr.bf16.mxu0 0
        %2215 = vmatpush1.bf16.msra.mxu0 %v2007
        %2216 = vmatprep.subr.bf16.mxu0 0
        %2217 = vmatpush1.bf16.msra.mxu0 %v2008
        %2218 = vmatprep.mubr.bf16.mxu0 %v1738
        %2219 = vmatmul.mubr.bf16.gmra.mrb[0].mxu0 %v1737
        %v2220 = vpop.f32.mrb[0].mxu0
        %v2221 = vadd.f32 %v2060, %v2220
        %v2222 = vpop.f32.mrb[0].mxu0
        %v2223 = vpop.f32.mrb[0].mxu0
        %v2224 = vadd.f32 %v2063, %v2223
        %v2225 = vpop.f32.mrb[0].mxu0
        %2226 = vmatprep.mubr.bf16.mxu0 %v1740
        %2227 = vmatmul.mubr.bf16.gmra.mrb[0].mxu0 %v1739
        %v2228 = vpop.f32.mrb[0].mxu0
        %v2229 = vadd.f32 %v2068, %v2228
        %v2230 = vpop.f32.mrb[0].mxu0
        %v2231 = vpop.f32.mrb[0].mxu0
        %v2232 = vadd.f32 %v2071, %v2231
        %v2233 = vpop.f32.mrb[0].mxu0
        %2234 = vmatprep.mubr.bf16.mxu0 %v1742
        %2235 = vmatmul.mubr.bf16.gmra.mrb[0].mxu0 %v1741
        %v2236 = vpop.f32.mrb[0].mxu0
        %v2237 = vadd.f32 %v2076, %v2236
        %v2238 = vpop.f32.mrb[0].mxu0
        %v2239 = vpop.f32.mrb[0].mxu0
        %v2240 = vadd.f32 %v2079, %v2239
        %v2241 = vpop.f32.mrb[0].mxu0
        %2242 = vmatprep.mubr.bf16.mxu0 %v1744
        %2243 = vmatmul.mubr.bf16.gmra.mrb[0].mxu0 %v1743
        %v2244 = vpop.f32.mrb[0].mxu0
        %v2245 = vadd.f32 %v2084, %v2244
        %v2246 = vpop.f32.mrb[0].mxu0
        %v2247 = vpop.f32.mrb[0].mxu0
        %v2248 = vadd.f32 %v2087, %v2247
        %v2249 = vpop.f32.mrb[0].mxu0
        %2250 = vmatprep.mubr.bf16.mxu0 %v1746
        %2251 = vmatmul.mubr.bf16.gmra.mrb[0].mxu0 %v1745
        %v2252 = vpop.f32.mrb[0].mxu0
        %v2253 = vadd.f32 %v2092, %v2252
        %v2254 = vpop.f32.mrb[0].mxu0
        %v2255 = vpop.f32.mrb[0].mxu0
        %v2256 = vadd.f32 %v2095, %v2255
        %v2257 = vpop.f32.mrb[0].mxu0
        %2258 = vmatprep.mubr.bf16.mxu0 %v1748
        %2259 = vmatmul.mubr.bf16.gmra.mrb[0].mxu0 %v1747
        %v2260 = vpop.f32.mrb[0].mxu0
        %v2261 = vadd.f32 %v2100, %v2260
        %v2262 = vpop.f32.mrb[0].mxu0
        %v2263 = vpop.f32.mrb[0].mxu0
        %v2264 = vadd.f32 %v2103, %v2263
        %v2265 = vpop.f32.mrb[0].mxu0
        %2266 = vmatprep.mubr.bf16.mxu0 %v1750
        %2267 = vmatmul.mubr.bf16.gmra.mrb[0].mxu0 %v1749
        %v2268 = vpop.f32.mrb[0].mxu0
        %v2269 = vadd.f32 %v2108, %v2268
        %v2270 = vpop.f32.mrb[0].mxu0
        %v2271 = vpop.f32.mrb[0].mxu0
        %v2272 = vadd.f32 %v2111, %v2271
        %v2273 = vpop.f32.mrb[0].mxu0
        %2274 = vmatprep.mubr.bf16.mxu0 %v1752
        %2275 = vmatmul.mubr.bf16.gmra.mrb[0].mxu0 %v1751
        %v2276 = vpop.f32.mrb[0].mxu0
        %v2277 = vadd.f32 %v2116, %v2276
        %v2278 = vpop.f32.mrb[0].mxu0
        %v2279 = vpop.f32.mrb[0].mxu0
        %v2280 = vadd.f32 %v2119, %v2279
        %v2281 = vpop.f32.mrb[0].mxu0
        %2282 = vmatprep.mubr.bf16.mxu0 %v1754
        %2283 = vmatmul.mubr.bf16.gmra.mrb[0].mxu0 %v1753
        %v2284 = vpop.f32.mrb[0].mxu0
        %v2285 = vadd.f32 %v2124, %v2284
        %v2286 = vpop.f32.mrb[0].mxu0
        %v2287 = vpop.f32.mrb[0].mxu0
        %v2288 = vadd.f32 %v2127, %v2287
        %v2289 = vpop.f32.mrb[0].mxu0
        %2290 = vmatprep.mubr.bf16.mxu0 %v1756
        %2291 = vmatmul.mubr.bf16.gmra.mrb[0].mxu0 %v1755
        %v2292 = vpop.f32.mrb[0].mxu0
        %v2293 = vadd.f32 %v2132, %v2292
        %v2294 = vpop.f32.mrb[0].mxu0
        %v2295 = vpop.f32.mrb[0].mxu0
        %v2296 = vadd.f32 %v2135, %v2295
        %v2297 = vpop.f32.mrb[0].mxu0
        %2298 = vmatprep.mubr.bf16.mxu0 %v1758
        %2299 = vmatmul.mubr.bf16.gmra.mrb[0].mxu0 %v1757
        %v2300 = vpop.f32.mrb[0].mxu0
        %v2301 = vadd.f32 %v2140, %v2300
        %v2302 = vpop.f32.mrb[0].mxu0
        %v2303 = vpop.f32.mrb[0].mxu0
        %v2304 = vadd.f32 %v2143, %v2303
        %v2305 = vpop.f32.mrb[0].mxu0
        %2306 = vmatprep.mubr.bf16.mxu0 %v1760
        %2307 = vmatmul.mubr.bf16.gmra.mrb[0].mxu0 %v1759
        %v2308 = vpop.f32.mrb[0].mxu0
        %v2309 = vadd.f32 %v2148, %v2308
        %v2310 = vpop.f32.mrb[0].mxu0
        %v2311 = vpop.f32.mrb[0].mxu0
        %v2312 = vadd.f32 %v2151, %v2311
        %v2313 = vpop.f32.mrb[0].mxu0
        %2314 = vmatprep.mubr.bf16.mxu0 %v1762
        %2315 = vmatmul.mubr.bf16.gmra.mrb[0].mxu0 %v1761
        %v2316 = vpop.f32.mrb[0].mxu0
        %v2317 = vadd.f32 %v2156, %v2316
        %v2318 = vpop.f32.mrb[0].mxu0
        %v2319 = vpop.f32.mrb[0].mxu0
        %v2320 = vadd.f32 %v2159, %v2319
        %v2321 = vpop.f32.mrb[0].mxu0
        %2322 = vmatprep.mubr.bf16.mxu0 %v1764
        %2323 = vmatmul.mubr.bf16.gmra.mrb[0].mxu0 %v1763
        %v2324 = vpop.f32.mrb[0].mxu0
        %v2325 = vadd.f32 %v2164, %v2324
        %v2326 = vpop.f32.mrb[0].mxu0
        %v2327 = vpop.f32.mrb[0].mxu0
        %v2328 = vadd.f32 %v2167, %v2327
        %v2329 = vpop.f32.mrb[0].mxu0
        %2330 = vmatprep.mubr.bf16.mxu0 %v1766
        %2331 = vmatmul.mubr.bf16.gmra.mrb[0].mxu0 %v1765
        %v2332 = vpop.f32.mrb[0].mxu0
        %v2333 = vadd.f32 %v2172, %v2332
        %v2334 = vpop.f32.mrb[0].mxu0
        %v2335 = vpop.f32.mrb[0].mxu0
        %v2336 = vadd.f32 %v2175, %v2335
        %v2337 = vpop.f32.mrb[0].mxu0
        %2338 = vmatprep.mubr.bf16.mxu0 %v1768
        %2339 = vmatmul.mubr.bf16.gmra.mrb[0].mxu0 %v1767
        %v2340 = vpop.f32.mrb[0].mxu0
        %v2341 = vadd.f32 %v2180, %v2340
        %v2342 = vpop.f32.mrb[0].mxu0
        %v2343 = vpop.f32.mrb[0].mxu0
        %v2344 = vadd.f32 %v2183, %v2343
        %v2345 = vpop.f32.mrb[0].mxu0
        %2346 = vdwg.mxu0
        %v2347 = vtrunc.f32 %v1287
        %v2348 = vtrunc.f32 %v2221
        %v2349 = vtrunc.f32 %v1290
        %v2350 = vtrunc.f32 %v2224
        %v2351 = vtrunc.f32 %v1295
        %v2352 = vtrunc.f32 %v2229
        %v2353 = vtrunc.f32 %v1298
        %v2354 = vtrunc.f32 %v2232
        %v2355 = vtrunc.f32 %v1303
        %v2356 = vtrunc.f32 %v2237
        %v2357 = vtrunc.f32 %v1306
        %v2358 = vtrunc.f32 %v2240
        %v2359 = vtrunc.f32 %v1311
        %v2360 = vtrunc.f32 %v2245
        %v2361 = vtrunc.f32 %v1314
        %v2362 = vtrunc.f32 %v2248
        %v2363 = vtrunc.f32 %v1319
        %v2364 = vtrunc.f32 %v2253
        %v2365 = vtrunc.f32 %v1322
        %v2366 = vtrunc.f32 %v2256
        %v2367 = vtrunc.f32 %v1327
        %v2368 = vtrunc.f32 %v2261
        %v2369 = vtrunc.f32 %v1330
        %v2370 = vtrunc.f32 %v2264
        %v2371 = vtrunc.f32 %v1335
        %v2372 = vtrunc.f32 %v2269
        %v2373 = vtrunc.f32 %v1338
        %v2374 = vtrunc.f32 %v2272
        %v2375 = vtrunc.f32 %v1343
        %v2376 = vtrunc.f32 %v2277
        %v2377 = vtrunc.f32 %v1346
        %v2378 = vtrunc.f32 %v2280
        %v2379 = vtrunc.f32 %v1351
        %v2380 = vtrunc.f32 %v2285
        %v2381 = vtrunc.f32 %v1354
        %v2382 = vtrunc.f32 %v2288
        %v2383 = vtrunc.f32 %v1359
        %v2384 = vtrunc.f32 %v2293
        %v2385 = vtrunc.f32 %v1362
        %v2386 = vtrunc.f32 %v2296
        %v2387 = vtrunc.f32 %v1367
        %v2388 = vtrunc.f32 %v2301
        %v2389 = vtrunc.f32 %v1370
        %v2390 = vtrunc.f32 %v2304
        %v2391 = vtrunc.f32 %v1375
        %v2392 = vtrunc.f32 %v2309
        %v2393 = vtrunc.f32 %v1378
        %v2394 = vtrunc.f32 %v2312
        %v2395 = vtrunc.f32 %v1383
        %v2396 = vtrunc.f32 %v2317
        %v2397 = vtrunc.f32 %v1386
        %v2398 = vtrunc.f32 %v2320
        %v2399 = vtrunc.f32 %v1391
        %v2400 = vtrunc.f32 %v2325
        %v2401 = vtrunc.f32 %v1394
        %v2402 = vtrunc.f32 %v2328
        %v2403 = vtrunc.f32 %v1399
        %v2404 = vtrunc.f32 %v2333
        %v2405 = vtrunc.f32 %v1402
        %v2406 = vtrunc.f32 %v2336
        %v2407 = vtrunc.f32 %v1407
        %v2408 = vtrunc.f32 %v2341
        %v2409 = vtrunc.f32 %v1410
        %v2410 = vtrunc.f32 %v2344
        %v2411 = vpack.c.f32.eXmY %v2347, %v2349, 56
        %v2415 = vpack.c.f32.eXmY %v2351, %v2353, 56
        %v2419 = vpack.c.b8 %v2415, %v2411
        %v2421 = vpack.c.f32.eXmY %v2348, %v2350, 56
        %v2425 = vpack.c.f32.eXmY %v2352, %v2354, 56
        %v2429 = vpack.c.b8 %v2425, %v2421
        %v2431 = vpack.c.f32.eXmY %v2355, %v2357, 56
        %v2435 = vpack.c.f32.eXmY %v2359, %v2361, 56
        %v2439 = vpack.c.b8 %v2435, %v2431
        %v2441 = vpack.c.f32.eXmY %v2356, %v2358, 56
        %v2445 = vpack.c.f32.eXmY %v2360, %v2362, 56
        %v2449 = vpack.c.b8 %v2445, %v2441
        %v2451 = vpack.c.f32.eXmY %v2363, %v2365, 56
        %v2455 = vpack.c.f32.eXmY %v2367, %v2369, 56
        %v2459 = vpack.c.b8 %v2455, %v2451
        %v2461 = vpack.c.f32.eXmY %v2364, %v2366, 56
        %v2465 = vpack.c.f32.eXmY %v2368, %v2370, 56
        %v2469 = vpack.c.b8 %v2465, %v2461
        %v2471 = vpack.c.f32.eXmY %v2371, %v2373, 56
        %v2475 = vpack.c.f32.eXmY %v2375, %v2377, 56
        %v2479 = vpack.c.b8 %v2475, %v2471
        %v2481 = vpack.c.f32.eXmY %v2372, %v2374, 56
        %v2485 = vpack.c.f32.eXmY %v2376, %v2378, 56
        %v2489 = vpack.c.b8 %v2485, %v2481
        %v2491 = vpack.c.f32.eXmY %v2379, %v2381, 56
        %v2495 = vpack.c.f32.eXmY %v2383, %v2385, 56
        %v2499 = vpack.c.b8 %v2495, %v2491
        %v2501 = vpack.c.f32.eXmY %v2380, %v2382, 56
        %v2505 = vpack.c.f32.eXmY %v2384, %v2386, 56
        %v2509 = vpack.c.b8 %v2505, %v2501
        %v2511 = vpack.c.f32.eXmY %v2387, %v2389, 56
        %v2515 = vpack.c.f32.eXmY %v2391, %v2393, 56
        %v2519 = vpack.c.b8 %v2515, %v2511
        %v2521 = vpack.c.f32.eXmY %v2388, %v2390, 56
        %v2525 = vpack.c.f32.eXmY %v2392, %v2394, 56
        %v2529 = vpack.c.b8 %v2525, %v2521
        %v2531 = vpack.c.f32.eXmY %v2395, %v2397, 56
        %v2535 = vpack.c.f32.eXmY %v2399, %v2401, 56
        %v2539 = vpack.c.b8 %v2535, %v2531
        %v2541 = vpack.c.f32.eXmY %v2396, %v2398, 56
        %v2545 = vpack.c.f32.eXmY %v2400, %v2402, 56
        %v2549 = vpack.c.b8 %v2545, %v2541
        %v2551 = vpack.c.f32.eXmY %v2403, %v2405, 56
        %v2555 = vpack.c.f32.eXmY %v2407, %v2409, 56
        %v2559 = vpack.c.b8 %v2555, %v2551
        %v2561 = vpack.c.f32.eXmY %v2404, %v2406, 56
        %v2565 = vpack.c.f32.eXmY %v2408, %v2410, 56
        %v2569 = vpack.c.b8 %v2565, %v2561
        %2571 = vst [vmem:[%s218] sm:$0xff] %v2419
        %2572 = vst [vmem:[%s218 + $0x8] sm:$0xff] %v2429
        %2573 = vst [vmem:[%s218 + $0x10] sm:$0xff] %v2439
        %2574 = vst [vmem:[%s218 + $0x18] sm:$0xff] %v2449
        %2575 = vst [vmem:[%s218 + $0x20] sm:$0xff] %v2459
        %2576 = vst [vmem:[%s218 + $0x28] sm:$0xff] %v2469
        %2577 = vst [vmem:[%s218 + $0x30] sm:$0xff] %v2479
        %2578 = vst [vmem:[%s218 + $0x38] sm:$0xff] %v2489
        %2579 = vst [vmem:[%s218 + $0x40] sm:$0xff] %v2499
        %2580 = vst [vmem:[%s218 + $0x48] sm:$0xff] %v2509
        %2581 = vst [vmem:[%s218 + $0x50] sm:$0xff] %v2519
        %2582 = vst [vmem:[%s218 + $0x58] sm:$0xff] %v2529
        %2583 = vst [vmem:[%s218 + $0x60] sm:$0xff] %v2539
        %2584 = vst [vmem:[%s218 + $0x68] sm:$0xff] %v2549
        %2585 = vst [vmem:[%s218 + $0x70] sm:$0xff] %v2559
        %2586 = vst [vmem:[%s218 + $0x78] sm:$0xff] %v2569
        %s2587 = scalar_lea.vmem %s188, 512 [#allocation2]
        %v2588 = vld [vmem:[%s2587] sm:$0xff]
        %v2589 = vld [vmem:[%s2587 + $0x8] sm:$0xff]
        %v2590 = vld [vmem:[%s2587 + $0x10] sm:$0xff]
        %v2591 = vld [vmem:[%s2587 + $0x18] sm:$0xff]
        %v2592 = vld [vmem:[%s2587 + $0x20] sm:$0xff]
        %v2593 = vld [vmem:[%s2587 + $0x28] sm:$0xff]
        %v2594 = vld [vmem:[%s2587 + $0x30] sm:$0xff]
        %v2595 = vld [vmem:[%s2587 + $0x38] sm:$0xff]
        %v2596 = vld [vmem:[%s2587 + $0x40] sm:$0xff]
        %v2597 = vld [vmem:[%s2587 + $0x48] sm:$0xff]
        %v2598 = vld [vmem:[%s2587 + $0x50] sm:$0xff]
        %v2599 = vld [vmem:[%s2587 + $0x58] sm:$0xff]
        %v2600 = vld [vmem:[%s2587 + $0x60] sm:$0xff]
        %v2601 = vld [vmem:[%s2587 + $0x68] sm:$0xff]
        %v2602 = vld [vmem:[%s2587 + $0x70] sm:$0xff]
        %v2603 = vld [vmem:[%s2587 + $0x78] sm:$0xff]
        %v2604 = vunpack.c.l.u8.bf16 %v2588
        %v2605 = vunpack.c.l.u8.bf16 %v2589
        %v2606 = vunpack.c.h.u8.bf16 %v2588
        %v2607 = vunpack.c.h.u8.bf16 %v2589
        %v2608 = vunpack.c.l.u8.bf16 %v2590
        %v2609 = vunpack.c.l.u8.bf16 %v2591
        %v2610 = vunpack.c.h.u8.bf16 %v2590
        %v2611 = vunpack.c.h.u8.bf16 %v2591
        %v2612 = vunpack.c.l.u8.bf16 %v2592
        %v2613 = vunpack.c.l.u8.bf16 %v2593
        %v2614 = vunpack.c.h.u8.bf16 %v2592
        %v2615 = vunpack.c.h.u8.bf16 %v2593
        %v2616 = vunpack.c.l.u8.bf16 %v2594
        %v2617 = vunpack.c.l.u8.bf16 %v2595
        %v2618 = vunpack.c.h.u8.bf16 %v2594
        %v2619 = vunpack.c.h.u8.bf16 %v2595
        %v2620 = vunpack.c.l.u8.bf16 %v2596
        %v2621 = vunpack.c.l.u8.bf16 %v2597
        %v2622 = vunpack.c.h.u8.bf16 %v2596
        %v2623 = vunpack.c.h.u8.bf16 %v2597
        %v2624 = vunpack.c.l.u8.bf16 %v2598
        %v2625 = vunpack.c.l.u8.bf16 %v2599
        %v2626 = vunpack.c.h.u8.bf16 %v2598
        %v2627 = vunpack.c.h.u8.bf16 %v2599
        %v2628 = vunpack.c.l.u8.bf16 %v2600
        %v2629 = vunpack.c.l.u8.bf16 %v2601
        %v2630 = vunpack.c.h.u8.bf16 %v2600
        %v2631 = vunpack.c.h.u8.bf16 %v2601
        %v2632 = vunpack.c.l.u8.bf16 %v2602
        %v2633 = vunpack.c.l.u8.bf16 %v2603
        %v2634 = vunpack.c.h.u8.bf16 %v2602
        %v2635 = vunpack.c.h.u8.bf16 %v2603
        %s2636 = scalar_lea.vmem %s188, 768 [#allocation2]
        %v2637 = vld [vmem:[%s2636] sm:$0xff]
        %v2638 = vld [vmem:[%s2636 + $0x8] sm:$0xff]
        %v2639 = vld [vmem:[%s2636 + $0x10] sm:$0xff]
        %v2640 = vld [vmem:[%s2636 + $0x18] sm:$0xff]
        %v2641 = vld [vmem:[%s2636 + $0x20] sm:$0xff]
        %v2642 = vld [vmem:[%s2636 + $0x28] sm:$0xff]
        %v2643 = vld [vmem:[%s2636 + $0x30] sm:$0xff]
        %v2644 = vld [vmem:[%s2636 + $0x38] sm:$0xff]
        %v2645 = vld [vmem:[%s2636 + $0x40] sm:$0xff]
        %v2646 = vld [vmem:[%s2636 + $0x48] sm:$0xff]
        %v2647 = vld [vmem:[%s2636 + $0x50] sm:$0xff]
        %v2648 = vld [vmem:[%s2636 + $0x58] sm:$0xff]
        %v2649 = vld [vmem:[%s2636 + $0x60] sm:$0xff]
        %v2650 = vld [vmem:[%s2636 + $0x68] sm:$0xff]
        %v2651 = vld [vmem:[%s2636 + $0x70] sm:$0xff]
        %v2652 = vld [vmem:[%s2636 + $0x78] sm:$0xff]
        %v2653 = vunpack.c.l.u8.bf16 %v2637
        %v2654 = vunpack.c.l.u8.bf16 %v2638
        %v2655 = vunpack.c.h.u8.bf16 %v2637
        %v2656 = vunpack.c.h.u8.bf16 %v2638
        %v2657 = vunpack.c.l.u8.bf16 %v2639
        %v2658 = vunpack.c.l.u8.bf16 %v2640
        %v2659 = vunpack.c.h.u8.bf16 %v2639
        %v2660 = vunpack.c.h.u8.bf16 %v2640
        %v2661 = vunpack.c.l.u8.bf16 %v2641
        %v2662 = vunpack.c.l.u8.bf16 %v2642
        %v2663 = vunpack.c.h.u8.bf16 %v2641
        %v2664 = vunpack.c.h.u8.bf16 %v2642
        %v2665 = vunpack.c.l.u8.bf16 %v2643
        %v2666 = vunpack.c.l.u8.bf16 %v2644
        %v2667 = vunpack.c.h.u8.bf16 %v2643
        %v2668 = vunpack.c.h.u8.bf16 %v2644
        %v2669 = vunpack.c.l.u8.bf16 %v2645
        %v2670 = vunpack.c.l.u8.bf16 %v2646
        %v2671 = vunpack.c.h.u8.bf16 %v2645
        %v2672 = vunpack.c.h.u8.bf16 %v2646
        %v2673 = vunpack.c.l.u8.bf16 %v2647
        %v2674 = vunpack.c.l.u8.bf16 %v2648
        %v2675 = vunpack.c.h.u8.bf16 %v2647
        %v2676 = vunpack.c.h.u8.bf16 %v2648
        %v2677 = vunpack.c.l.u8.bf16 %v2649
        %v2678 = vunpack.c.l.u8.bf16 %v2650
        %v2679 = vunpack.c.h.u8.bf16 %v2649
        %v2680 = vunpack.c.h.u8.bf16 %v2650
        %v2681 = vunpack.c.l.u8.bf16 %v2651
        %v2682 = vunpack.c.l.u8.bf16 %v2652
        %v2683 = vunpack.c.h.u8.bf16 %v2651
        %v2684 = vunpack.c.h.u8.bf16 %v2652
        %2685 = vmatprep.subr.bf16.mxu0 %v2605
        %2686 = vmatpush1.bf16.msra.mxu0 %v2604
        %2687 = vmatprep.subr.bf16.mxu0 %v2607
        %2688 = vmatpush1.bf16.msra.mxu0 %v2606
        %2689 = vmatprep.subr.bf16.mxu0 %v2609
        %2690 = vmatpush1.bf16.msra.mxu0 %v2608
        %2691 = vmatprep.subr.bf16.mxu0 %v2611
        %2692 = vmatpush1.bf16.msra.mxu0 %v2610
        %2693 = vmatprep.subr.bf16.mxu0 %v2613
        %2694 = vmatpush1.bf16.msra.mxu0 %v2612
        %2695 = vmatprep.subr.bf16.mxu0 %v2615
        %2696 = vmatpush1.bf16.msra.mxu0 %v2614
        %2697 = vmatprep.subr.bf16.mxu0 %v2617
        %2698 = vmatpush1.bf16.msra.mxu0 %v2616
        %2699 = vmatprep.subr.bf16.mxu0 %v2619
        %2700 = vmatpush1.bf16.msra.mxu0 %v2618
        %2701 = vmatprep.subr.bf16.mxu0 %v2621
        %2702 = vmatpush1.bf16.msra.mxu0 %v2620
        %2703 = vmatprep.subr.bf16.mxu0 %v2623
        %2704 = vmatpush1.bf16.msra.mxu0 %v2622
        %2705 = vmatprep.subr.bf16.mxu0 %v2625
        %2706 = vmatpush1.bf16.msra.mxu0 %v2624
        %2707 = vmatprep.subr.bf16.mxu0 %v2627
        %2708 = vmatpush1.bf16.msra.mxu0 %v2626
        %2709 = vmatprep.subr.bf16.mxu0 %v2629
        %2710 = vmatpush1.bf16.msra.mxu0 %v2628
        %2711 = vmatprep.subr.bf16.mxu0 %v2631
        %2712 = vmatpush1.bf16.msra.mxu0 %v2630
        %2713 = vmatprep.subr.bf16.mxu0 %v2633
        %2714 = vmatpush1.bf16.msra.mxu0 %v2632
        %2715 = vmatprep.subr.bf16.mxu0 %v2635
        %2716 = vmatpush1.bf16.msra.mxu0 %v2634
        %2717 = vmatprep.mubr.bf16.mxu0 %v466
        %2718 = vmatmul.mubr.bf16.gmra.mrb[0].mxu0 %v465
        %v2719 = vpop.f32.mrb[0].mxu0
        %v2720 = vadd.f32 0.0, %v2719
        %v2721 = vpop.f32.mrb[0].mxu0
        %v2722 = vadd.f32 0.0, %v2721
        %v2723 = vpop.f32.mrb[0].mxu0
        %v2724 = vadd.f32 0.0, %v2723
        %v2725 = vpop.f32.mrb[0].mxu0
        %v2726 = vadd.f32 0.0, %v2725
        %2727 = vmatprep.mubr.bf16.mxu0 %v468
        %2728 = vmatmul.mubr.bf16.gmra.mrb[0].mxu0 %v467
        %v2729 = vpop.f32.mrb[0].mxu0
        %v2730 = vadd.f32 0.0, %v2729
        %v2731 = vpop.f32.mrb[0].mxu0
        %v2732 = vadd.f32 0.0, %v2731
        %v2733 = vpop.f32.mrb[0].mxu0
        %v2734 = vadd.f32 0.0, %v2733
        %v2735 = vpop.f32.mrb[0].mxu0
        %v2736 = vadd.f32 0.0, %v2735
        %2737 = vmatprep.mubr.bf16.mxu0 %v470
        %2738 = vmatmul.mubr.bf16.gmra.mrb[0].mxu0 %v469
        %v2739 = vpop.f32.mrb[0].mxu0
        %v2740 = vadd.f32 0.0, %v2739
        %v2741 = vpop.f32.mrb[0].mxu0
        %v2742 = vadd.f32 0.0, %v2741
        %v2743 = vpop.f32.mrb[0].mxu0
        %v2744 = vadd.f32 0.0, %v2743
        %v2745 = vpop.f32.mrb[0].mxu0
        %v2746 = vadd.f32 0.0, %v2745
        %2747 = vmatprep.mubr.bf16.mxu0 %v472
        %2748 = vmatmul.mubr.bf16.gmra.mrb[0].mxu0 %v471
        %v2749 = vpop.f32.mrb[0].mxu0
        %v2750 = vadd.f32 0.0, %v2749
        %v2751 = vpop.f32.mrb[0].mxu0
        %v2752 = vadd.f32 0.0, %v2751
        %v2753 = vpop.f32.mrb[0].mxu0
        %v2754 = vadd.f32 0.0, %v2753
        %v2755 = vpop.f32.mrb[0].mxu0
        %v2756 = vadd.f32 0.0, %v2755
        %2757 = vmatprep.mubr.bf16.mxu0 %v474
        %2758 = vmatmul.mubr.bf16.gmra.mrb[0].mxu0 %v473
        %v2759 = vpop.f32.mrb[0].mxu0
        %v2760 = vadd.f32 0.0, %v2759
        %v2761 = vpop.f32.mrb[0].mxu0
        %v2762 = vadd.f32 0.0, %v2761
        %v2763 = vpop.f32.mrb[0].mxu0
        %v2764 = vadd.f32 0.0, %v2763
        %v2765 = vpop.f32.mrb[0].mxu0
        %v2766 = vadd.f32 0.0, %v2765
        %2767 = vmatprep.mubr.bf16.mxu0 %v476
        %2768 = vmatmul.mubr.bf16.gmra.mrb[0].mxu0 %v475
        %v2769 = vpop.f32.mrb[0].mxu0
        %v2770 = vadd.f32 0.0, %v2769
        %v2771 = vpop.f32.mrb[0].mxu0
        %v2772 = vadd.f32 0.0, %v2771
        %v2773 = vpop.f32.mrb[0].mxu0
        %v2774 = vadd.f32 0.0, %v2773
        %v2775 = vpop.f32.mrb[0].mxu0
        %v2776 = vadd.f32 0.0, %v2775
        %2777 = vmatprep.mubr.bf16.mxu0 %v478
        %2778 = vmatmul.mubr.bf16.gmra.mrb[0].mxu0 %v477
        %v2779 = vpop.f32.mrb[0].mxu0
        %v2780 = vadd.f32 0.0, %v2779
        %v2781 = vpop.f32.mrb[0].mxu0
        %v2782 = vadd.f32 0.0, %v2781
        %v2783 = vpop.f32.mrb[0].mxu0
        %v2784 = vadd.f32 0.0, %v2783
        %v2785 = vpop.f32.mrb[0].mxu0
        %v2786 = vadd.f32 0.0, %v2785
        %2787 = vmatprep.mubr.bf16.mxu0 %v480
        %2788 = vmatmul.mubr.bf16.gmra.mrb[0].mxu0 %v479
        %v2789 = vpop.f32.mrb[0].mxu0
        %v2790 = vadd.f32 0.0, %v2789
        %v2791 = vpop.f32.mrb[0].mxu0
        %v2792 = vadd.f32 0.0, %v2791
        %v2793 = vpop.f32.mrb[0].mxu0
        %v2794 = vadd.f32 0.0, %v2793
        %v2795 = vpop.f32.mrb[0].mxu0
        %v2796 = vadd.f32 0.0, %v2795
        %2797 = vdwg.mxu0
        %2798 = vmatprep.subr.bf16.mxu0 %v2654
        %2799 = vmatpush1.bf16.msra.mxu0 %v2653
        %2800 = vmatprep.subr.bf16.mxu0 %v2656
        %2801 = vmatpush1.bf16.msra.mxu0 %v2655
        %2802 = vmatprep.subr.bf16.mxu0 %v2658
        %2803 = vmatpush1.bf16.msra.mxu0 %v2657
        %2804 = vmatprep.subr.bf16.mxu0 %v2660
        %2805 = vmatpush1.bf16.msra.mxu0 %v2659
        %2806 = vmatprep.subr.bf16.mxu0 %v2662
        %2807 = vmatpush1.bf16.msra.mxu0 %v2661
        %2808 = vmatprep.subr.bf16.mxu0 %v2664
        %2809 = vmatpush1.bf16.msra.mxu0 %v2663
        %2810 = vmatprep.subr.bf16.mxu0 %v2666
        %2811 = vmatpush1.bf16.msra.mxu0 %v2665
        %2812 = vmatprep.subr.bf16.mxu0 %v2668
        %2813 = vmatpush1.bf16.msra.mxu0 %v2667
        %2814 = vmatprep.subr.bf16.mxu0 %v2670
        %2815 = vmatpush1.bf16.msra.mxu0 %v2669
        %2816 = vmatprep.subr.bf16.mxu0 %v2672
        %2817 = vmatpush1.bf16.msra.mxu0 %v2671
        %2818 = vmatprep.subr.bf16.mxu0 %v2674
        %2819 = vmatpush1.bf16.msra.mxu0 %v2673
        %2820 = vmatprep.subr.bf16.mxu0 %v2676
        %2821 = vmatpush1.bf16.msra.mxu0 %v2675
        %2822 = vmatprep.subr.bf16.mxu0 %v2678
        %2823 = vmatpush1.bf16.msra.mxu0 %v2677
        %2824 = vmatprep.subr.bf16.mxu0 %v2680
        %2825 = vmatpush1.bf16.msra.mxu0 %v2679
        %2826 = vmatprep.subr.bf16.mxu0 %v2682
        %2827 = vmatpush1.bf16.msra.mxu0 %v2681
        %2828 = vmatprep.subr.bf16.mxu0 %v2684
        %2829 = vmatpush1.bf16.msra.mxu0 %v2683
        %2830 = vmatprep.mubr.bf16.mxu0 %v659
        %2831 = vmatmul.mubr.bf16.gmra.mrb[0].mxu0 %v658
        %v2832 = vpop.f32.mrb[0].mxu0
        %v2833 = vadd.f32 0.0, %v2832
        %v2834 = vpop.f32.mrb[0].mxu0
        %v2835 = vadd.f32 0.0, %v2834
        %v2836 = vpop.f32.mrb[0].mxu0
        %v2837 = vadd.f32 0.0, %v2836
        %v2838 = vpop.f32.mrb[0].mxu0
        %v2839 = vadd.f32 0.0, %v2838
        %2840 = vmatprep.mubr.bf16.mxu0 %v661
        %2841 = vmatmul.mubr.bf16.gmra.mrb[0].mxu0 %v660
        %v2842 = vpop.f32.mrb[0].mxu0
        %v2843 = vadd.f32 0.0, %v2842
        %v2844 = vpop.f32.mrb[0].mxu0
        %v2845 = vadd.f32 0.0, %v2844
        %v2846 = vpop.f32.mrb[0].mxu0
        %v2847 = vadd.f32 0.0, %v2846
        %v2848 = vpop.f32.mrb[0].mxu0
        %v2849 = vadd.f32 0.0, %v2848
        %2850 = vmatprep.mubr.bf16.mxu0 %v663
        %2851 = vmatmul.mubr.bf16.gmra.mrb[0].mxu0 %v662
        %v2852 = vpop.f32.mrb[0].mxu0
        %v2853 = vadd.f32 0.0, %v2852
        %v2854 = vpop.f32.mrb[0].mxu0
        %v2855 = vadd.f32 0.0, %v2854
        %v2856 = vpop.f32.mrb[0].mxu0
        %v2857 = vadd.f32 0.0, %v2856
        %v2858 = vpop.f32.mrb[0].mxu0
        %v2859 = vadd.f32 0.0, %v2858
        %2860 = vmatprep.mubr.bf16.mxu0 %v665
        %2861 = vmatmul.mubr.bf16.gmra.mrb[0].mxu0 %v664
        %v2862 = vpop.f32.mrb[0].mxu0
        %v2863 = vadd.f32 0.0, %v2862
        %v2864 = vpop.f32.mrb[0].mxu0
        %v2865 = vadd.f32 0.0, %v2864
        %v2866 = vpop.f32.mrb[0].mxu0
        %v2867 = vadd.f32 0.0, %v2866
        %v2868 = vpop.f32.mrb[0].mxu0
        %v2869 = vadd.f32 0.0, %v2868
        %2870 = vmatprep.mubr.bf16.mxu0 %v667
        %2871 = vmatmul.mubr.bf16.gmra.mrb[0].mxu0 %v666
        %v2872 = vpop.f32.mrb[0].mxu0
        %v2873 = vadd.f32 0.0, %v2872
        %v2874 = vpop.f32.mrb[0].mxu0
        %v2875 = vadd.f32 0.0, %v2874
        %v2876 = vpop.f32.mrb[0].mxu0
        %v2877 = vadd.f32 0.0, %v2876
        %v2878 = vpop.f32.mrb[0].mxu0
        %v2879 = vadd.f32 0.0, %v2878
        %2880 = vmatprep.mubr.bf16.mxu0 %v669
        %2881 = vmatmul.mubr.bf16.gmra.mrb[0].mxu0 %v668
        %v2882 = vpop.f32.mrb[0].mxu0
        %v2883 = vadd.f32 0.0, %v2882
        %v2884 = vpop.f32.mrb[0].mxu0
        %v2885 = vadd.f32 0.0, %v2884
        %v2886 = vpop.f32.mrb[0].mxu0
        %v2887 = vadd.f32 0.0, %v2886
        %v2888 = vpop.f32.mrb[0].mxu0
        %v2889 = vadd.f32 0.0, %v2888
        %2890 = vmatprep.mubr.bf16.mxu0 %v671
        %2891 = vmatmul.mubr.bf16.gmra.mrb[0].mxu0 %v670
        %v2892 = vpop.f32.mrb[0].mxu0
        %v2893 = vadd.f32 0.0, %v2892
        %v2894 = vpop.f32.mrb[0].mxu0
        %v2895 = vadd.f32 0.0, %v2894
        %v2896 = vpop.f32.mrb[0].mxu0
        %v2897 = vadd.f32 0.0, %v2896
        %v2898 = vpop.f32.mrb[0].mxu0
        %v2899 = vadd.f32 0.0, %v2898
        %2900 = vmatprep.mubr.bf16.mxu0 %v673
        %2901 = vmatmul.mubr.bf16.gmra.mrb[0].mxu0 %v672
        %v2902 = vpop.f32.mrb[0].mxu0
        %v2903 = vadd.f32 0.0, %v2902
        %v2904 = vpop.f32.mrb[0].mxu0
        %v2905 = vadd.f32 0.0, %v2904
        %v2906 = vpop.f32.mrb[0].mxu0
        %v2907 = vadd.f32 0.0, %v2906
        %v2908 = vpop.f32.mrb[0].mxu0
        %v2909 = vadd.f32 0.0, %v2908
        %2910 = vdwg.mxu0
        %v2911 = vpack.c.bf16 %v2724, %v2720
        %v2912 = vpack.c.bf16 %v2726, %v2722
        %v2913 = vpack.c.bf16 %v2734, %v2730
        %v2914 = vpack.c.bf16 %v2736, %v2732
        %v2915 = vpack.c.bf16 %v2744, %v2740
        %v2916 = vpack.c.bf16 %v2746, %v2742
        %v2917 = vpack.c.bf16 %v2754, %v2750
        %v2918 = vpack.c.bf16 %v2756, %v2752
        %v2919 = vpack.c.bf16 %v2764, %v2760
        %v2920 = vpack.c.bf16 %v2766, %v2762
        %v2921 = vpack.c.bf16 %v2774, %v2770
        %v2922 = vpack.c.bf16 %v2776, %v2772
        %v2923 = vpack.c.bf16 %v2784, %v2780
        %v2924 = vpack.c.bf16 %v2786, %v2782
        %v2925 = vpack.c.bf16 %v2794, %v2790
        %v2926 = vpack.c.bf16 %v2796, %v2792
        %v2927 = vpack.c.bf16 %v2837, %v2833
        %v2928 = vpack.c.bf16 %v2839, %v2835
        %v2929 = vpack.c.bf16 %v2847, %v2843
        %v2930 = vpack.c.bf16 %v2849, %v2845
        %v2931 = vpack.c.bf16 %v2857, %v2853
        %v2932 = vpack.c.bf16 %v2859, %v2855
        %v2933 = vpack.c.bf16 %v2867, %v2863
        %v2934 = vpack.c.bf16 %v2869, %v2865
        %v2935 = vpack.c.bf16 %v2877, %v2873
        %v2936 = vpack.c.bf16 %v2879, %v2875
        %v2937 = vpack.c.bf16 %v2887, %v2883
        %v2938 = vpack.c.bf16 %v2889, %v2885
        %v2939 = vpack.c.bf16 %v2897, %v2893
        %v2940 = vpack.c.bf16 %v2899, %v2895
        %v2941 = vpack.c.bf16 %v2907, %v2903
        %v2942 = vpack.c.bf16 %v2909, %v2905
        %v2943 = vunpack.c.l.bf16 %v2911
        %v2944 = vunpack.c.l.bf16 %v2912
        %v2945 = vunpack.c.h.bf16 %v2911
        %v2946 = vunpack.c.h.bf16 %v2912
        %v2947 = vunpack.c.l.bf16 %v2913
        %v2948 = vunpack.c.l.bf16 %v2914
        %v2949 = vunpack.c.h.bf16 %v2913
        %v2950 = vunpack.c.h.bf16 %v2914
        %v2951 = vunpack.c.l.bf16 %v2915
        %v2952 = vunpack.c.l.bf16 %v2916
        %v2953 = vunpack.c.h.bf16 %v2915
        %v2954 = vunpack.c.h.bf16 %v2916
        %v2955 = vunpack.c.l.bf16 %v2917
        %v2956 = vunpack.c.l.bf16 %v2918
        %v2957 = vunpack.c.h.bf16 %v2917
        %v2958 = vunpack.c.h.bf16 %v2918
        %v2959 = vunpack.c.l.bf16 %v2919
        %v2960 = vunpack.c.l.bf16 %v2920
        %v2961 = vunpack.c.h.bf16 %v2919
        %v2962 = vunpack.c.h.bf16 %v2920
        %v2963 = vunpack.c.l.bf16 %v2921
        %v2964 = vunpack.c.l.bf16 %v2922
        %v2965 = vunpack.c.h.bf16 %v2921
        %v2966 = vunpack.c.h.bf16 %v2922
        %v2967 = vunpack.c.l.bf16 %v2923
        %v2968 = vunpack.c.l.bf16 %v2924
        %v2969 = vunpack.c.h.bf16 %v2923
        %v2970 = vunpack.c.h.bf16 %v2924
        %v2971 = vunpack.c.l.bf16 %v2925
        %v2972 = vunpack.c.l.bf16 %v2926
        %v2973 = vunpack.c.h.bf16 %v2925
        %v2974 = vunpack.c.h.bf16 %v2926
        %v2975 = vunpack.c.l.bf16 %v2927
        %v2976 = vunpack.c.l.bf16 %v2928
        %v2977 = vunpack.c.h.bf16 %v2927
        %v2978 = vunpack.c.h.bf16 %v2928
        %v2979 = vunpack.c.l.bf16 %v2929
        %v2980 = vunpack.c.l.bf16 %v2930
        %v2981 = vunpack.c.h.bf16 %v2929
        %v2982 = vunpack.c.h.bf16 %v2930
        %v2983 = vunpack.c.l.bf16 %v2931
        %v2984 = vunpack.c.l.bf16 %v2932
        %v2985 = vunpack.c.h.bf16 %v2931
        %v2986 = vunpack.c.h.bf16 %v2932
        %v2987 = vunpack.c.l.bf16 %v2933
        %v2988 = vunpack.c.l.bf16 %v2934
        %v2989 = vunpack.c.h.bf16 %v2933
        %v2990 = vunpack.c.h.bf16 %v2934
        %v2991 = vunpack.c.l.bf16 %v2935
        %v2992 = vunpack.c.l.bf16 %v2936
        %v2993 = vunpack.c.h.bf16 %v2935
        %v2994 = vunpack.c.h.bf16 %v2936
        %v2995 = vunpack.c.l.bf16 %v2937
        %v2996 = vunpack.c.l.bf16 %v2938
        %v2997 = vunpack.c.h.bf16 %v2937
        %v2998 = vunpack.c.h.bf16 %v2938
        %v2999 = vunpack.c.l.bf16 %v2939
        %v3000 = vunpack.c.l.bf16 %v2940
        %v3001 = vunpack.c.h.bf16 %v2939
        %v3002 = vunpack.c.h.bf16 %v2940
        %v3003 = vunpack.c.l.bf16 %v2941
        %v3004 = vunpack.c.l.bf16 %v2942
        %v3005 = vunpack.c.h.bf16 %v2941
        %v3006 = vunpack.c.h.bf16 %v2942
        %v3007 = vsub.f32 %v2720, %v2943
        %v3008 = vsub.f32 %v2722, %v2944
        %v3009 = vsub.f32 %v2724, %v2945
        %v3010 = vsub.f32 %v2726, %v2946
        %v3011 = vsub.f32 %v2730, %v2947
        %v3012 = vsub.f32 %v2732, %v2948
        %v3013 = vsub.f32 %v2734, %v2949
        %v3014 = vsub.f32 %v2736, %v2950
        %v3015 = vsub.f32 %v2740, %v2951
        %v3016 = vsub.f32 %v2742, %v2952
        %v3017 = vsub.f32 %v2744, %v2953
        %v3018 = vsub.f32 %v2746, %v2954
        %v3019 = vsub.f32 %v2750, %v2955
        %v3020 = vsub.f32 %v2752, %v2956
        %v3021 = vsub.f32 %v2754, %v2957
        %v3022 = vsub.f32 %v2756, %v2958
        %v3023 = vsub.f32 %v2760, %v2959
        %v3024 = vsub.f32 %v2762, %v2960
        %v3025 = vsub.f32 %v2764, %v2961
        %v3026 = vsub.f32 %v2766, %v2962
        %v3027 = vsub.f32 %v2770, %v2963
        %v3028 = vsub.f32 %v2772, %v2964
        %v3029 = vsub.f32 %v2774, %v2965
        %v3030 = vsub.f32 %v2776, %v2966
        %v3031 = vsub.f32 %v2780, %v2967
        %v3032 = vsub.f32 %v2782, %v2968
        %v3033 = vsub.f32 %v2784, %v2969
        %v3034 = vsub.f32 %v2786, %v2970
        %v3035 = vsub.f32 %v2790, %v2971
        %v3036 = vsub.f32 %v2792, %v2972
        %v3037 = vsub.f32 %v2794, %v2973
        %v3038 = vsub.f32 %v2796, %v2974
        %v3039 = vsub.f32 %v2833, %v2975
        %v3040 = vsub.f32 %v2835, %v2976
        %v3041 = vsub.f32 %v2837, %v2977
        %v3042 = vsub.f32 %v2839, %v2978
        %v3043 = vsub.f32 %v2843, %v2979
        %v3044 = vsub.f32 %v2845, %v2980
        %v3045 = vsub.f32 %v2847, %v2981
        %v3046 = vsub.f32 %v2849, %v2982
        %v3047 = vsub.f32 %v2853, %v2983
        %v3048 = vsub.f32 %v2855, %v2984
        %v3049 = vsub.f32 %v2857, %v2985
        %v3050 = vsub.f32 %v2859, %v2986
        %v3051 = vsub.f32 %v2863, %v2987
        %v3052 = vsub.f32 %v2865, %v2988
        %v3053 = vsub.f32 %v2867, %v2989
        %v3054 = vsub.f32 %v2869, %v2990
        %v3055 = vsub.f32 %v2873, %v2991
        %v3056 = vsub.f32 %v2875, %v2992
        %v3057 = vsub.f32 %v2877, %v2993
        %v3058 = vsub.f32 %v2879, %v2994
        %v3059 = vsub.f32 %v2883, %v2995
        %v3060 = vsub.f32 %v2885, %v2996
        %v3061 = vsub.f32 %v2887, %v2997
        %v3062 = vsub.f32 %v2889, %v2998
        %v3063 = vsub.f32 %v2893, %v2999
        %v3064 = vsub.f32 %v2895, %v3000
        %v3065 = vsub.f32 %v2897, %v3001
        %v3066 = vsub.f32 %v2899, %v3002
        %v3067 = vsub.f32 %v2903, %v3003
        %v3068 = vsub.f32 %v2905, %v3004
        %v3069 = vsub.f32 %v2907, %v3005
        %v3070 = vsub.f32 %v2909, %v3006
        %v3071 = vpack.c.bf16 %v3009, %v3007
        %v3072 = vpack.c.bf16 %v3010, %v3008
        %v3073 = vpack.c.bf16 %v3013, %v3011
        %v3074 = vpack.c.bf16 %v3014, %v3012
        %v3075 = vpack.c.bf16 %v3017, %v3015
        %v3076 = vpack.c.bf16 %v3018, %v3016
        %v3077 = vpack.c.bf16 %v3021, %v3019
        %v3078 = vpack.c.bf16 %v3022, %v3020
        %v3079 = vpack.c.bf16 %v3025, %v3023
        %v3080 = vpack.c.bf16 %v3026, %v3024
        %v3081 = vpack.c.bf16 %v3029, %v3027
        %v3082 = vpack.c.bf16 %v3030, %v3028
        %v3083 = vpack.c.bf16 %v3033, %v3031
        %v3084 = vpack.c.bf16 %v3034, %v3032
        %v3085 = vpack.c.bf16 %v3037, %v3035
        %v3086 = vpack.c.bf16 %v3038, %v3036
        %v3087 = vpack.c.bf16 %v3041, %v3039
        %v3088 = vpack.c.bf16 %v3042, %v3040
        %v3089 = vpack.c.bf16 %v3045, %v3043
        %v3090 = vpack.c.bf16 %v3046, %v3044
        %v3091 = vpack.c.bf16 %v3049, %v3047
        %v3092 = vpack.c.bf16 %v3050, %v3048
        %v3093 = vpack.c.bf16 %v3053, %v3051
        %v3094 = vpack.c.bf16 %v3054, %v3052
        %v3095 = vpack.c.bf16 %v3057, %v3055
        %v3096 = vpack.c.bf16 %v3058, %v3056
        %v3097 = vpack.c.bf16 %v3061, %v3059
        %v3098 = vpack.c.bf16 %v3062, %v3060
        %v3099 = vpack.c.bf16 %v3065, %v3063
        %v3100 = vpack.c.bf16 %v3066, %v3064
        %v3101 = vpack.c.bf16 %v3069, %v3067
        %v3102 = vpack.c.bf16 %v3070, %v3068
        %3103 = vmatprep.subr.bf16.mxu0 0
        %3104 = vmatpush1.bf16.msra.mxu0 %v1059
        %3105 = vmatprep.subr.bf16.mxu0 0
        %3106 = vmatpush1.bf16.msra.mxu0 %v1060
        %3107 = vmatprep.subr.bf16.mxu0 0
        %3108 = vmatpush1.bf16.msra.mxu0 %v1061
        %3109 = vmatprep.subr.bf16.mxu0 0
        %3110 = vmatpush1.bf16.msra.mxu0 %v1062
        %3111 = vmatprep.subr.bf16.mxu0 0
        %3112 = vmatpush1.bf16.msra.mxu0 %v1063
        %3113 = vmatprep.subr.bf16.mxu0 0
        %3114 = vmatpush1.bf16.msra.mxu0 %v1064
        %3115 = vmatprep.subr.bf16.mxu0 0
        %3116 = vmatpush1.bf16.msra.mxu0 %v1065
        %3117 = vmatprep.subr.bf16.mxu0 0
        %3118 = vmatpush1.bf16.msra.mxu0 %v1066
        %3119 = vmatprep.subr.bf16.mxu0 0
        %3120 = vmatpush1.bf16.msra.mxu0 %v1067
        %3121 = vmatprep.subr.bf16.mxu0 0
        %3122 = vmatpush1.bf16.msra.mxu0 %v1068
        %3123 = vmatprep.subr.bf16.mxu0 0
        %3124 = vmatpush1.bf16.msra.mxu0 %v1069
        %3125 = vmatprep.subr.bf16.mxu0 0
        %3126 = vmatpush1.bf16.msra.mxu0 %v1070
        %3127 = vmatprep.subr.bf16.mxu0 0
        %3128 = vmatpush1.bf16.msra.mxu0 %v1071
        %3129 = vmatprep.subr.bf16.mxu0 0
        %3130 = vmatpush1.bf16.msra.mxu0 %v1072
        %3131 = vmatprep.subr.bf16.mxu0 0
        %3132 = vmatpush1.bf16.msra.mxu0 %v1073
        %3133 = vmatprep.subr.bf16.mxu0 0
        %3134 = vmatpush1.bf16.msra.mxu0 %v1074
        %3135 = vmatprep.mubr.bf16.mxu0 %v3072
        %3136 = vmatmul.mubr.bf16.gmra.mrb[0].mxu0 %v3071
        %v3137 = vpop.f32.mrb[0].mxu0
        %v3138 = vadd.f32 0.0, %v3137
        %v3139 = vpop.f32.mrb[0].mxu0
        %v3140 = vpop.f32.mrb[0].mxu0
        %v3141 = vadd.f32 0.0, %v3140
        %v3142 = vpop.f32.mrb[0].mxu0
        %3143 = vmatprep.mubr.bf16.mxu0 %v3074
        %3144 = vmatmul.mubr.bf16.gmra.mrb[0].mxu0 %v3073
        %v3145 = vpop.f32.mrb[0].mxu0
        %v3146 = vadd.f32 0.0, %v3145
        %v3147 = vpop.f32.mrb[0].mxu0
        %v3148 = vpop.f32.mrb[0].mxu0
        %v3149 = vadd.f32 0.0, %v3148
        %v3150 = vpop.f32.mrb[0].mxu0
        %3151 = vmatprep.mubr.bf16.mxu0 %v3076
        %3152 = vmatmul.mubr.bf16.gmra.mrb[0].mxu0 %v3075
        %v3153 = vpop.f32.mrb[0].mxu0
        %v3154 = vadd.f32 0.0, %v3153
        %v3155 = vpop.f32.mrb[0].mxu0
        %v3156 = vpop.f32.mrb[0].mxu0
        %v3157 = vadd.f32 0.0, %v3156
        %v3158 = vpop.f32.mrb[0].mxu0
        %3159 = vmatprep.mubr.bf16.mxu0 %v3078
        %3160 = vmatmul.mubr.bf16.gmra.mrb[0].mxu0 %v3077
        %v3161 = vpop.f32.mrb[0].mxu0
        %v3162 = vadd.f32 0.0, %v3161
        %v3163 = vpop.f32.mrb[0].mxu0
        %v3164 = vpop.f32.mrb[0].mxu0
        %v3165 = vadd.f32 0.0, %v3164
        %v3166 = vpop.f32.mrb[0].mxu0
        %3167 = vmatprep.mubr.bf16.mxu0 %v3080
        %3168 = vmatmul.mubr.bf16.gmra.mrb[0].mxu0 %v3079
        %v3169 = vpop.f32.mrb[0].mxu0
        %v3170 = vadd.f32 0.0, %v3169
        %v3171 = vpop.f32.mrb[0].mxu0
        %v3172 = vpop.f32.mrb[0].mxu0
        %v3173 = vadd.f32 0.0, %v3172
        %v3174 = vpop.f32.mrb[0].mxu0
        %3175 = vmatprep.mubr.bf16.mxu0 %v3082
        %3176 = vmatmul.mubr.bf16.gmra.mrb[0].mxu0 %v3081
        %v3177 = vpop.f32.mrb[0].mxu0
        %v3178 = vadd.f32 0.0, %v3177
        %v3179 = vpop.f32.mrb[0].mxu0
        %v3180 = vpop.f32.mrb[0].mxu0
        %v3181 = vadd.f32 0.0, %v3180
        %v3182 = vpop.f32.mrb[0].mxu0
        %3183 = vmatprep.mubr.bf16.mxu0 %v3084
        %3184 = vmatmul.mubr.bf16.gmra.mrb[0].mxu0 %v3083
        %v3185 = vpop.f32.mrb[0].mxu0
        %v3186 = vadd.f32 0.0, %v3185
        %v3187 = vpop.f32.mrb[0].mxu0
        %v3188 = vpop.f32.mrb[0].mxu0
        %v3189 = vadd.f32 0.0, %v3188
        %v3190 = vpop.f32.mrb[0].mxu0
        %3191 = vmatprep.mubr.bf16.mxu0 %v3086
        %3192 = vmatmul.mubr.bf16.gmra.mrb[0].mxu0 %v3085
        %v3193 = vpop.f32.mrb[0].mxu0
        %v3194 = vadd.f32 0.0, %v3193
        %v3195 = vpop.f32.mrb[0].mxu0
        %v3196 = vpop.f32.mrb[0].mxu0
        %v3197 = vadd.f32 0.0, %v3196
        %v3198 = vpop.f32.mrb[0].mxu0
        %3199 = vmatprep.mubr.bf16.mxu0 %v3088
        %3200 = vmatmul.mubr.bf16.gmra.mrb[0].mxu0 %v3087
        %v3201 = vpop.f32.mrb[0].mxu0
        %v3202 = vadd.f32 0.0, %v3201
        %v3203 = vpop.f32.mrb[0].mxu0
        %v3204 = vpop.f32.mrb[0].mxu0
        %v3205 = vadd.f32 0.0, %v3204
        %v3206 = vpop.f32.mrb[0].mxu0
        %3207 = vmatprep.mubr.bf16.mxu0 %v3090
        %3208 = vmatmul.mubr.bf16.gmra.mrb[0].mxu0 %v3089
        %v3209 = vpop.f32.mrb[0].mxu0
        %v3210 = vadd.f32 0.0, %v3209
        %v3211 = vpop.f32.mrb[0].mxu0
        %v3212 = vpop.f32.mrb[0].mxu0
        %v3213 = vadd.f32 0.0, %v3212
        %v3214 = vpop.f32.mrb[0].mxu0
        %3215 = vmatprep.mubr.bf16.mxu0 %v3092
        %3216 = vmatmul.mubr.bf16.gmra.mrb[0].mxu0 %v3091
        %v3217 = vpop.f32.mrb[0].mxu0
        %v3218 = vadd.f32 0.0, %v3217
        %v3219 = vpop.f32.mrb[0].mxu0
        %v3220 = vpop.f32.mrb[0].mxu0
        %v3221 = vadd.f32 0.0, %v3220
        %v3222 = vpop.f32.mrb[0].mxu0
        %3223 = vmatprep.mubr.bf16.mxu0 %v3094
        %3224 = vmatmul.mubr.bf16.gmra.mrb[0].mxu0 %v3093
        %v3225 = vpop.f32.mrb[0].mxu0
        %v3226 = vadd.f32 0.0, %v3225
        %v3227 = vpop.f32.mrb[0].mxu0
        %v3228 = vpop.f32.mrb[0].mxu0
        %v3229 = vadd.f32 0.0, %v3228
        %v3230 = vpop.f32.mrb[0].mxu0
        %3231 = vmatprep.mubr.bf16.mxu0 %v3096
        %3232 = vmatmul.mubr.bf16.gmra.mrb[0].mxu0 %v3095
        %v3233 = vpop.f32.mrb[0].mxu0
        %v3234 = vadd.f32 0.0, %v3233
        %v3235 = vpop.f32.mrb[0].mxu0
        %v3236 = vpop.f32.mrb[0].mxu0
        %v3237 = vadd.f32 0.0, %v3236
        %v3238 = vpop.f32.mrb[0].mxu0
        %3239 = vmatprep.mubr.bf16.mxu0 %v3098
        %3240 = vmatmul.mubr.bf16.gmra.mrb[0].mxu0 %v3097
        %v3241 = vpop.f32.mrb[0].mxu0
        %v3242 = vadd.f32 0.0, %v3241
        %v3243 = vpop.f32.mrb[0].mxu0
        %v3244 = vpop.f32.mrb[0].mxu0
        %v3245 = vadd.f32 0.0, %v3244
        %v3246 = vpop.f32.mrb[0].mxu0
        %3247 = vmatprep.mubr.bf16.mxu0 %v3100
        %3248 = vmatmul.mubr.bf16.gmra.mrb[0].mxu0 %v3099
        %v3249 = vpop.f32.mrb[0].mxu0
        %v3250 = vadd.f32 0.0, %v3249
        %v3251 = vpop.f32.mrb[0].mxu0
        %v3252 = vpop.f32.mrb[0].mxu0
        %v3253 = vadd.f32 0.0, %v3252
        %v3254 = vpop.f32.mrb[0].mxu0
        %3255 = vmatprep.mubr.bf16.mxu0 %v3102
        %3256 = vmatmul.mubr.bf16.gmra.mrb[0].mxu0 %v3101
        %v3257 = vpop.f32.mrb[0].mxu0
        %v3258 = vadd.f32 0.0, %v3257
        %v3259 = vpop.f32.mrb[0].mxu0
        %v3260 = vpop.f32.mrb[0].mxu0
        %v3261 = vadd.f32 0.0, %v3260
        %v3262 = vpop.f32.mrb[0].mxu0
        %3263 = vdwg.mxu0
        %3264 = vmatprep.subr.bf16.mxu0 0
        %3265 = vmatpush1.bf16.msra.mxu0 %v1059
        %3266 = vmatprep.subr.bf16.mxu0 0
        %3267 = vmatpush1.bf16.msra.mxu0 %v1060
        %3268 = vmatprep.subr.bf16.mxu0 0
        %3269 = vmatpush1.bf16.msra.mxu0 %v1061
        %3270 = vmatprep.subr.bf16.mxu0 0
        %3271 = vmatpush1.bf16.msra.mxu0 %v1062
        %3272 = vmatprep.subr.bf16.mxu0 0
        %3273 = vmatpush1.bf16.msra.mxu0 %v1063
        %3274 = vmatprep.subr.bf16.mxu0 0
        %3275 = vmatpush1.bf16.msra.mxu0 %v1064
        %3276 = vmatprep.subr.bf16.mxu0 0
        %3277 = vmatpush1.bf16.msra.mxu0 %v1065
        %3278 = vmatprep.subr.bf16.mxu0 0
        %3279 = vmatpush1.bf16.msra.mxu0 %v1066
        %3280 = vmatprep.subr.bf16.mxu0 0
        %3281 = vmatpush1.bf16.msra.mxu0 %v1067
        %3282 = vmatprep.subr.bf16.mxu0 0
        %3283 = vmatpush1.bf16.msra.mxu0 %v1068
        %3284 = vmatprep.subr.bf16.mxu0 0
        %3285 = vmatpush1.bf16.msra.mxu0 %v1069
        %3286 = vmatprep.subr.bf16.mxu0 0
        %3287 = vmatpush1.bf16.msra.mxu0 %v1070
        %3288 = vmatprep.subr.bf16.mxu0 0
        %3289 = vmatpush1.bf16.msra.mxu0 %v1071
        %3290 = vmatprep.subr.bf16.mxu0 0
        %3291 = vmatpush1.bf16.msra.mxu0 %v1072
        %3292 = vmatprep.subr.bf16.mxu0 0
        %3293 = vmatpush1.bf16.msra.mxu0 %v1073
        %3294 = vmatprep.subr.bf16.mxu0 0
        %3295 = vmatpush1.bf16.msra.mxu0 %v1074
        %3296 = vmatprep.mubr.bf16.mxu0 %v2912
        %3297 = vmatmul.mubr.bf16.gmra.mrb[0].mxu0 %v2911
        %v3298 = vpop.f32.mrb[0].mxu0
        %v3299 = vadd.f32 %v3138, %v3298
        %v3300 = vpop.f32.mrb[0].mxu0
        %v3301 = vpop.f32.mrb[0].mxu0
        %v3302 = vadd.f32 %v3141, %v3301
        %v3303 = vpop.f32.mrb[0].mxu0
        %3304 = vmatprep.mubr.bf16.mxu0 %v2914
        %3305 = vmatmul.mubr.bf16.gmra.mrb[0].mxu0 %v2913
        %v3306 = vpop.f32.mrb[0].mxu0
        %v3307 = vadd.f32 %v3146, %v3306
        %v3308 = vpop.f32.mrb[0].mxu0
        %v3309 = vpop.f32.mrb[0].mxu0
        %v3310 = vadd.f32 %v3149, %v3309
        %v3311 = vpop.f32.mrb[0].mxu0
        %3312 = vmatprep.mubr.bf16.mxu0 %v2916
        %3313 = vmatmul.mubr.bf16.gmra.mrb[0].mxu0 %v2915
        %v3314 = vpop.f32.mrb[0].mxu0
        %v3315 = vadd.f32 %v3154, %v3314
        %v3316 = vpop.f32.mrb[0].mxu0
        %v3317 = vpop.f32.mrb[0].mxu0
        %v3318 = vadd.f32 %v3157, %v3317
        %v3319 = vpop.f32.mrb[0].mxu0
        %3320 = vmatprep.mubr.bf16.mxu0 %v2918
        %3321 = vmatmul.mubr.bf16.gmra.mrb[0].mxu0 %v2917
        %v3322 = vpop.f32.mrb[0].mxu0
        %v3323 = vadd.f32 %v3162, %v3322
        %v3324 = vpop.f32.mrb[0].mxu0
        %v3325 = vpop.f32.mrb[0].mxu0
        %v3326 = vadd.f32 %v3165, %v3325
        %v3327 = vpop.f32.mrb[0].mxu0
        %3328 = vmatprep.mubr.bf16.mxu0 %v2920
        %3329 = vmatmul.mubr.bf16.gmra.mrb[0].mxu0 %v2919
        %v3330 = vpop.f32.mrb[0].mxu0
        %v3331 = vadd.f32 %v3170, %v3330
        %v3332 = vpop.f32.mrb[0].mxu0
        %v3333 = vpop.f32.mrb[0].mxu0
        %v3334 = vadd.f32 %v3173, %v3333
        %v3335 = vpop.f32.mrb[0].mxu0
        %3336 = vmatprep.mubr.bf16.mxu0 %v2922
        %3337 = vmatmul.mubr.bf16.gmra.mrb[0].mxu0 %v2921
        %v3338 = vpop.f32.mrb[0].mxu0
        %v3339 = vadd.f32 %v3178, %v3338
        %v3340 = vpop.f32.mrb[0].mxu0
        %v3341 = vpop.f32.mrb[0].mxu0
        %v3342 = vadd.f32 %v3181, %v3341
        %v3343 = vpop.f32.mrb[0].mxu0
        %3344 = vmatprep.mubr.bf16.mxu0 %v2924
        %3345 = vmatmul.mubr.bf16.gmra.mrb[0].mxu0 %v2923
        %v3346 = vpop.f32.mrb[0].mxu0
        %v3347 = vadd.f32 %v3186, %v3346
        %v3348 = vpop.f32.mrb[0].mxu0
        %v3349 = vpop.f32.mrb[0].mxu0
        %v3350 = vadd.f32 %v3189, %v3349
        %v3351 = vpop.f32.mrb[0].mxu0
        %3352 = vmatprep.mubr.bf16.mxu0 %v2926
        %3353 = vmatmul.mubr.bf16.gmra.mrb[0].mxu0 %v2925
        %v3354 = vpop.f32.mrb[0].mxu0
        %v3355 = vadd.f32 %v3194, %v3354
        %v3356 = vpop.f32.mrb[0].mxu0
        %v3357 = vpop.f32.mrb[0].mxu0
        %v3358 = vadd.f32 %v3197, %v3357
        %v3359 = vpop.f32.mrb[0].mxu0
        %3360 = vmatprep.mubr.bf16.mxu0 %v2928
        %3361 = vmatmul.mubr.bf16.gmra.mrb[0].mxu0 %v2927
        %v3362 = vpop.f32.mrb[0].mxu0
        %v3363 = vadd.f32 %v3202, %v3362
        %v3364 = vpop.f32.mrb[0].mxu0
        %v3365 = vpop.f32.mrb[0].mxu0
        %v3366 = vadd.f32 %v3205, %v3365
        %v3367 = vpop.f32.mrb[0].mxu0
        %3368 = vmatprep.mubr.bf16.mxu0 %v2930
        %3369 = vmatmul.mubr.bf16.gmra.mrb[0].mxu0 %v2929
        %v3370 = vpop.f32.mrb[0].mxu0
        %v3371 = vadd.f32 %v3210, %v3370
        %v3372 = vpop.f32.mrb[0].mxu0
        %v3373 = vpop.f32.mrb[0].mxu0
        %v3374 = vadd.f32 %v3213, %v3373
        %v3375 = vpop.f32.mrb[0].mxu0
        %3376 = vmatprep.mubr.bf16.mxu0 %v2932
        %3377 = vmatmul.mubr.bf16.gmra.mrb[0].mxu0 %v2931
        %v3378 = vpop.f32.mrb[0].mxu0
        %v3379 = vadd.f32 %v3218, %v3378
        %v3380 = vpop.f32.mrb[0].mxu0
        %v3381 = vpop.f32.mrb[0].mxu0
        %v3382 = vadd.f32 %v3221, %v3381
        %v3383 = vpop.f32.mrb[0].mxu0
        %3384 = vmatprep.mubr.bf16.mxu0 %v2934
        %3385 = vmatmul.mubr.bf16.gmra.mrb[0].mxu0 %v2933
        %v3386 = vpop.f32.mrb[0].mxu0
        %v3387 = vadd.f32 %v3226, %v3386
        %v3388 = vpop.f32.mrb[0].mxu0
        %v3389 = vpop.f32.mrb[0].mxu0
        %v3390 = vadd.f32 %v3229, %v3389
        %v3391 = vpop.f32.mrb[0].mxu0
        %3392 = vmatprep.mubr.bf16.mxu0 %v2936
        %3393 = vmatmul.mubr.bf16.gmra.mrb[0].mxu0 %v2935
        %v3394 = vpop.f32.mrb[0].mxu0
        %v3395 = vadd.f32 %v3234, %v3394
        %v3396 = vpop.f32.mrb[0].mxu0
        %v3397 = vpop.f32.mrb[0].mxu0
        %v3398 = vadd.f32 %v3237, %v3397
        %v3399 = vpop.f32.mrb[0].mxu0
        %3400 = vmatprep.mubr.bf16.mxu0 %v2938
        %3401 = vmatmul.mubr.bf16.gmra.mrb[0].mxu0 %v2937
        %v3402 = vpop.f32.mrb[0].mxu0
        %v3403 = vadd.f32 %v3242, %v3402
        %v3404 = vpop.f32.mrb[0].mxu0
        %v3405 = vpop.f32.mrb[0].mxu0
        %v3406 = vadd.f32 %v3245, %v3405
        %v3407 = vpop.f32.mrb[0].mxu0
        %3408 = vmatprep.mubr.bf16.mxu0 %v2940
        %3409 = vmatmul.mubr.bf16.gmra.mrb[0].mxu0 %v2939
        %v3410 = vpop.f32.mrb[0].mxu0
        %v3411 = vadd.f32 %v3250, %v3410
        %v3412 = vpop.f32.mrb[0].mxu0
        %v3413 = vpop.f32.mrb[0].mxu0
        %v3414 = vadd.f32 %v3253, %v3413
        %v3415 = vpop.f32.mrb[0].mxu0
        %3416 = vmatprep.mubr.bf16.mxu0 %v2942
        %3417 = vmatmul.mubr.bf16.gmra.mrb[0].mxu0 %v2941
        %v3418 = vpop.f32.mrb[0].mxu0
        %v3419 = vadd.f32 %v3258, %v3418
        %v3420 = vpop.f32.mrb[0].mxu0
        %v3421 = vpop.f32.mrb[0].mxu0
        %v3422 = vadd.f32 %v3261, %v3421
        %v3423 = vpop.f32.mrb[0].mxu0
        %3424 = vdwg.mxu0
        %s3425 = scalar_lea.vmem %s188, 640 [#allocation2]
        %v3426 = vld [vmem:[%s3425] sm:$0xff]
        %v3427 = vld [vmem:[%s3425 + $0x8] sm:$0xff]
        %v3428 = vld [vmem:[%s3425 + $0x10] sm:$0xff]
        %v3429 = vld [vmem:[%s3425 + $0x18] sm:$0xff]
        %v3430 = vld [vmem:[%s3425 + $0x20] sm:$0xff]
        %v3431 = vld [vmem:[%s3425 + $0x28] sm:$0xff]
        %v3432 = vld [vmem:[%s3425 + $0x30] sm:$0xff]
        %v3433 = vld [vmem:[%s3425 + $0x38] sm:$0xff]
        %v3434 = vld [vmem:[%s3425 + $0x40] sm:$0xff]
        %v3435 = vld [vmem:[%s3425 + $0x48] sm:$0xff]
        %v3436 = vld [vmem:[%s3425 + $0x50] sm:$0xff]
        %v3437 = vld [vmem:[%s3425 + $0x58] sm:$0xff]
        %v3438 = vld [vmem:[%s3425 + $0x60] sm:$0xff]
        %v3439 = vld [vmem:[%s3425 + $0x68] sm:$0xff]
        %v3440 = vld [vmem:[%s3425 + $0x70] sm:$0xff]
        %v3441 = vld [vmem:[%s3425 + $0x78] sm:$0xff]
        %v3442 = vunpack.c.l.u8.bf16 %v3426
        %v3443 = vunpack.c.l.u8.bf16 %v3427
        %v3444 = vunpack.c.h.u8.bf16 %v3426
        %v3445 = vunpack.c.h.u8.bf16 %v3427
        %v3446 = vunpack.c.l.u8.bf16 %v3428
        %v3447 = vunpack.c.l.u8.bf16 %v3429
        %v3448 = vunpack.c.h.u8.bf16 %v3428
        %v3449 = vunpack.c.h.u8.bf16 %v3429
        %v3450 = vunpack.c.l.u8.bf16 %v3430
        %v3451 = vunpack.c.l.u8.bf16 %v3431
        %v3452 = vunpack.c.h.u8.bf16 %v3430
        %v3453 = vunpack.c.h.u8.bf16 %v3431
        %v3454 = vunpack.c.l.u8.bf16 %v3432
        %v3455 = vunpack.c.l.u8.bf16 %v3433
        %v3456 = vunpack.c.h.u8.bf16 %v3432
        %v3457 = vunpack.c.h.u8.bf16 %v3433
        %v3458 = vunpack.c.l.u8.bf16 %v3434
        %v3459 = vunpack.c.l.u8.bf16 %v3435
        %v3460 = vunpack.c.h.u8.bf16 %v3434
        %v3461 = vunpack.c.h.u8.bf16 %v3435
        %v3462 = vunpack.c.l.u8.bf16 %v3436
        %v3463 = vunpack.c.l.u8.bf16 %v3437
        %v3464 = vunpack.c.h.u8.bf16 %v3436
        %v3465 = vunpack.c.h.u8.bf16 %v3437
        %v3466 = vunpack.c.l.u8.bf16 %v3438
        %v3467 = vunpack.c.l.u8.bf16 %v3439
        %v3468 = vunpack.c.h.u8.bf16 %v3438
        %v3469 = vunpack.c.h.u8.bf16 %v3439
        %v3470 = vunpack.c.l.u8.bf16 %v3440
        %v3471 = vunpack.c.l.u8.bf16 %v3441
        %v3472 = vunpack.c.h.u8.bf16 %v3440
        %v3473 = vunpack.c.h.u8.bf16 %v3441
        %s3474 = scalar_lea.vmem %s188, 896 [#allocation2]
        %v3475 = vld [vmem:[%s3474] sm:$0xff]
        %v3476 = vld [vmem:[%s3474 + $0x8] sm:$0xff]
        %v3477 = vld [vmem:[%s3474 + $0x10] sm:$0xff]
        %v3478 = vld [vmem:[%s3474 + $0x18] sm:$0xff]
        %v3479 = vld [vmem:[%s3474 + $0x20] sm:$0xff]
        %v3480 = vld [vmem:[%s3474 + $0x28] sm:$0xff]
        %v3481 = vld [vmem:[%s3474 + $0x30] sm:$0xff]
        %v3482 = vld [vmem:[%s3474 + $0x38] sm:$0xff]
        %v3483 = vld [vmem:[%s3474 + $0x40] sm:$0xff]
        %v3484 = vld [vmem:[%s3474 + $0x48] sm:$0xff]
        %v3485 = vld [vmem:[%s3474 + $0x50] sm:$0xff]
        %v3486 = vld [vmem:[%s3474 + $0x58] sm:$0xff]
        %v3487 = vld [vmem:[%s3474 + $0x60] sm:$0xff]
        %v3488 = vld [vmem:[%s3474 + $0x68] sm:$0xff]
        %v3489 = vld [vmem:[%s3474 + $0x70] sm:$0xff]
        %v3490 = vld [vmem:[%s3474 + $0x78] sm:$0xff]
        %v3491 = vunpack.c.l.u8.bf16 %v3475
        %v3492 = vunpack.c.l.u8.bf16 %v3476
        %v3493 = vunpack.c.h.u8.bf16 %v3475
        %v3494 = vunpack.c.h.u8.bf16 %v3476
        %v3495 = vunpack.c.l.u8.bf16 %v3477
        %v3496 = vunpack.c.l.u8.bf16 %v3478
        %v3497 = vunpack.c.h.u8.bf16 %v3477
        %v3498 = vunpack.c.h.u8.bf16 %v3478
        %v3499 = vunpack.c.l.u8.bf16 %v3479
        %v3500 = vunpack.c.l.u8.bf16 %v3480
        %v3501 = vunpack.c.h.u8.bf16 %v3479
        %v3502 = vunpack.c.h.u8.bf16 %v3480
        %v3503 = vunpack.c.l.u8.bf16 %v3481
        %v3504 = vunpack.c.l.u8.bf16 %v3482
        %v3505 = vunpack.c.h.u8.bf16 %v3481
        %v3506 = vunpack.c.h.u8.bf16 %v3482
        %v3507 = vunpack.c.l.u8.bf16 %v3483
        %v3508 = vunpack.c.l.u8.bf16 %v3484
        %v3509 = vunpack.c.h.u8.bf16 %v3483
        %v3510 = vunpack.c.h.u8.bf16 %v3484
        %v3511 = vunpack.c.l.u8.bf16 %v3485
        %v3512 = vunpack.c.l.u8.bf16 %v3486
        %v3513 = vunpack.c.h.u8.bf16 %v3485
        %v3514 = vunpack.c.h.u8.bf16 %v3486
        %v3515 = vunpack.c.l.u8.bf16 %v3487
        %v3516 = vunpack.c.l.u8.bf16 %v3488
        %v3517 = vunpack.c.h.u8.bf16 %v3487
        %v3518 = vunpack.c.h.u8.bf16 %v3488
        %v3519 = vunpack.c.l.u8.bf16 %v3489
        %v3520 = vunpack.c.l.u8.bf16 %v3490
        %v3521 = vunpack.c.h.u8.bf16 %v3489
        %v3522 = vunpack.c.h.u8.bf16 %v3490
        %3523 = vmatprep.subr.bf16.mxu0 %v3443
        %3524 = vmatpush1.bf16.msra.mxu0 %v3442
        %3525 = vmatprep.subr.bf16.mxu0 %v3445
        %3526 = vmatpush1.bf16.msra.mxu0 %v3444
        %3527 = vmatprep.subr.bf16.mxu0 %v3447
        %3528 = vmatpush1.bf16.msra.mxu0 %v3446
        %3529 = vmatprep.subr.bf16.mxu0 %v3449
        %3530 = vmatpush1.bf16.msra.mxu0 %v3448
        %3531 = vmatprep.subr.bf16.mxu0 %v3451
        %3532 = vmatpush1.bf16.msra.mxu0 %v3450
        %3533 = vmatprep.subr.bf16.mxu0 %v3453
        %3534 = vmatpush1.bf16.msra.mxu0 %v3452
        %3535 = vmatprep.subr.bf16.mxu0 %v3455
        %3536 = vmatpush1.bf16.msra.mxu0 %v3454
        %3537 = vmatprep.subr.bf16.mxu0 %v3457
        %3538 = vmatpush1.bf16.msra.mxu0 %v3456
        %3539 = vmatprep.subr.bf16.mxu0 %v3459
        %3540 = vmatpush1.bf16.msra.mxu0 %v3458
        %3541 = vmatprep.subr.bf16.mxu0 %v3461
        %3542 = vmatpush1.bf16.msra.mxu0 %v3460
        %3543 = vmatprep.subr.bf16.mxu0 %v3463
        %3544 = vmatpush1.bf16.msra.mxu0 %v3462
        %3545 = vmatprep.subr.bf16.mxu0 %v3465
        %3546 = vmatpush1.bf16.msra.mxu0 %v3464
        %3547 = vmatprep.subr.bf16.mxu0 %v3467
        %3548 = vmatpush1.bf16.msra.mxu0 %v3466
        %3549 = vmatprep.subr.bf16.mxu0 %v3469
        %3550 = vmatpush1.bf16.msra.mxu0 %v3468
        %3551 = vmatprep.subr.bf16.mxu0 %v3471
        %3552 = vmatpush1.bf16.msra.mxu0 %v3470
        %3553 = vmatprep.subr.bf16.mxu0 %v3473
        %3554 = vmatpush1.bf16.msra.mxu0 %v3472
        %3555 = vmatprep.mubr.bf16.mxu0 %v466
        %3556 = vmatmul.mubr.bf16.gmra.mrb[0].mxu0 %v465
        %v3557 = vpop.f32.mrb[0].mxu0
        %v3558 = vadd.f32 0.0, %v3557
        %v3559 = vpop.f32.mrb[0].mxu0
        %v3560 = vadd.f32 0.0, %v3559
        %v3561 = vpop.f32.mrb[0].mxu0
        %v3562 = vadd.f32 0.0, %v3561
        %v3563 = vpop.f32.mrb[0].mxu0
        %v3564 = vadd.f32 0.0, %v3563
        %3565 = vmatprep.mubr.bf16.mxu0 %v468
        %3566 = vmatmul.mubr.bf16.gmra.mrb[0].mxu0 %v467
        %v3567 = vpop.f32.mrb[0].mxu0
        %v3568 = vadd.f32 0.0, %v3567
        %v3569 = vpop.f32.mrb[0].mxu0
        %v3570 = vadd.f32 0.0, %v3569
        %v3571 = vpop.f32.mrb[0].mxu0
        %v3572 = vadd.f32 0.0, %v3571
        %v3573 = vpop.f32.mrb[0].mxu0
        %v3574 = vadd.f32 0.0, %v3573
        %3575 = vmatprep.mubr.bf16.mxu0 %v470
        %3576 = vmatmul.mubr.bf16.gmra.mrb[0].mxu0 %v469
        %v3577 = vpop.f32.mrb[0].mxu0
        %v3578 = vadd.f32 0.0, %v3577
        %v3579 = vpop.f32.mrb[0].mxu0
        %v3580 = vadd.f32 0.0, %v3579
        %v3581 = vpop.f32.mrb[0].mxu0
        %v3582 = vadd.f32 0.0, %v3581
        %v3583 = vpop.f32.mrb[0].mxu0
        %v3584 = vadd.f32 0.0, %v3583
        %3585 = vmatprep.mubr.bf16.mxu0 %v472
        %3586 = vmatmul.mubr.bf16.gmra.mrb[0].mxu0 %v471
        %v3587 = vpop.f32.mrb[0].mxu0
        %v3588 = vadd.f32 0.0, %v3587
        %v3589 = vpop.f32.mrb[0].mxu0
        %v3590 = vadd.f32 0.0, %v3589
        %v3591 = vpop.f32.mrb[0].mxu0
        %v3592 = vadd.f32 0.0, %v3591
        %v3593 = vpop.f32.mrb[0].mxu0
        %v3594 = vadd.f32 0.0, %v3593
        %3595 = vmatprep.mubr.bf16.mxu0 %v474
        %3596 = vmatmul.mubr.bf16.gmra.mrb[0].mxu0 %v473
        %v3597 = vpop.f32.mrb[0].mxu0
        %v3598 = vadd.f32 0.0, %v3597
        %v3599 = vpop.f32.mrb[0].mxu0
        %v3600 = vadd.f32 0.0, %v3599
        %v3601 = vpop.f32.mrb[0].mxu0
        %v3602 = vadd.f32 0.0, %v3601
        %v3603 = vpop.f32.mrb[0].mxu0
        %v3604 = vadd.f32 0.0, %v3603
        %3605 = vmatprep.mubr.bf16.mxu0 %v476
        %3606 = vmatmul.mubr.bf16.gmra.mrb[0].mxu0 %v475
        %v3607 = vpop.f32.mrb[0].mxu0
        %v3608 = vadd.f32 0.0, %v3607
        %v3609 = vpop.f32.mrb[0].mxu0
        %v3610 = vadd.f32 0.0, %v3609
        %v3611 = vpop.f32.mrb[0].mxu0
        %v3612 = vadd.f32 0.0, %v3611
        %v3613 = vpop.f32.mrb[0].mxu0
        %v3614 = vadd.f32 0.0, %v3613
        %3615 = vmatprep.mubr.bf16.mxu0 %v478
        %3616 = vmatmul.mubr.bf16.gmra.mrb[0].mxu0 %v477
        %v3617 = vpop.f32.mrb[0].mxu0
        %v3618 = vadd.f32 0.0, %v3617
        %v3619 = vpop.f32.mrb[0].mxu0
        %v3620 = vadd.f32 0.0, %v3619
        %v3621 = vpop.f32.mrb[0].mxu0
        %v3622 = vadd.f32 0.0, %v3621
        %v3623 = vpop.f32.mrb[0].mxu0
        %v3624 = vadd.f32 0.0, %v3623
        %3625 = vmatprep.mubr.bf16.mxu0 %v480
        %3626 = vmatmul.mubr.bf16.gmra.mrb[0].mxu0 %v479
        %v3627 = vpop.f32.mrb[0].mxu0
        %v3628 = vadd.f32 0.0, %v3627
        %v3629 = vpop.f32.mrb[0].mxu0
        %v3630 = vadd.f32 0.0, %v3629
        %v3631 = vpop.f32.mrb[0].mxu0
        %v3632 = vadd.f32 0.0, %v3631
        %v3633 = vpop.f32.mrb[0].mxu0
        %v3634 = vadd.f32 0.0, %v3633
        %3635 = vdwg.mxu0
        %3636 = vmatprep.subr.bf16.mxu0 %v3492
        %3637 = vmatpush1.bf16.msra.mxu0 %v3491
        %3638 = vmatprep.subr.bf16.mxu0 %v3494
        %3639 = vmatpush1.bf16.msra.mxu0 %v3493
        %3640 = vmatprep.subr.bf16.mxu0 %v3496
        %3641 = vmatpush1.bf16.msra.mxu0 %v3495
        %3642 = vmatprep.subr.bf16.mxu0 %v3498
        %3643 = vmatpush1.bf16.msra.mxu0 %v3497
        %3644 = vmatprep.subr.bf16.mxu0 %v3500
        %3645 = vmatpush1.bf16.msra.mxu0 %v3499
        %3646 = vmatprep.subr.bf16.mxu0 %v3502
        %3647 = vmatpush1.bf16.msra.mxu0 %v3501
        %3648 = vmatprep.subr.bf16.mxu0 %v3504
        %3649 = vmatpush1.bf16.msra.mxu0 %v3503
        %3650 = vmatprep.subr.bf16.mxu0 %v3506
        %3651 = vmatpush1.bf16.msra.mxu0 %v3505
        %3652 = vmatprep.subr.bf16.mxu0 %v3508
        %3653 = vmatpush1.bf16.msra.mxu0 %v3507
        %3654 = vmatprep.subr.bf16.mxu0 %v3510
        %3655 = vmatpush1.bf16.msra.mxu0 %v3509
        %3656 = vmatprep.subr.bf16.mxu0 %v3512
        %3657 = vmatpush1.bf16.msra.mxu0 %v3511
        %3658 = vmatprep.subr.bf16.mxu0 %v3514
        %3659 = vmatpush1.bf16.msra.mxu0 %v3513
        %3660 = vmatprep.subr.bf16.mxu0 %v3516
        %3661 = vmatpush1.bf16.msra.mxu0 %v3515
        %3662 = vmatprep.subr.bf16.mxu0 %v3518
        %3663 = vmatpush1.bf16.msra.mxu0 %v3517
        %3664 = vmatprep.subr.bf16.mxu0 %v3520
        %3665 = vmatpush1.bf16.msra.mxu0 %v3519
        %3666 = vmatprep.subr.bf16.mxu0 %v3522
        %3667 = vmatpush1.bf16.msra.mxu0 %v3521
        %3668 = vmatprep.mubr.bf16.mxu0 %v659
        %3669 = vmatmul.mubr.bf16.gmra.mrb[0].mxu0 %v658
        %v3670 = vpop.f32.mrb[0].mxu0
        %v3671 = vadd.f32 0.0, %v3670
        %v3672 = vpop.f32.mrb[0].mxu0
        %v3673 = vadd.f32 0.0, %v3672
        %v3674 = vpop.f32.mrb[0].mxu0
        %v3675 = vadd.f32 0.0, %v3674
        %v3676 = vpop.f32.mrb[0].mxu0
        %v3677 = vadd.f32 0.0, %v3676
        %3678 = vmatprep.mubr.bf16.mxu0 %v661
        %3679 = vmatmul.mubr.bf16.gmra.mrb[0].mxu0 %v660
        %v3680 = vpop.f32.mrb[0].mxu0
        %v3681 = vadd.f32 0.0, %v3680
        %v3682 = vpop.f32.mrb[0].mxu0
        %v3683 = vadd.f32 0.0, %v3682
        %v3684 = vpop.f32.mrb[0].mxu0
        %v3685 = vadd.f32 0.0, %v3684
        %v3686 = vpop.f32.mrb[0].mxu0
        %v3687 = vadd.f32 0.0, %v3686
        %3688 = vmatprep.mubr.bf16.mxu0 %v663
        %3689 = vmatmul.mubr.bf16.gmra.mrb[0].mxu0 %v662
        %v3690 = vpop.f32.mrb[0].mxu0
        %v3691 = vadd.f32 0.0, %v3690
        %v3692 = vpop.f32.mrb[0].mxu0
        %v3693 = vadd.f32 0.0, %v3692
        %v3694 = vpop.f32.mrb[0].mxu0
        %v3695 = vadd.f32 0.0, %v3694
        %v3696 = vpop.f32.mrb[0].mxu0
        %v3697 = vadd.f32 0.0, %v3696
        %3698 = vmatprep.mubr.bf16.mxu0 %v665
        %3699 = vmatmul.mubr.bf16.gmra.mrb[0].mxu0 %v664
        %v3700 = vpop.f32.mrb[0].mxu0
        %v3701 = vadd.f32 0.0, %v3700
        %v3702 = vpop.f32.mrb[0].mxu0
        %v3703 = vadd.f32 0.0, %v3702
        %v3704 = vpop.f32.mrb[0].mxu0
        %v3705 = vadd.f32 0.0, %v3704
        %v3706 = vpop.f32.mrb[0].mxu0
        %v3707 = vadd.f32 0.0, %v3706
        %3708 = vmatprep.mubr.bf16.mxu0 %v667
        %3709 = vmatmul.mubr.bf16.gmra.mrb[0].mxu0 %v666
        %v3710 = vpop.f32.mrb[0].mxu0
        %v3711 = vadd.f32 0.0, %v3710
        %v3712 = vpop.f32.mrb[0].mxu0
        %v3713 = vadd.f32 0.0, %v3712
        %v3714 = vpop.f32.mrb[0].mxu0
        %v3715 = vadd.f32 0.0, %v3714
        %v3716 = vpop.f32.mrb[0].mxu0
        %v3717 = vadd.f32 0.0, %v3716
        %3718 = vmatprep.mubr.bf16.mxu0 %v669
        %3719 = vmatmul.mubr.bf16.gmra.mrb[0].mxu0 %v668
        %v3720 = vpop.f32.mrb[0].mxu0
        %v3721 = vadd.f32 0.0, %v3720
        %v3722 = vpop.f32.mrb[0].mxu0
        %v3723 = vadd.f32 0.0, %v3722
        %v3724 = vpop.f32.mrb[0].mxu0
        %v3725 = vadd.f32 0.0, %v3724
        %v3726 = vpop.f32.mrb[0].mxu0
        %v3727 = vadd.f32 0.0, %v3726
        %3728 = vmatprep.mubr.bf16.mxu0 %v671
        %3729 = vmatmul.mubr.bf16.gmra.mrb[0].mxu0 %v670
        %v3730 = vpop.f32.mrb[0].mxu0
        %v3731 = vadd.f32 0.0, %v3730
        %v3732 = vpop.f32.mrb[0].mxu0
        %v3733 = vadd.f32 0.0, %v3732
        %v3734 = vpop.f32.mrb[0].mxu0
        %v3735 = vadd.f32 0.0, %v3734
        %v3736 = vpop.f32.mrb[0].mxu0
        %v3737 = vadd.f32 0.0, %v3736
        %3738 = vmatprep.mubr.bf16.mxu0 %v673
        %3739 = vmatmul.mubr.bf16.gmra.mrb[0].mxu0 %v672
        %v3740 = vpop.f32.mrb[0].mxu0
        %v3741 = vadd.f32 0.0, %v3740
        %v3742 = vpop.f32.mrb[0].mxu0
        %v3743 = vadd.f32 0.0, %v3742
        %v3744 = vpop.f32.mrb[0].mxu0
        %v3745 = vadd.f32 0.0, %v3744
        %v3746 = vpop.f32.mrb[0].mxu0
        %v3747 = vadd.f32 0.0, %v3746
        %3748 = vdwg.mxu0
        %v3749 = vpack.c.bf16 %v3562, %v3558
        %v3750 = vpack.c.bf16 %v3564, %v3560
        %v3751 = vpack.c.bf16 %v3572, %v3568
        %v3752 = vpack.c.bf16 %v3574, %v3570
        %v3753 = vpack.c.bf16 %v3582, %v3578
        %v3754 = vpack.c.bf16 %v3584, %v3580
        %v3755 = vpack.c.bf16 %v3592, %v3588
        %v3756 = vpack.c.bf16 %v3594, %v3590
        %v3757 = vpack.c.bf16 %v3602, %v3598
        %v3758 = vpack.c.bf16 %v3604, %v3600
        %v3759 = vpack.c.bf16 %v3612, %v3608
        %v3760 = vpack.c.bf16 %v3614, %v3610
        %v3761 = vpack.c.bf16 %v3622, %v3618
        %v3762 = vpack.c.bf16 %v3624, %v3620
        %v3763 = vpack.c.bf16 %v3632, %v3628
        %v3764 = vpack.c.bf16 %v3634, %v3630
        %v3765 = vpack.c.bf16 %v3675, %v3671
        %v3766 = vpack.c.bf16 %v3677, %v3673
        %v3767 = vpack.c.bf16 %v3685, %v3681
        %v3768 = vpack.c.bf16 %v3687, %v3683
        %v3769 = vpack.c.bf16 %v3695, %v3691
        %v3770 = vpack.c.bf16 %v3697, %v3693
        %v3771 = vpack.c.bf16 %v3705, %v3701
        %v3772 = vpack.c.bf16 %v3707, %v3703
        %v3773 = vpack.c.bf16 %v3715, %v3711
        %v3774 = vpack.c.bf16 %v3717, %v3713
        %v3775 = vpack.c.bf16 %v3725, %v3721
        %v3776 = vpack.c.bf16 %v3727, %v3723
        %v3777 = vpack.c.bf16 %v3735, %v3731
        %v3778 = vpack.c.bf16 %v3737, %v3733
        %v3779 = vpack.c.bf16 %v3745, %v3741
        %v3780 = vpack.c.bf16 %v3747, %v3743
        %v3781 = vunpack.c.l.bf16 %v3749
        %v3782 = vunpack.c.l.bf16 %v3750
        %v3783 = vunpack.c.h.bf16 %v3749
        %v3784 = vunpack.c.h.bf16 %v3750
        %v3785 = vunpack.c.l.bf16 %v3751
        %v3786 = vunpack.c.l.bf16 %v3752
        %v3787 = vunpack.c.h.bf16 %v3751
        %v3788 = vunpack.c.h.bf16 %v3752
        %v3789 = vunpack.c.l.bf16 %v3753
        %v3790 = vunpack.c.l.bf16 %v3754
        %v3791 = vunpack.c.h.bf16 %v3753
        %v3792 = vunpack.c.h.bf16 %v3754
        %v3793 = vunpack.c.l.bf16 %v3755
        %v3794 = vunpack.c.l.bf16 %v3756
        %v3795 = vunpack.c.h.bf16 %v3755
        %v3796 = vunpack.c.h.bf16 %v3756
        %v3797 = vunpack.c.l.bf16 %v3757
        %v3798 = vunpack.c.l.bf16 %v3758
        %v3799 = vunpack.c.h.bf16 %v3757
        %v3800 = vunpack.c.h.bf16 %v3758
        %v3801 = vunpack.c.l.bf16 %v3759
        %v3802 = vunpack.c.l.bf16 %v3760
        %v3803 = vunpack.c.h.bf16 %v3759
        %v3804 = vunpack.c.h.bf16 %v3760
        %v3805 = vunpack.c.l.bf16 %v3761
        %v3806 = vunpack.c.l.bf16 %v3762
        %v3807 = vunpack.c.h.bf16 %v3761
        %v3808 = vunpack.c.h.bf16 %v3762
        %v3809 = vunpack.c.l.bf16 %v3763
        %v3810 = vunpack.c.l.bf16 %v3764
        %v3811 = vunpack.c.h.bf16 %v3763
        %v3812 = vunpack.c.h.bf16 %v3764
        %v3813 = vunpack.c.l.bf16 %v3765
        %v3814 = vunpack.c.l.bf16 %v3766
        %v3815 = vunpack.c.h.bf16 %v3765
        %v3816 = vunpack.c.h.bf16 %v3766
        %v3817 = vunpack.c.l.bf16 %v3767
        %v3818 = vunpack.c.l.bf16 %v3768
        %v3819 = vunpack.c.h.bf16 %v3767
        %v3820 = vunpack.c.h.bf16 %v3768
        %v3821 = vunpack.c.l.bf16 %v3769
        %v3822 = vunpack.c.l.bf16 %v3770
        %v3823 = vunpack.c.h.bf16 %v3769
        %v3824 = vunpack.c.h.bf16 %v3770
        %v3825 = vunpack.c.l.bf16 %v3771
        %v3826 = vunpack.c.l.bf16 %v3772
        %v3827 = vunpack.c.h.bf16 %v3771
        %v3828 = vunpack.c.h.bf16 %v3772
        %v3829 = vunpack.c.l.bf16 %v3773
        %v3830 = vunpack.c.l.bf16 %v3774
        %v3831 = vunpack.c.h.bf16 %v3773
        %v3832 = vunpack.c.h.bf16 %v3774
        %v3833 = vunpack.c.l.bf16 %v3775
        %v3834 = vunpack.c.l.bf16 %v3776
        %v3835 = vunpack.c.h.bf16 %v3775
        %v3836 = vunpack.c.h.bf16 %v3776
        %v3837 = vunpack.c.l.bf16 %v3777
        %v3838 = vunpack.c.l.bf16 %v3778
        %v3839 = vunpack.c.h.bf16 %v3777
        %v3840 = vunpack.c.h.bf16 %v3778
        %v3841 = vunpack.c.l.bf16 %v3779
        %v3842 = vunpack.c.l.bf16 %v3780
        %v3843 = vunpack.c.h.bf16 %v3779
        %v3844 = vunpack.c.h.bf16 %v3780
        %v3845 = vsub.f32 %v3558, %v3781
        %v3846 = vsub.f32 %v3560, %v3782
        %v3847 = vsub.f32 %v3562, %v3783
        %v3848 = vsub.f32 %v3564, %v3784
        %v3849 = vsub.f32 %v3568, %v3785
        %v3850 = vsub.f32 %v3570, %v3786
        %v3851 = vsub.f32 %v3572, %v3787
        %v3852 = vsub.f32 %v3574, %v3788
        %v3853 = vsub.f32 %v3578, %v3789
        %v3854 = vsub.f32 %v3580, %v3790
        %v3855 = vsub.f32 %v3582, %v3791
        %v3856 = vsub.f32 %v3584, %v3792
        %v3857 = vsub.f32 %v3588, %v3793
        %v3858 = vsub.f32 %v3590, %v3794
        %v3859 = vsub.f32 %v3592, %v3795
        %v3860 = vsub.f32 %v3594, %v3796
        %v3861 = vsub.f32 %v3598, %v3797
        %v3862 = vsub.f32 %v3600, %v3798
        %v3863 = vsub.f32 %v3602, %v3799
        %v3864 = vsub.f32 %v3604, %v3800
        %v3865 = vsub.f32 %v3608, %v3801
        %v3866 = vsub.f32 %v3610, %v3802
        %v3867 = vsub.f32 %v3612, %v3803
        %v3868 = vsub.f32 %v3614, %v3804
        %v3869 = vsub.f32 %v3618, %v3805
        %v3870 = vsub.f32 %v3620, %v3806
        %v3871 = vsub.f32 %v3622, %v3807
        %v3872 = vsub.f32 %v3624, %v3808
        %v3873 = vsub.f32 %v3628, %v3809
        %v3874 = vsub.f32 %v3630, %v3810
        %v3875 = vsub.f32 %v3632, %v3811
        %v3876 = vsub.f32 %v3634, %v3812
        %v3877 = vsub.f32 %v3671, %v3813
        %v3878 = vsub.f32 %v3673, %v3814
        %v3879 = vsub.f32 %v3675, %v3815
        %v3880 = vsub.f32 %v3677, %v3816
        %v3881 = vsub.f32 %v3681, %v3817
        %v3882 = vsub.f32 %v3683, %v3818
        %v3883 = vsub.f32 %v3685, %v3819
        %v3884 = vsub.f32 %v3687, %v3820
        %v3885 = vsub.f32 %v3691, %v3821
        %v3886 = vsub.f32 %v3693, %v3822
        %v3887 = vsub.f32 %v3695, %v3823
        %v3888 = vsub.f32 %v3697, %v3824
        %v3889 = vsub.f32 %v3701, %v3825
        %v3890 = vsub.f32 %v3703, %v3826
        %v3891 = vsub.f32 %v3705, %v3827
        %v3892 = vsub.f32 %v3707, %v3828
        %v3893 = vsub.f32 %v3711, %v3829
        %v3894 = vsub.f32 %v3713, %v3830
        %v3895 = vsub.f32 %v3715, %v3831
        %v3896 = vsub.f32 %v3717, %v3832
        %v3897 = vsub.f32 %v3721, %v3833
        %v3898 = vsub.f32 %v3723, %v3834
        %v3899 = vsub.f32 %v3725, %v3835
        %v3900 = vsub.f32 %v3727, %v3836
        %v3901 = vsub.f32 %v3731, %v3837
        %v3902 = vsub.f32 %v3733, %v3838
        %v3903 = vsub.f32 %v3735, %v3839
        %v3904 = vsub.f32 %v3737, %v3840
        %v3905 = vsub.f32 %v3741, %v3841
        %v3906 = vsub.f32 %v3743, %v3842
        %v3907 = vsub.f32 %v3745, %v3843
        %v3908 = vsub.f32 %v3747, %v3844
        %v3909 = vpack.c.bf16 %v3847, %v3845
        %v3910 = vpack.c.bf16 %v3848, %v3846
        %v3911 = vpack.c.bf16 %v3851, %v3849
        %v3912 = vpack.c.bf16 %v3852, %v3850
        %v3913 = vpack.c.bf16 %v3855, %v3853
        %v3914 = vpack.c.bf16 %v3856, %v3854
        %v3915 = vpack.c.bf16 %v3859, %v3857
        %v3916 = vpack.c.bf16 %v3860, %v3858
        %v3917 = vpack.c.bf16 %v3863, %v3861
        %v3918 = vpack.c.bf16 %v3864, %v3862
        %v3919 = vpack.c.bf16 %v3867, %v3865
        %v3920 = vpack.c.bf16 %v3868, %v3866
        %v3921 = vpack.c.bf16 %v3871, %v3869
        %v3922 = vpack.c.bf16 %v3872, %v3870
        %v3923 = vpack.c.bf16 %v3875, %v3873
        %v3924 = vpack.c.bf16 %v3876, %v3874
        %v3925 = vpack.c.bf16 %v3879, %v3877
        %v3926 = vpack.c.bf16 %v3880, %v3878
        %v3927 = vpack.c.bf16 %v3883, %v3881
        %v3928 = vpack.c.bf16 %v3884, %v3882
        %v3929 = vpack.c.bf16 %v3887, %v3885
        %v3930 = vpack.c.bf16 %v3888, %v3886
        %v3931 = vpack.c.bf16 %v3891, %v3889
        %v3932 = vpack.c.bf16 %v3892, %v3890
        %v3933 = vpack.c.bf16 %v3895, %v3893
        %v3934 = vpack.c.bf16 %v3896, %v3894
        %v3935 = vpack.c.bf16 %v3899, %v3897
        %v3936 = vpack.c.bf16 %v3900, %v3898
        %v3937 = vpack.c.bf16 %v3903, %v3901
        %v3938 = vpack.c.bf16 %v3904, %v3902
        %v3939 = vpack.c.bf16 %v3907, %v3905
        %v3940 = vpack.c.bf16 %v3908, %v3906
        %3941 = vmatprep.subr.bf16.mxu0 0
        %3942 = vmatpush1.bf16.msra.mxu0 %v1993
        %3943 = vmatprep.subr.bf16.mxu0 0
        %3944 = vmatpush1.bf16.msra.mxu0 %v1994
        %3945 = vmatprep.subr.bf16.mxu0 0
        %3946 = vmatpush1.bf16.msra.mxu0 %v1995
        %3947 = vmatprep.subr.bf16.mxu0 0
        %3948 = vmatpush1.bf16.msra.mxu0 %v1996
        %3949 = vmatprep.subr.bf16.mxu0 0
        %3950 = vmatpush1.bf16.msra.mxu0 %v1997
        %3951 = vmatprep.subr.bf16.mxu0 0
        %3952 = vmatpush1.bf16.msra.mxu0 %v1998
        %3953 = vmatprep.subr.bf16.mxu0 0
        %3954 = vmatpush1.bf16.msra.mxu0 %v1999
        %3955 = vmatprep.subr.bf16.mxu0 0
        %3956 = vmatpush1.bf16.msra.mxu0 %v2000
        %3957 = vmatprep.subr.bf16.mxu0 0
        %3958 = vmatpush1.bf16.msra.mxu0 %v2001
        %3959 = vmatprep.subr.bf16.mxu0 0
        %3960 = vmatpush1.bf16.msra.mxu0 %v2002
        %3961 = vmatprep.subr.bf16.mxu0 0
        %3962 = vmatpush1.bf16.msra.mxu0 %v2003
        %3963 = vmatprep.subr.bf16.mxu0 0
        %3964 = vmatpush1.bf16.msra.mxu0 %v2004
        %3965 = vmatprep.subr.bf16.mxu0 0
        %3966 = vmatpush1.bf16.msra.mxu0 %v2005
        %3967 = vmatprep.subr.bf16.mxu0 0
        %3968 = vmatpush1.bf16.msra.mxu0 %v2006
        %3969 = vmatprep.subr.bf16.mxu0 0
        %3970 = vmatpush1.bf16.msra.mxu0 %v2007
        %3971 = vmatprep.subr.bf16.mxu0 0
        %3972 = vmatpush1.bf16.msra.mxu0 %v2008
        %3973 = vmatprep.mubr.bf16.mxu0 %v3910
        %3974 = vmatmul.mubr.bf16.gmra.mrb[0].mxu0 %v3909
        %v3975 = vpop.f32.mrb[0].mxu0
        %v3976 = vadd.f32 0.0, %v3975
        %v3977 = vpop.f32.mrb[0].mxu0
        %v3978 = vpop.f32.mrb[0].mxu0
        %v3979 = vadd.f32 0.0, %v3978
        %v3980 = vpop.f32.mrb[0].mxu0
        %3981 = vmatprep.mubr.bf16.mxu0 %v3912
        %3982 = vmatmul.mubr.bf16.gmra.mrb[0].mxu0 %v3911
        %v3983 = vpop.f32.mrb[0].mxu0
        %v3984 = vadd.f32 0.0, %v3983
        %v3985 = vpop.f32.mrb[0].mxu0
        %v3986 = vpop.f32.mrb[0].mxu0
        %v3987 = vadd.f32 0.0, %v3986
        %v3988 = vpop.f32.mrb[0].mxu0
        %3989 = vmatprep.mubr.bf16.mxu0 %v3914
        %3990 = vmatmul.mubr.bf16.gmra.mrb[0].mxu0 %v3913
        %v3991 = vpop.f32.mrb[0].mxu0
        %v3992 = vadd.f32 0.0, %v3991
        %v3993 = vpop.f32.mrb[0].mxu0
        %v3994 = vpop.f32.mrb[0].mxu0
        %v3995 = vadd.f32 0.0, %v3994
        %v3996 = vpop.f32.mrb[0].mxu0
        %3997 = vmatprep.mubr.bf16.mxu0 %v3916
        %3998 = vmatmul.mubr.bf16.gmra.mrb[0].mxu0 %v3915
        %v3999 = vpop.f32.mrb[0].mxu0
        %v4000 = vadd.f32 0.0, %v3999
        %v4001 = vpop.f32.mrb[0].mxu0
        %v4002 = vpop.f32.mrb[0].mxu0
        %v4003 = vadd.f32 0.0, %v4002
        %v4004 = vpop.f32.mrb[0].mxu0
        %4005 = vmatprep.mubr.bf16.mxu0 %v3918
        %4006 = vmatmul.mubr.bf16.gmra.mrb[0].mxu0 %v3917
        %v4007 = vpop.f32.mrb[0].mxu0
        %v4008 = vadd.f32 0.0, %v4007
        %v4009 = vpop.f32.mrb[0].mxu0
        %v4010 = vpop.f32.mrb[0].mxu0
        %v4011 = vadd.f32 0.0, %v4010
        %v4012 = vpop.f32.mrb[0].mxu0
        %4013 = vmatprep.mubr.bf16.mxu0 %v3920
        %4014 = vmatmul.mubr.bf16.gmra.mrb[0].mxu0 %v3919
        %v4015 = vpop.f32.mrb[0].mxu0
        %v4016 = vadd.f32 0.0, %v4015
        %v4017 = vpop.f32.mrb[0].mxu0
        %v4018 = vpop.f32.mrb[0].mxu0
        %v4019 = vadd.f32 0.0, %v4018
        %v4020 = vpop.f32.mrb[0].mxu0
        %4021 = vmatprep.mubr.bf16.mxu0 %v3922
        %4022 = vmatmul.mubr.bf16.gmra.mrb[0].mxu0 %v3921
        %v4023 = vpop.f32.mrb[0].mxu0
        %v4024 = vadd.f32 0.0, %v4023
        %v4025 = vpop.f32.mrb[0].mxu0
        %v4026 = vpop.f32.mrb[0].mxu0
        %v4027 = vadd.f32 0.0, %v4026
        %v4028 = vpop.f32.mrb[0].mxu0
        %4029 = vmatprep.mubr.bf16.mxu0 %v3924
        %4030 = vmatmul.mubr.bf16.gmra.mrb[0].mxu0 %v3923
        %v4031 = vpop.f32.mrb[0].mxu0
        %v4032 = vadd.f32 0.0, %v4031
        %v4033 = vpop.f32.mrb[0].mxu0
        %v4034 = vpop.f32.mrb[0].mxu0
        %v4035 = vadd.f32 0.0, %v4034
        %v4036 = vpop.f32.mrb[0].mxu0
        %4037 = vmatprep.mubr.bf16.mxu0 %v3926
        %4038 = vmatmul.mubr.bf16.gmra.mrb[0].mxu0 %v3925
        %v4039 = vpop.f32.mrb[0].mxu0
        %v4040 = vadd.f32 0.0, %v4039
        %v4041 = vpop.f32.mrb[0].mxu0
        %v4042 = vpop.f32.mrb[0].mxu0
        %v4043 = vadd.f32 0.0, %v4042
        %v4044 = vpop.f32.mrb[0].mxu0
        %4045 = vmatprep.mubr.bf16.mxu0 %v3928
        %4046 = vmatmul.mubr.bf16.gmra.mrb[0].mxu0 %v3927
        %v4047 = vpop.f32.mrb[0].mxu0
        %v4048 = vadd.f32 0.0, %v4047
        %v4049 = vpop.f32.mrb[0].mxu0
        %v4050 = vpop.f32.mrb[0].mxu0
        %v4051 = vadd.f32 0.0, %v4050
        %v4052 = vpop.f32.mrb[0].mxu0
        %4053 = vmatprep.mubr.bf16.mxu0 %v3930
        %4054 = vmatmul.mubr.bf16.gmra.mrb[0].mxu0 %v3929
        %v4055 = vpop.f32.mrb[0].mxu0
        %v4056 = vadd.f32 0.0, %v4055
        %v4057 = vpop.f32.mrb[0].mxu0
        %v4058 = vpop.f32.mrb[0].mxu0
        %v4059 = vadd.f32 0.0, %v4058
        %v4060 = vpop.f32.mrb[0].mxu0
        %4061 = vmatprep.mubr.bf16.mxu0 %v3932
        %4062 = vmatmul.mubr.bf16.gmra.mrb[0].mxu0 %v3931
        %v4063 = vpop.f32.mrb[0].mxu0
        %v4064 = vadd.f32 0.0, %v4063
        %v4065 = vpop.f32.mrb[0].mxu0
        %v4066 = vpop.f32.mrb[0].mxu0
        %v4067 = vadd.f32 0.0, %v4066
        %v4068 = vpop.f32.mrb[0].mxu0
        %4069 = vmatprep.mubr.bf16.mxu0 %v3934
        %4070 = vmatmul.mubr.bf16.gmra.mrb[0].mxu0 %v3933
        %v4071 = vpop.f32.mrb[0].mxu0
        %v4072 = vadd.f32 0.0, %v4071
        %v4073 = vpop.f32.mrb[0].mxu0
        %v4074 = vpop.f32.mrb[0].mxu0
        %v4075 = vadd.f32 0.0, %v4074
        %v4076 = vpop.f32.mrb[0].mxu0
        %4077 = vmatprep.mubr.bf16.mxu0 %v3936
        %4078 = vmatmul.mubr.bf16.gmra.mrb[0].mxu0 %v3935
        %v4079 = vpop.f32.mrb[0].mxu0
        %v4080 = vadd.f32 0.0, %v4079
        %v4081 = vpop.f32.mrb[0].mxu0
        %v4082 = vpop.f32.mrb[0].mxu0
        %v4083 = vadd.f32 0.0, %v4082
        %v4084 = vpop.f32.mrb[0].mxu0
        %4085 = vmatprep.mubr.bf16.mxu0 %v3938
        %4086 = vmatmul.mubr.bf16.gmra.mrb[0].mxu0 %v3937
        %v4087 = vpop.f32.mrb[0].mxu0
        %v4088 = vadd.f32 0.0, %v4087
        %v4089 = vpop.f32.mrb[0].mxu0
        %v4090 = vpop.f32.mrb[0].mxu0
        %v4091 = vadd.f32 0.0, %v4090
        %v4092 = vpop.f32.mrb[0].mxu0
        %4093 = vmatprep.mubr.bf16.mxu0 %v3940
        %4094 = vmatmul.mubr.bf16.gmra.mrb[0].mxu0 %v3939
        %v4095 = vpop.f32.mrb[0].mxu0
        %v4096 = vadd.f32 0.0, %v4095
        %v4097 = vpop.f32.mrb[0].mxu0
        %v4098 = vpop.f32.mrb[0].mxu0
        %v4099 = vadd.f32 0.0, %v4098
        %v4100 = vpop.f32.mrb[0].mxu0
        %4101 = vdwg.mxu0
        %4102 = vmatprep.subr.bf16.mxu0 0
        %4103 = vmatpush1.bf16.msra.mxu0 %v1993
        %4104 = vmatprep.subr.bf16.mxu0 0
        %4105 = vmatpush1.bf16.msra.mxu0 %v1994
        %4106 = vmatprep.subr.bf16.mxu0 0
        %4107 = vmatpush1.bf16.msra.mxu0 %v1995
        %4108 = vmatprep.subr.bf16.mxu0 0
        %4109 = vmatpush1.bf16.msra.mxu0 %v1996
        %4110 = vmatprep.subr.bf16.mxu0 0
        %4111 = vmatpush1.bf16.msra.mxu0 %v1997
        %4112 = vmatprep.subr.bf16.mxu0 0
        %4113 = vmatpush1.bf16.msra.mxu0 %v1998
        %4114 = vmatprep.subr.bf16.mxu0 0
        %4115 = vmatpush1.bf16.msra.mxu0 %v1999
        %4116 = vmatprep.subr.bf16.mxu0 0
        %4117 = vmatpush1.bf16.msra.mxu0 %v2000
        %4118 = vmatprep.subr.bf16.mxu0 0
        %4119 = vmatpush1.bf16.msra.mxu0 %v2001
        %4120 = vmatprep.subr.bf16.mxu0 0
        %4121 = vmatpush1.bf16.msra.mxu0 %v2002
        %4122 = vmatprep.subr.bf16.mxu0 0
        %4123 = vmatpush1.bf16.msra.mxu0 %v2003
        %4124 = vmatprep.subr.bf16.mxu0 0
        %4125 = vmatpush1.bf16.msra.mxu0 %v2004
        %4126 = vmatprep.subr.bf16.mxu0 0
        %4127 = vmatpush1.bf16.msra.mxu0 %v2005
        %4128 = vmatprep.subr.bf16.mxu0 0
        %4129 = vmatpush1.bf16.msra.mxu0 %v2006
        %4130 = vmatprep.subr.bf16.mxu0 0
        %4131 = vmatpush1.bf16.msra.mxu0 %v2007
        %4132 = vmatprep.subr.bf16.mxu0 0
        %4133 = vmatpush1.bf16.msra.mxu0 %v2008
        %4134 = vmatprep.mubr.bf16.mxu0 %v3750
        %4135 = vmatmul.mubr.bf16.gmra.mrb[0].mxu0 %v3749
        %v4136 = vpop.f32.mrb[0].mxu0
        %v4137 = vadd.f32 %v3976, %v4136
        %v4138 = vpop.f32.mrb[0].mxu0
        %v4139 = vpop.f32.mrb[0].mxu0
        %v4140 = vadd.f32 %v3979, %v4139
        %v4141 = vpop.f32.mrb[0].mxu0
        %4142 = vmatprep.mubr.bf16.mxu0 %v3752
        %4143 = vmatmul.mubr.bf16.gmra.mrb[0].mxu0 %v3751
        %v4144 = vpop.f32.mrb[0].mxu0
        %v4145 = vadd.f32 %v3984, %v4144
        %v4146 = vpop.f32.mrb[0].mxu0
        %v4147 = vpop.f32.mrb[0].mxu0
        %v4148 = vadd.f32 %v3987, %v4147
        %v4149 = vpop.f32.mrb[0].mxu0
        %4150 = vmatprep.mubr.bf16.mxu0 %v3754
        %4151 = vmatmul.mubr.bf16.gmra.mrb[0].mxu0 %v3753
        %v4152 = vpop.f32.mrb[0].mxu0
        %v4153 = vadd.f32 %v3992, %v4152
        %v4154 = vpop.f32.mrb[0].mxu0
        %v4155 = vpop.f32.mrb[0].mxu0
        %v4156 = vadd.f32 %v3995, %v4155
        %v4157 = vpop.f32.mrb[0].mxu0
        %4158 = vmatprep.mubr.bf16.mxu0 %v3756
        %4159 = vmatmul.mubr.bf16.gmra.mrb[0].mxu0 %v3755
        %v4160 = vpop.f32.mrb[0].mxu0
        %v4161 = vadd.f32 %v4000, %v4160
        %v4162 = vpop.f32.mrb[0].mxu0
        %v4163 = vpop.f32.mrb[0].mxu0
        %v4164 = vadd.f32 %v4003, %v4163
        %v4165 = vpop.f32.mrb[0].mxu0
        %4166 = vmatprep.mubr.bf16.mxu0 %v3758
        %4167 = vmatmul.mubr.bf16.gmra.mrb[0].mxu0 %v3757
        %v4168 = vpop.f32.mrb[0].mxu0
        %v4169 = vadd.f32 %v4008, %v4168
        %v4170 = vpop.f32.mrb[0].mxu0
        %v4171 = vpop.f32.mrb[0].mxu0
        %v4172 = vadd.f32 %v4011, %v4171
        %v4173 = vpop.f32.mrb[0].mxu0
        %4174 = vmatprep.mubr.bf16.mxu0 %v3760
        %4175 = vmatmul.mubr.bf16.gmra.mrb[0].mxu0 %v3759
        %v4176 = vpop.f32.mrb[0].mxu0
        %v4177 = vadd.f32 %v4016, %v4176
        %v4178 = vpop.f32.mrb[0].mxu0
        %v4179 = vpop.f32.mrb[0].mxu0
        %v4180 = vadd.f32 %v4019, %v4179
        %v4181 = vpop.f32.mrb[0].mxu0
        %4182 = vmatprep.mubr.bf16.mxu0 %v3762
        %4183 = vmatmul.mubr.bf16.gmra.mrb[0].mxu0 %v3761
        %v4184 = vpop.f32.mrb[0].mxu0
        %v4185 = vadd.f32 %v4024, %v4184
        %v4186 = vpop.f32.mrb[0].mxu0
        %v4187 = vpop.f32.mrb[0].mxu0
        %v4188 = vadd.f32 %v4027, %v4187
        %v4189 = vpop.f32.mrb[0].mxu0
        %4190 = vmatprep.mubr.bf16.mxu0 %v3764
        %4191 = vmatmul.mubr.bf16.gmra.mrb[0].mxu0 %v3763
        %v4192 = vpop.f32.mrb[0].mxu0
        %v4193 = vadd.f32 %v4032, %v4192
        %v4194 = vpop.f32.mrb[0].mxu0
        %v4195 = vpop.f32.mrb[0].mxu0
        %v4196 = vadd.f32 %v4035, %v4195
        %v4197 = vpop.f32.mrb[0].mxu0
        %4198 = vmatprep.mubr.bf16.mxu0 %v3766
        %4199 = vmatmul.mubr.bf16.gmra.mrb[0].mxu0 %v3765
        %v4200 = vpop.f32.mrb[0].mxu0
        %v4201 = vadd.f32 %v4040, %v4200
        %v4202 = vpop.f32.mrb[0].mxu0
        %v4203 = vpop.f32.mrb[0].mxu0
        %v4204 = vadd.f32 %v4043, %v4203
        %v4205 = vpop.f32.mrb[0].mxu0
        %4206 = vmatprep.mubr.bf16.mxu0 %v3768
        %4207 = vmatmul.mubr.bf16.gmra.mrb[0].mxu0 %v3767
        %v4208 = vpop.f32.mrb[0].mxu0
        %v4209 = vadd.f32 %v4048, %v4208
        %v4210 = vpop.f32.mrb[0].mxu0
        %v4211 = vpop.f32.mrb[0].mxu0
        %v4212 = vadd.f32 %v4051, %v4211
        %v4213 = vpop.f32.mrb[0].mxu0
        %4214 = vmatprep.mubr.bf16.mxu0 %v3770
        %4215 = vmatmul.mubr.bf16.gmra.mrb[0].mxu0 %v3769
        %v4216 = vpop.f32.mrb[0].mxu0
        %v4217 = vadd.f32 %v4056, %v4216
        %v4218 = vpop.f32.mrb[0].mxu0
        %v4219 = vpop.f32.mrb[0].mxu0
        %v4220 = vadd.f32 %v4059, %v4219
        %v4221 = vpop.f32.mrb[0].mxu0
        %4222 = vmatprep.mubr.bf16.mxu0 %v3772
        %4223 = vmatmul.mubr.bf16.gmra.mrb[0].mxu0 %v3771
        %v4224 = vpop.f32.mrb[0].mxu0
        %v4225 = vadd.f32 %v4064, %v4224
        %v4226 = vpop.f32.mrb[0].mxu0
        %v4227 = vpop.f32.mrb[0].mxu0
        %v4228 = vadd.f32 %v4067, %v4227
        %v4229 = vpop.f32.mrb[0].mxu0
        %4230 = vmatprep.mubr.bf16.mxu0 %v3774
        %4231 = vmatmul.mubr.bf16.gmra.mrb[0].mxu0 %v3773
        %v4232 = vpop.f32.mrb[0].mxu0
        %v4233 = vadd.f32 %v4072, %v4232
        %v4234 = vpop.f32.mrb[0].mxu0
        %v4235 = vpop.f32.mrb[0].mxu0
        %v4236 = vadd.f32 %v4075, %v4235
        %v4237 = vpop.f32.mrb[0].mxu0
        %4238 = vmatprep.mubr.bf16.mxu0 %v3776
        %4239 = vmatmul.mubr.bf16.gmra.mrb[0].mxu0 %v3775
        %v4240 = vpop.f32.mrb[0].mxu0
        %v4241 = vadd.f32 %v4080, %v4240
        %v4242 = vpop.f32.mrb[0].mxu0
        %v4243 = vpop.f32.mrb[0].mxu0
        %v4244 = vadd.f32 %v4083, %v4243
        %v4245 = vpop.f32.mrb[0].mxu0
        %4246 = vmatprep.mubr.bf16.mxu0 %v3778
        %4247 = vmatmul.mubr.bf16.gmra.mrb[0].mxu0 %v3777
        %v4248 = vpop.f32.mrb[0].mxu0
        %v4249 = vadd.f32 %v4088, %v4248
        %v4250 = vpop.f32.mrb[0].mxu0
        %v4251 = vpop.f32.mrb[0].mxu0
        %v4252 = vadd.f32 %v4091, %v4251
        %v4253 = vpop.f32.mrb[0].mxu0
        %4254 = vmatprep.mubr.bf16.mxu0 %v3780
        %4255 = vmatmul.mubr.bf16.gmra.mrb[0].mxu0 %v3779
        %v4256 = vpop.f32.mrb[0].mxu0
        %v4257 = vadd.f32 %v4096, %v4256
        %v4258 = vpop.f32.mrb[0].mxu0
        %v4259 = vpop.f32.mrb[0].mxu0
        %v4260 = vadd.f32 %v4099, %v4259
        %v4261 = vpop.f32.mrb[0].mxu0
        %4262 = vdwg.mxu0
        %v4263 = vtrunc.f32 %v3299
        %v4264 = vtrunc.f32 %v4137
        %v4265 = vtrunc.f32 %v3302
        %v4266 = vtrunc.f32 %v4140
        %v4267 = vtrunc.f32 %v3307
        %v4268 = vtrunc.f32 %v4145
        %v4269 = vtrunc.f32 %v3310
        %v4270 = vtrunc.f32 %v4148
        %v4271 = vtrunc.f32 %v3315
        %v4272 = vtrunc.f32 %v4153
        %v4273 = vtrunc.f32 %v3318
        %v4274 = vtrunc.f32 %v4156
        %v4275 = vtrunc.f32 %v3323
        %v4276 = vtrunc.f32 %v4161
        %v4277 = vtrunc.f32 %v3326
        %v4278 = vtrunc.f32 %v4164
        %v4279 = vtrunc.f32 %v3331
        %v4280 = vtrunc.f32 %v4169
        %v4281 = vtrunc.f32 %v3334
        %v4282 = vtrunc.f32 %v4172
        %v4283 = vtrunc.f32 %v3339
        %v4284 = vtrunc.f32 %v4177
        %v4285 = vtrunc.f32 %v3342
        %v4286 = vtrunc.f32 %v4180
        %v4287 = vtrunc.f32 %v3347
        %v4288 = vtrunc.f32 %v4185
        %v4289 = vtrunc.f32 %v3350
        %v4290 = vtrunc.f32 %v4188
        %v4291 = vtrunc.f32 %v3355
        %v4292 = vtrunc.f32 %v4193
        %v4293 = vtrunc.f32 %v3358
        %v4294 = vtrunc.f32 %v4196
        %v4295 = vtrunc.f32 %v3363
        %v4296 = vtrunc.f32 %v4201
        %v4297 = vtrunc.f32 %v3366
        %v4298 = vtrunc.f32 %v4204
        %v4299 = vtrunc.f32 %v3371
        %v4300 = vtrunc.f32 %v4209
        %v4301 = vtrunc.f32 %v3374
        %v4302 = vtrunc.f32 %v4212
        %v4303 = vtrunc.f32 %v3379
        %v4304 = vtrunc.f32 %v4217
        %v4305 = vtrunc.f32 %v3382
        %v4306 = vtrunc.f32 %v4220
        %v4307 = vtrunc.f32 %v3387
        %v4308 = vtrunc.f32 %v4225
        %v4309 = vtrunc.f32 %v3390
        %v4310 = vtrunc.f32 %v4228
        %v4311 = vtrunc.f32 %v3395
        %v4312 = vtrunc.f32 %v4233
        %v4313 = vtrunc.f32 %v3398
        %v4314 = vtrunc.f32 %v4236
        %v4315 = vtrunc.f32 %v3403
        %v4316 = vtrunc.f32 %v4241
        %v4317 = vtrunc.f32 %v3406
        %v4318 = vtrunc.f32 %v4244
        %v4319 = vtrunc.f32 %v3411
        %v4320 = vtrunc.f32 %v4249
        %v4321 = vtrunc.f32 %v3414
        %v4322 = vtrunc.f32 %v4252
        %v4323 = vtrunc.f32 %v3419
        %v4324 = vtrunc.f32 %v4257
        %v4325 = vtrunc.f32 %v3422
        %v4326 = vtrunc.f32 %v4260
        %v4327 = vpack.c.f32.eXmY %v4263, %v4265, 56
        %v4331 = vpack.c.f32.eXmY %v4267, %v4269, 56
        %v4335 = vpack.c.b8 %v4331, %v4327
        %v4337 = vpack.c.f32.eXmY %v4264, %v4266, 56
        %v4341 = vpack.c.f32.eXmY %v4268, %v4270, 56
        %v4345 = vpack.c.b8 %v4341, %v4337
        %v4347 = vpack.c.f32.eXmY %v4271, %v4273, 56
        %v4351 = vpack.c.f32.eXmY %v4275, %v4277, 56
        %v4355 = vpack.c.b8 %v4351, %v4347
        %v4357 = vpack.c.f32.eXmY %v4272, %v4274, 56
        %v4361 = vpack.c.f32.eXmY %v4276, %v4278, 56
        %v4365 = vpack.c.b8 %v4361, %v4357
        %v4367 = vpack.c.f32.eXmY %v4279, %v4281, 56
        %v4371 = vpack.c.f32.eXmY %v4283, %v4285, 56
        %v4375 = vpack.c.b8 %v4371, %v4367
        %v4377 = vpack.c.f32.eXmY %v4280, %v4282, 56
        %v4381 = vpack.c.f32.eXmY %v4284, %v4286, 56
        %v4385 = vpack.c.b8 %v4381, %v4377
        %v4387 = vpack.c.f32.eXmY %v4287, %v4289, 56
        %v4391 = vpack.c.f32.eXmY %v4291, %v4293, 56
        %v4395 = vpack.c.b8 %v4391, %v4387
        %v4397 = vpack.c.f32.eXmY %v4288, %v4290, 56
        %v4401 = vpack.c.f32.eXmY %v4292, %v4294, 56
        %v4405 = vpack.c.b8 %v4401, %v4397
        %v4407 = vpack.c.f32.eXmY %v4295, %v4297, 56
        %v4411 = vpack.c.f32.eXmY %v4299, %v4301, 56
        %v4415 = vpack.c.b8 %v4411, %v4407
        %v4417 = vpack.c.f32.eXmY %v4296, %v4298, 56
        %v4421 = vpack.c.f32.eXmY %v4300, %v4302, 56
        %v4425 = vpack.c.b8 %v4421, %v4417
        %v4427 = vpack.c.f32.eXmY %v4303, %v4305, 56
        %v4431 = vpack.c.f32.eXmY %v4307, %v4309, 56
        %v4435 = vpack.c.b8 %v4431, %v4427
        %v4437 = vpack.c.f32.eXmY %v4304, %v4306, 56
        %v4441 = vpack.c.f32.eXmY %v4308, %v4310, 56
        %v4445 = vpack.c.b8 %v4441, %v4437
        %v4447 = vpack.c.f32.eXmY %v4311, %v4313, 56
        %v4451 = vpack.c.f32.eXmY %v4315, %v4317, 56
        %v4455 = vpack.c.b8 %v4451, %v4447
        %v4457 = vpack.c.f32.eXmY %v4312, %v4314, 56
        %v4461 = vpack.c.f32.eXmY %v4316, %v4318, 56
        %v4465 = vpack.c.b8 %v4461, %v4457
        %v4467 = vpack.c.f32.eXmY %v4319, %v4321, 56
        %v4471 = vpack.c.f32.eXmY %v4323, %v4325, 56
        %v4475 = vpack.c.b8 %v4471, %v4467
        %v4477 = vpack.c.f32.eXmY %v4320, %v4322, 56
        %v4481 = vpack.c.f32.eXmY %v4324, %v4326, 56
        %v4485 = vpack.c.b8 %v4481, %v4477
        %s4487 = scalar_lea.vmem %s218, 128 [#allocation8]
        %4488 = vst [vmem:[%s4487] sm:$0xff] %v4335
        %4489 = vst [vmem:[%s4487 + $0x8] sm:$0xff] %v4345
        %4490 = vst [vmem:[%s4487 + $0x10] sm:$0xff] %v4355
        %4491 = vst [vmem:[%s4487 + $0x18] sm:$0xff] %v4365
        %4492 = vst [vmem:[%s4487 + $0x20] sm:$0xff] %v4375
        %4493 = vst [vmem:[%s4487 + $0x28] sm:$0xff] %v4385
        %4494 = vst [vmem:[%s4487 + $0x30] sm:$0xff] %v4395
        %4495 = vst [vmem:[%s4487 + $0x38] sm:$0xff] %v4405
        %4496 = vst [vmem:[%s4487 + $0x40] sm:$0xff] %v4415
        %4497 = vst [vmem:[%s4487 + $0x48] sm:$0xff] %v4425
        %4498 = vst [vmem:[%s4487 + $0x50] sm:$0xff] %v4435
        %4499 = vst [vmem:[%s4487 + $0x58] sm:$0xff] %v4445
        %4500 = vst [vmem:[%s4487 + $0x60] sm:$0xff] %v4455
        %4501 = vst [vmem:[%s4487 + $0x68] sm:$0xff] %v4465
        %4502 = vst [vmem:[%s4487 + $0x70] sm:$0xff] %v4475
        %4503 = vst [vmem:[%s4487 + $0x78] sm:$0xff] %v4485
        %s4504 = sand.u32 %s97, 1
        %s4505 = scalar_lea.sflag [#allocation4], %s4504
        %s4506 = sand.u32 %s97, 1
        %s4507 = smul.addr %s4506, 256
        %s4508 = scalar_lea.vmem [#allocation8], %s4507
        // Predicated region
        $region45: #{tpu_custom_call.1} parent=31 // pred_check
          %p4509 = pneg %p107
        $region46: #{tpu_custom_call.1} parent=31 // pred_check_branch
          %4511 = sbr.rel (%p4509) target = $region48
        $region47: #{tpu_custom_call.1} parent=31 // pred_region
          %s4512 = smul.u32 2, %s21
          %s4514 = ssub.s32 4096, 4096
          %4515 = vsyncadd %s4505, %s4514
          %s4516 = smul.addr %s4512, 16
          %s4517 = smul.addr %s4516, 128
          %s4518 = scalar_lea.hbm %s3, %s4517
          %s4519 = sshll.u32 %s4508, 4
          %s4520 = int_to_ptr.vmem [resolvable:$true] %s4519
          %4525 = dma.vmem_to_hbm [thread:$0]  %s4520, 4096, %s4518, %s4505, 256, 256, 16
        $region48: #{tpu_custom_call.1} parent=31 // pred_fallthru
          _
      $region32: #{tpu_custom_call.1} parent=5 // pred_fallthru
        _
      %p4526 = scmp.le.s32.totalorder 2, %s16
      // Predicated region
      $region49: #{tpu_custom_call.1} parent=5 // pred_check
        %p4527 = pneg %p4526
      $region50: #{tpu_custom_call.1} parent=5 // pred_check_branch
        %4529 = sbr.rel (%p4527) target = $region52
      $region51: #{tpu_custom_call.1} parent=5 // pred_region
        %s4530 = ssub.s32 %s16, 2
        // Predicated region
        $region53: #{tpu_custom_call.1} parent=51 // pred_check
          %p4531 = pneg %p113
        $region54: #{tpu_custom_call.1} parent=51 // pred_check_branch
          %4533 = sbr.rel (%p4531) target = $region56
        $region55: #{tpu_custom_call.1} parent=51 // pred_region
          %s4534 = sand.u32 %s98, 1
          %s4535 = scalar_lea.sflag [#allocation4], %s4534
          %s4536 = sand.u32 %s98, 1
          %s4537 = smul.addr %s4536, 256
          %s4538 = scalar_lea.vmem [#allocation8], %s4537
          %4539 = dma.done %s4535, 4096
        $region56: #{tpu_custom_call.1} parent=51 // pred_fallthru
          _
      $region52: #{tpu_custom_call.1} parent=5 // pred_fallthru
        _
    $region6: #{tpu_custom_call.1} parent=1 // loop_footer
      %s20 = sadd.s32 1, %s16
    $region7: #{tpu_custom_call.1} parent=1 // loop_footer_branch
      %15 = sbr.rel target = $region3
    $region8: #{tpu_custom_call.1} parent=1 // loop_exit
      _
    %4540 = vsyncpa [#allocation3], 1
    %s4541 = scalar_lea.sflag [#allocation3], 1
    %4542 = vsyncpa %s4541, 1
    %4543 = vsyncpa [#allocation6], 1
    %4544 = vsyncpa [#allocation4], 1
    %s4545 = scalar_lea.sflag [#allocation4], 1
    %4546 = vsyncpa %s4545, 1

</llo_original>
